<compile_context>
chip_gen: v7x
topology: tpu7x:2x2x1
jax: 0.10.0
libtpu: 0.0.40
codegen_flags: <defaults>
</compile_context>

<pallas_src>
import jax
import jax.numpy as jnp
from jax.experimental import pallas as pl
from jax.experimental.pallas import tpu as pltpu

# ----------------------------- model config -----------------------------
RNN_TYPE = "LSTM"
NTOKEN = 40      # vocab size
NINP   = 32      # embedding size
NHID   = 32      # hidden size
NLAYERS = 2
SEQ_LEN = 8
BATCH   = 2

# TPU-friendly padded sizes (padding sliced away outside the kernel)
BATCH_PAD = ((BATCH + 7) // 8) * 8           # fill the 8 sublanes
VOCAB_PAD = ((NTOKEN + 127) // 128) * 128    # lane-dense vocab dim


def _lstm_cell(g, c_prev):
    """One LSTM cell update. g: (B, 4H) pre-activation, PyTorch gate order [i,f,g,o]."""
    H = NHID
    # exact sigmoid via a single EUP tanh (avoids exp + divide on the serial path)
    sig = jnp.tanh(g * 0.5) * 0.5 + 0.5
    i_g = sig[:, 0 * H:1 * H]
    f_g = sig[:, 1 * H:2 * H]
    o_g = sig[:, 3 * H:4 * H]
    g_g = jnp.tanh(g[:, 2 * H:3 * H])
    c_new = f_g * c_prev + i_g * g_g
    h_new = o_g * jnp.tanh(c_new)
    return h_new, c_new


# ----------------------------- fused forward kernel -----------------------------
def _fused_rnn_kernel(*refs):
    """Single-invocation kernel: (one-hot @ fused table) -> pipelined LSTM stack -> decoder.

    refs layout (inputs):
      tokens(T*Bp,1) i32, fused_gx0(Vp,4H), w_hh_0(H,4H),
      [w_ih_l(H,4H), w_hh_l(H,4H), b_l(1,4H)] for l=1..NLAYERS-1,
      dec_w(H,Vp), dec_b(1,Vp), h0(NLAYERS,Bp,H), c0(NLAYERS,Bp,H)
    outputs:
      logits(T*Bp,Vp), hT(NLAYERS,Bp,H), cT(NLAYERS,Bp,H)
    """
    n_upper = 3 * (NLAYERS - 1)
    tokens_ref, fused0_ref, w_hh0_ref = refs[0], refs[1], refs[2]
    upper_refs = refs[3:3 + n_upper]
    dec_w_ref, dec_b_ref, h0_ref, c0_ref = refs[3 + n_upper:7 + n_upper]
    logits_ref, hT_ref, cT_ref = refs[7 + n_upper:]

    T, B, H = SEQ_LEN, BATCH_PAD, NHID
    TB = T * B

    # ---- 1) embedding + layer-0 input projection for ALL timesteps (one MXU matmul).
    # fused_gx0[v] = enc[v] @ W_ih_0 + b_0, so onehot @ fused_gx0 = emb @ W_ih_0 + b_0.
    tok = tokens_ref[...]                                               # (TB, 1) int32
    vocab_iota = jax.lax.broadcasted_iota(jnp.int32, (TB, VOCAB_PAD), 1)
    onehot = (vocab_iota == tok).astype(jnp.float32)                    # (TB, Vp)
    gx0 = jnp.dot(onehot, fused0_ref[...],
                  preferred_element_type=jnp.float32)                   # (TB, 4H)

    w_hh0 = w_hh0_ref[...]
    dec_w = dec_w_ref[...]
    dec_b = dec_b_ref[...]
    upper = []
    for l in range(NLAYERS - 1):
        w_ih_ref, w_hh_ref, b_ref = upper_refs[3 * l:3 * l + 3]
        upper.append((w_ih_ref[...], w_hh_ref[...], b_ref[...]))

    h = [h0_ref[l] for l in range(NLAYERS)]                             # each (B, H)
    c = [c0_ref[l] for l in range(NLAYERS)]

    # layer_out[l][t] = h of layer l at timestep t (plain values, no VMEM traffic)
    layer_out = [[None] * T for _ in range(NLAYERS)]

    # ---- 2) software-pipelined recurrence: layer l runs `l` steps behind layer 0,
    # so each pipeline step contains NLAYERS independent matmul->EUP chains that the
    # scheduler can interleave (shortens the serial critical path ~NLAYERS*T -> T+NLAYERS-1).
    for s in range(T + NLAYERS - 1):                                    # fully unrolled
        for l in range(NLAYERS):
            t = s - l
            if not (0 <= t < T):
                continue
            if l == 0:
                # per-step slice at a sublane-tile-aligned offset (B == 8)
                g = gx0[t * B:(t + 1) * B, :] + jnp.dot(
                    h[0], w_hh0, preferred_element_type=jnp.float32)
            else:
                w_ih_l, w_hh_l, b_l = upper[l - 1]
                g = (jnp.dot(layer_out[l - 1][t], w_ih_l,
                             preferred_element_type=jnp.float32)
                     + jnp.dot(h[l], w_hh_l,
                               preferred_element_type=jnp.float32)
                     + b_l)
            h[l], c[l] = _lstm_cell(g, c[l])
            layer_out[l][t] = h[l]
            if l == NLAYERS - 1:
                # ---- 3) decoder for this timestep: off the recurrence chain, fills
                # latency bubbles; (B, Vp) = (8, 128) f32 store == one unmasked vreg.
                logits_ref[pl.ds(t * B, B), :] = (
                    jnp.dot(h[l], dec_w, preferred_element_type=jnp.float32) + dec_b)

    for l in range(NLAYERS):
        hT_ref[l] = h[l]
        cT_ref[l] = c[l]


# ----------------------------- wrapper -----------------------------
def prepare_kernel_params(params):
    """One-time (init-time) fold + pad of raw params into kernel-ready form."""
    # Fold embedding into layer-0 input projection (valid because dropout == identity).
    fused0 = params["encoder_weight"] @ params["w_ih_0"] + params["b_0"]   # (NTOKEN, 4H)
    fused0 = jnp.pad(fused0, ((0, VOCAB_PAD - NTOKEN), (0, 0)))
    dec_w = jnp.pad(params["decoder_weight_t"], ((0, 0), (0, VOCAB_PAD - NTOKEN)))
    dec_b = jnp.pad(params["decoder_bias"], ((0, 0), (0, VOCAB_PAD - NTOKEN)))
    kp = {"fused_gx0": fused0, "w_hh_0": params["w_hh_0"],
          "dec_w": dec_w, "dec_b": dec_b}
    for l in range(1, NLAYERS):
        kp[f"w_ih_{l}"] = params[f"w_ih_{l}"]
        kp[f"w_hh_{l}"] = params[f"w_hh_{l}"]
        kp[f"b_{l}"] = params[f"b_{l}"]
    return kp


def rnn_model_forward(kparams, tokens, hidden):
    """tokens: (T, B) int32 (time-major); hidden = (h0, c0), each (NLAYERS, B, NHID)."""
    h0, c0 = hidden
    T, B = tokens.shape
    TBp = T * BATCH_PAD

    # pad batch to a full sublane tile; padded rows (token 0, zero state) are sliced away
    tokens_p = jnp.pad(tokens.astype(jnp.int32),
                       ((0, 0), (0, BATCH_PAD - B))).reshape(TBp, 1)
    h0_p = jnp.pad(h0, ((0, 0), (0, BATCH_PAD - B), (0, 0)))
    c0_p = jnp.pad(c0, ((0, 0), (0, BATCH_PAD - B), (0, 0)))

    inputs = [tokens_p, kparams["fused_gx0"], kparams["w_hh_0"]]
    for l in range(1, NLAYERS):
        inputs += [kparams[f"w_ih_{l}"], kparams[f"w_hh_{l}"], kparams[f"b_{l}"]]
    inputs += [kparams["dec_w"], kparams["dec_b"], h0_p, c0_p]

    vmem = lambda: pl.BlockSpec(memory_space=pltpu.MemorySpace.VMEM)
    logits, hT, cT = pl.pallas_call(
        _fused_rnn_kernel,
        out_shape=(jax.ShapeDtypeStruct((TBp, VOCAB_PAD), jnp.float32),
                   jax.ShapeDtypeStruct((NLAYERS, BATCH_PAD, NHID), jnp.float32),
                   jax.ShapeDtypeStruct((NLAYERS, BATCH_PAD, NHID), jnp.float32)),
        in_specs=[vmem() for _ in inputs],
        out_specs=(vmem(), vmem(), vmem()),
    )(*inputs)

    decoded = logits.reshape(T, BATCH_PAD, VOCAB_PAD)[:, :B, :NTOKEN]
    return decoded, (hT[:, :B, :], cT[:, :B, :])


# ----------------------------- parameter init (deterministic) -----------------------------
def init_params(key):
    keys = jax.random.split(key, 2 + 4 * NLAYERS)
    params = {}
    initrange = 0.1
    # encoder / decoder as in RNNModel.init_weights()
    params["encoder_weight"] = jax.random.uniform(
        keys[0], (NTOKEN, NINP), jnp.float32, -initrange, initrange)
    params["decoder_weight_t"] = jax.random.uniform(
        keys[1], (NHID, NTOKEN), jnp.float32, -initrange, initrange)  # (H, V) = W_dec.T
    params["decoder_bias"] = jnp.zeros((1, NTOKEN), jnp.float32)
    # LSTM: PyTorch default init U(-1/sqrt(nhid), 1/sqrt(nhid)), gate order i,f,g,o
    stdv = 1.0 / (NHID ** 0.5)
    for layer in range(NLAYERS):
        in_dim = NINP if layer == 0 else NHID
        k = keys[2 + 4 * layer: 2 + 4 * (layer + 1)]
        params[f"w_ih_{layer}"] = jax.random.uniform(
            k[0], (in_dim, 4 * NHID), jnp.float32, -stdv, stdv)
        params[f"w_hh_{layer}"] = jax.random.uniform(
            k[1], (NHID, 4 * NHID), jnp.float32, -stdv, stdv)
        b_ih = jax.random.uniform(k[2], (4 * NHID,), jnp.float32, -stdv, stdv)
        b_hh = jax.random.uniform(k[3], (4 * NHID,), jnp.float32, -stdv, stdv)
        params[f"b_{layer}"] = (b_ih + b_hh).reshape(1, 4 * NHID)
    return params


def init_hidden(bsz):
    return (jnp.zeros((NLAYERS, bsz, NHID), jnp.float32),
            jnp.zeros((NLAYERS, bsz, NHID), jnp.float32))


# ----------------------------- pure-JAX reference (correctness check) -----------------------------
def _reference_forward(params, tokens, hidden):
    h0, c0 = hidden
    x = jnp.take(params["encoder_weight"], tokens, axis=0)        # (T, B, NINP)
    hs, cs = [], []
    for l in range(NLAYERS):
        w_ih, w_hh, b = params[f"w_ih_{l}"], params[f"w_hh_{l}"], params[f"b_{l}"]
        h, c = h0[l], c0[l]
        outs = []
        for t in range(tokens.shape[0]):
            g = x[t] @ w_ih + h @ w_hh + b
            i = jax.nn.sigmoid(g[:, :NHID])
            f = jax.nn.sigmoid(g[:, NHID:2 * NHID])
            gg = jnp.tanh(g[:, 2 * NHID:3 * NHID])
            o = jax.nn.sigmoid(g[:, 3 * NHID:])
            c = f * c + i * gg
            h = o * jnp.tanh(c)
            outs.append(h)
        x = jnp.stack(outs, axis=0)
        hs.append(h); cs.append(c)
    logits = x @ params["decoder_weight_t"] + params["decoder_bias"]
    return logits, (jnp.stack(hs), jnp.stack(cs))


# ----------------------------- main -----------------------------
if __name__ == "__main__":
    key = jax.random.PRNGKey(0)
    pkey, tkey = jax.random.split(key)
    params = init_params(pkey)
    kparams = prepare_kernel_params(params)    # one-time fold/pad, off the hot path
    tokens = jax.random.randint(tkey, (SEQ_LEN, BATCH), 0, NTOKEN, dtype=jnp.int32)
    hidden = init_hidden(BATCH)

    fwd = jax.jit(rnn_model_forward)
    decoded, (h_out, c_out) = fwd(kparams, tokens, hidden)
    jax.block_until_ready((decoded, h_out, c_out))

    assert decoded.shape == (SEQ_LEN, BATCH, NTOKEN)
    assert h_out.shape == (NLAYERS, BATCH, NHID)
    assert c_out.shape == (NLAYERS, BATCH, NHID)
    assert bool(jnp.all(jnp.isfinite(decoded)))

    ref_logits, (ref_h, ref_c) = _reference_forward(params, tokens, hidden)
    assert bool(jnp.allclose(decoded, ref_logits, atol=2e-2, rtol=2e-2))
    assert bool(jnp.allclose(h_out, ref_h, atol=2e-2, rtol=2e-2))
    assert bool(jnp.allclose(c_out, ref_c, atol=2e-2, rtol=2e-2))

    print("KERNEL_OK")
</pallas_src>

<mosaic_0001>
module attributes {stable_mosaic.version = 11 : i64} {
  func.func @_fused_rnn_kernel(%arg0: memref<64x1xi32, #tpu.memory_space<vmem>>, %arg1: memref<128x128xf32, #tpu.memory_space<vmem>>, %arg2: memref<32x128xf32, #tpu.memory_space<vmem>>, %arg3: memref<32x128xf32, #tpu.memory_space<vmem>>, %arg4: memref<32x128xf32, #tpu.memory_space<vmem>>, %arg5: memref<1x128xf32, #tpu.memory_space<vmem>>, %arg6: memref<32x128xf32, #tpu.memory_space<vmem>>, %arg7: memref<1x128xf32, #tpu.memory_space<vmem>>, %arg8: memref<2x8x32xf32, #tpu.memory_space<vmem>>, %arg9: memref<2x8x32xf32, #tpu.memory_space<vmem>>, %arg10: memref<64x128xf32, #tpu.memory_space<vmem>>, %arg11: memref<2x8x32xf32, #tpu.memory_space<vmem>>, %arg12: memref<2x8x32xf32, #tpu.memory_space<vmem>>) attributes {dimension_semantics = [], scalar_prefetch = 0 : i64, scratch_operands = 0 : i64, tpu.core_type = #tpu.core_type<tc>} {
    %c0 = arith.constant 0 : index
    %c0_0 = arith.constant 0 : index
    %0 = vector.load %arg0[%c0, %c0_0] : memref<64x1xi32, #tpu.memory_space<vmem>>, vector<64x1xi32>
    %1 = tpu.iota {dimensions = array<i32: 1>} : vector<64x128xi32>
    %2 = vector.broadcast %0 : vector<64x1xi32> to vector<64x128xi32>
    %3 = arith.cmpi eq, %1, %2 : vector<64x128xi32>
    %4 = arith.extui %3 : vector<64x128xi1> to vector<64x128xi32>
    %5 = arith.sitofp %4 : vector<64x128xi32> to vector<64x128xf32>
    %c0_1 = arith.constant 0 : index
    %c0_2 = arith.constant 0 : index
    %6 = vector.load %arg1[%c0_1, %c0_2] : memref<128x128xf32, #tpu.memory_space<vmem>>, vector<128x128xf32>
    %cst = arith.constant dense<0.000000e+00> : vector<64x128xf32>
    %7 = tpu.matmul %5, %6, %cst {dimension_numbers = #tpu.dot_dimension_numbers<[1], [0], [0], [1], [0, 0, 1, 1], [], []>} : vector<64x128xf32>, vector<128x128xf32>, vector<64x128xf32> -> vector<64x128xf32>
    %c0_3 = arith.constant 0 : index
    %c0_4 = arith.constant 0 : index
    %8 = vector.load %arg2[%c0_3, %c0_4] : memref<32x128xf32, #tpu.memory_space<vmem>>, vector<32x128xf32>
    %c0_5 = arith.constant 0 : index
    %c0_6 = arith.constant 0 : index
    %9 = vector.load %arg6[%c0_5, %c0_6] : memref<32x128xf32, #tpu.memory_space<vmem>>, vector<32x128xf32>
    %c0_7 = arith.constant 0 : index
    %c0_8 = arith.constant 0 : index
    %10 = vector.load %arg7[%c0_7, %c0_8] : memref<1x128xf32, #tpu.memory_space<vmem>>, vector<1x128xf32>
    %c0_9 = arith.constant 0 : index
    %c0_10 = arith.constant 0 : index
    %11 = vector.load %arg3[%c0_9, %c0_10] : memref<32x128xf32, #tpu.memory_space<vmem>>, vector<32x128xf32>
    %c0_11 = arith.constant 0 : index
    %c0_12 = arith.constant 0 : index
    %12 = vector.load %arg4[%c0_11, %c0_12] : memref<32x128xf32, #tpu.memory_space<vmem>>, vector<32x128xf32>
    %c0_13 = arith.constant 0 : index
    %c0_14 = arith.constant 0 : index
    %13 = vector.load %arg5[%c0_13, %c0_14] : memref<1x128xf32, #tpu.memory_space<vmem>>, vector<1x128xf32>
    %c0_15 = arith.constant 0 : index
    %c0_16 = arith.constant 0 : index
    %c0_17 = arith.constant 0 : index
    %14 = vector.load %arg8[%c0_15, %c0_16, %c0_17] : memref<2x8x32xf32, #tpu.memory_space<vmem>>, vector<1x8x32xf32>
    %15 = vector.shape_cast %14 : vector<1x8x32xf32> to vector<8x32xf32>
    %c1 = arith.constant 1 : index
    %c0_18 = arith.constant 0 : index
    %c0_19 = arith.constant 0 : index
    %16 = vector.load %arg8[%c1, %c0_18, %c0_19] : memref<2x8x32xf32, #tpu.memory_space<vmem>>, vector<1x8x32xf32>
    %17 = vector.shape_cast %16 : vector<1x8x32xf32> to vector<8x32xf32>
    %c0_20 = arith.constant 0 : index
    %c0_21 = arith.constant 0 : index
    %c0_22 = arith.constant 0 : index
    %18 = vector.load %arg9[%c0_20, %c0_21, %c0_22] : memref<2x8x32xf32, #tpu.memory_space<vmem>>, vector<1x8x32xf32>
    %19 = vector.shape_cast %18 : vector<1x8x32xf32> to vector<8x32xf32>
    %c1_23 = arith.constant 1 : index
    %c0_24 = arith.constant 0 : index
    %c0_25 = arith.constant 0 : index
    %20 = vector.load %arg9[%c1_23, %c0_24, %c0_25] : memref<2x8x32xf32, #tpu.memory_space<vmem>>, vector<1x8x32xf32>
    %21 = vector.shape_cast %20 : vector<1x8x32xf32> to vector<8x32xf32>
    %22 = vector.extract_strided_slice %7 {offsets = [0, 0], sizes = [8, 128], strides = [1, 1]} : vector<64x128xf32> to vector<8x128xf32>
    %cst_26 = arith.constant dense<0.000000e+00> : vector<8x128xf32>
    %23 = tpu.matmul %15, %8, %cst_26 {dimension_numbers = #tpu.dot_dimension_numbers<[1], [0], [0], [1], [0, 0, 1, 1], [], []>} : vector<8x32xf32>, vector<32x128xf32>, vector<8x128xf32> -> vector<8x128xf32>
    %24 = arith.addf %22, %23 : vector<8x128xf32>
    %cst_27 = arith.constant 5.000000e-01 : f32
    %25 = vector.broadcast %cst_27 : f32 to vector<8x128xf32>
    %26 = arith.mulf %24, %25 : vector<8x128xf32>
    %27 = math.tanh %26 : vector<8x128xf32>
    %cst_28 = arith.constant 5.000000e-01 : f32
    %28 = vector.broadcast %cst_28 : f32 to vector<8x128xf32>
    %29 = arith.mulf %27, %28 : vector<8x128xf32>
    %cst_29 = arith.constant 5.000000e-01 : f32
    %30 = vector.broadcast %cst_29 : f32 to vector<8x128xf32>
    %31 = arith.addf %29, %30 : vector<8x128xf32>
    %32 = vector.extract_strided_slice %31 {offsets = [0, 0], sizes = [8, 32], strides = [1, 1]} : vector<8x128xf32> to vector<8x32xf32>
    %33 = vector.extract_strided_slice %31 {offsets = [0, 32], sizes = [8, 32], strides = [1, 1]} : vector<8x128xf32> to vector<8x32xf32>
    %34 = vector.extract_strided_slice %31 {offsets = [0, 96], sizes = [8, 32], strides = [1, 1]} : vector<8x128xf32> to vector<8x32xf32>
    %35 = vector.extract_strided_slice %24 {offsets = [0, 64], sizes = [8, 32], strides = [1, 1]} : vector<8x128xf32> to vector<8x32xf32>
    %36 = math.tanh %35 : vector<8x32xf32>
    %37 = arith.mulf %33, %19 : vector<8x32xf32>
    %38 = arith.mulf %32, %36 : vector<8x32xf32>
    %39 = arith.addf %37, %38 : vector<8x32xf32>
    %40 = math.tanh %39 : vector<8x32xf32>
    %41 = arith.mulf %34, %40 : vector<8x32xf32>
    %42 = vector.extract_strided_slice %7 {offsets = [8, 0], sizes = [8, 128], strides = [1, 1]} : vector<64x128xf32> to vector<8x128xf32>
    %cst_30 = arith.constant dense<0.000000e+00> : vector<8x128xf32>
    %43 = tpu.matmul %41, %8, %cst_30 {dimension_numbers = #tpu.dot_dimension_numbers<[1], [0], [0], [1], [0, 0, 1, 1], [], []>} : vector<8x32xf32>, vector<32x128xf32>, vector<8x128xf32> -> vector<8x128xf32>
    %44 = arith.addf %42, %43 : vector<8x128xf32>
    %cst_31 = arith.constant 5.000000e-01 : f32
    %45 = vector.broadcast %cst_31 : f32 to vector<8x128xf32>
    %46 = arith.mulf %44, %45 : vector<8x128xf32>
    %47 = math.tanh %46 : vector<8x128xf32>
    %cst_32 = arith.constant 5.000000e-01 : f32
    %48 = vector.broadcast %cst_32 : f32 to vector<8x128xf32>
    %49 = arith.mulf %47, %48 : vector<8x128xf32>
    %cst_33 = arith.constant 5.000000e-01 : f32
    %50 = vector.broadcast %cst_33 : f32 to vector<8x128xf32>
    %51 = arith.addf %49, %50 : vector<8x128xf32>
    %52 = vector.extract_strided_slice %51 {offsets = [0, 0], sizes = [8, 32], strides = [1, 1]} : vector<8x128xf32> to vector<8x32xf32>
    %53 = vector.extract_strided_slice %51 {offsets = [0, 32], sizes = [8, 32], strides = [1, 1]} : vector<8x128xf32> to vector<8x32xf32>
    %54 = vector.extract_strided_slice %51 {offsets = [0, 96], sizes = [8, 32], strides = [1, 1]} : vector<8x128xf32> to vector<8x32xf32>
    %55 = vector.extract_strided_slice %44 {offsets = [0, 64], sizes = [8, 32], strides = [1, 1]} : vector<8x128xf32> to vector<8x32xf32>
    %56 = math.tanh %55 : vector<8x32xf32>
    %57 = arith.mulf %53, %39 : vector<8x32xf32>
    %58 = arith.mulf %52, %56 : vector<8x32xf32>
    %59 = arith.addf %57, %58 : vector<8x32xf32>
    %60 = math.tanh %59 : vector<8x32xf32>
    %61 = arith.mulf %54, %60 : vector<8x32xf32>
    %cst_34 = arith.constant dense<0.000000e+00> : vector<8x128xf32>
    %62 = tpu.matmul %41, %11, %cst_34 {dimension_numbers = #tpu.dot_dimension_numbers<[1], [0], [0], [1], [0, 0, 1, 1], [], []>} : vector<8x32xf32>, vector<32x128xf32>, vector<8x128xf32> -> vector<8x128xf32>
    %cst_35 = arith.constant dense<0.000000e+00> : vector<8x128xf32>
    %63 = tpu.matmul %17, %12, %cst_35 {dimension_numbers = #tpu.dot_dimension_numbers<[1], [0], [0], [1], [0, 0, 1, 1], [], []>} : vector<8x32xf32>, vector<32x128xf32>, vector<8x128xf32> -> vector<8x128xf32>
    %64 = arith.addf %62, %63 : vector<8x128xf32>
    %65 = vector.broadcast %13 : vector<1x128xf32> to vector<8x128xf32>
    %66 = arith.addf %64, %65 : vector<8x128xf32>
    %cst_36 = arith.constant 5.000000e-01 : f32
    %67 = vector.broadcast %cst_36 : f32 to vector<8x128xf32>
    %68 = arith.mulf %66, %67 : vector<8x128xf32>
    %69 = math.tanh %68 : vector<8x128xf32>
    %cst_37 = arith.constant 5.000000e-01 : f32
    %70 = vector.broadcast %cst_37 : f32 to vector<8x128xf32>
    %71 = arith.mulf %69, %70 : vector<8x128xf32>
    %cst_38 = arith.constant 5.000000e-01 : f32
    %72 = vector.broadcast %cst_38 : f32 to vector<8x128xf32>
    %73 = arith.addf %71, %72 : vector<8x128xf32>
    %74 = vector.extract_strided_slice %73 {offsets = [0, 0], sizes = [8, 32], strides = [1, 1]} : vector<8x128xf32> to vector<8x32xf32>
    %75 = vector.extract_strided_slice %73 {offsets = [0, 32], sizes = [8, 32], strides = [1, 1]} : vector<8x128xf32> to vector<8x32xf32>
    %76 = vector.extract_strided_slice %73 {offsets = [0, 96], sizes = [8, 32], strides = [1, 1]} : vector<8x128xf32> to vector<8x32xf32>
    %77 = vector.extract_strided_slice %66 {offsets = [0, 64], sizes = [8, 32], strides = [1, 1]} : vector<8x128xf32> to vector<8x32xf32>
    %78 = math.tanh %77 : vector<8x32xf32>
    %79 = arith.mulf %75, %21 : vector<8x32xf32>
    %80 = arith.mulf %74, %78 : vector<8x32xf32>
    %81 = arith.addf %79, %80 : vector<8x32xf32>
    %82 = math.tanh %81 : vector<8x32xf32>
    %83 = arith.mulf %76, %82 : vector<8x32xf32>
    %cst_39 = arith.constant dense<0.000000e+00> : vector<8x128xf32>
    %84 = tpu.matmul %83, %9, %cst_39 {dimension_numbers = #tpu.dot_dimension_numbers<[1], [0], [0], [1], [0, 0, 1, 1], [], []>} : vector<8x32xf32>, vector<32x128xf32>, vector<8x128xf32> -> vector<8x128xf32>
    %85 = vector.broadcast %10 : vector<1x128xf32> to vector<8x128xf32>
    %86 = arith.addf %84, %85 : vector<8x128xf32>
    %c0_40 = arith.constant 0 : index
    %c0_41 = arith.constant 0 : index
    %87 = vector.load %arg10[%c0_40, %c0_41] : memref<64x128xf32, #tpu.memory_space<vmem>>, vector<8x128xf32>
    tpu.vector_store %arg10[%c0_40, %c0_41], %86 {strides = array<i32>} : memref<64x128xf32, #tpu.memory_space<vmem>>, vector<8x128xf32>,
    %88 = vector.extract_strided_slice %7 {offsets = [16, 0], sizes = [8, 128], strides = [1, 1]} : vector<64x128xf32> to vector<8x128xf32>
    %cst_42 = arith.constant dense<0.000000e+00> : vector<8x128xf32>
    %89 = tpu.matmul %61, %8, %cst_42 {dimension_numbers = #tpu.dot_dimension_numbers<[1], [0], [0], [1], [0, 0, 1, 1], [], []>} : vector<8x32xf32>, vector<32x128xf32>, vector<8x128xf32> -> vector<8x128xf32>
    %90 = arith.addf %88, %89 : vector<8x128xf32>
    %cst_43 = arith.constant 5.000000e-01 : f32
    %91 = vector.broadcast %cst_43 : f32 to vector<8x128xf32>
    %92 = arith.mulf %90, %91 : vector<8x128xf32>
    %93 = math.tanh %92 : vector<8x128xf32>
    %cst_44 = arith.constant 5.000000e-01 : f32
    %94 = vector.broadcast %cst_44 : f32 to vector<8x128xf32>
    %95 = arith.mulf %93, %94 : vector<8x128xf32>
    %cst_45 = arith.constant 5.000000e-01 : f32
    %96 = vector.broadcast %cst_45 : f32 to vector<8x128xf32>
    %97 = arith.addf %95, %96 : vector<8x128xf32>
    %98 = vector.extract_strided_slice %97 {offsets = [0, 0], sizes = [8, 32], strides = [1, 1]} : vector<8x128xf32> to vector<8x32xf32>
    %99 = vector.extract_strided_slice %97 {offsets = [0, 32], sizes = [8, 32], strides = [1, 1]} : vector<8x128xf32> to vector<8x32xf32>
    %100 = vector.extract_strided_slice %97 {offsets = [0, 96], sizes = [8, 32], strides = [1, 1]} : vector<8x128xf32> to vector<8x32xf32>
    %101 = vector.extract_strided_slice %90 {offsets = [0, 64], sizes = [8, 32], strides = [1, 1]} : vector<8x128xf32> to vector<8x32xf32>
    %102 = math.tanh %101 : vector<8x32xf32>
    %103 = arith.mulf %99, %59 : vector<8x32xf32>
    %104 = arith.mulf %98, %102 : vector<8x32xf32>
    %105 = arith.addf %103, %104 : vector<8x32xf32>
    %106 = math.tanh %105 : vector<8x32xf32>
    %107 = arith.mulf %100, %106 : vector<8x32xf32>
    %cst_46 = arith.constant dense<0.000000e+00> : vector<8x128xf32>
    %108 = tpu.matmul %61, %11, %cst_46 {dimension_numbers = #tpu.dot_dimension_numbers<[1], [0], [0], [1], [0, 0, 1, 1], [], []>} : vector<8x32xf32>, vector<32x128xf32>, vector<8x128xf32> -> vector<8x128xf32>
    %cst_47 = arith.constant dense<0.000000e+00> : vector<8x128xf32>
    %109 = tpu.matmul %83, %12, %cst_47 {dimension_numbers = #tpu.dot_dimension_numbers<[1], [0], [0], [1], [0, 0, 1, 1], [], []>} : vector<8x32xf32>, vector<32x128xf32>, vector<8x128xf32> -> vector<8x128xf32>
    %110 = arith.addf %108, %109 : vector<8x128xf32>
    %111 = vector.broadcast %13 : vector<1x128xf32> to vector<8x128xf32>
    %112 = arith.addf %110, %111 : vector<8x128xf32>
    %cst_48 = arith.constant 5.000000e-01 : f32
    %113 = vector.broadcast %cst_48 : f32 to vector<8x128xf32>
    %114 = arith.mulf %112, %113 : vector<8x128xf32>
    %115 = math.tanh %114 : vector<8x128xf32>
    %cst_49 = arith.constant 5.000000e-01 : f32
    %116 = vector.broadcast %cst_49 : f32 to vector<8x128xf32>
    %117 = arith.mulf %115, %116 : vector<8x128xf32>
    %cst_50 = arith.constant 5.000000e-01 : f32
    %118 = vector.broadcast %cst_50 : f32 to vector<8x128xf32>
    %119 = arith.addf %117, %118 : vector<8x128xf32>
    %120 = vector.extract_strided_slice %119 {offsets = [0, 0], sizes = [8, 32], strides = [1, 1]} : vector<8x128xf32> to vector<8x32xf32>
    %121 = vector.extract_strided_slice %119 {offsets = [0, 32], sizes = [8, 32], strides = [1, 1]} : vector<8x128xf32> to vector<8x32xf32>
    %122 = vector.extract_strided_slice %119 {offsets = [0, 96], sizes = [8, 32], strides = [1, 1]} : vector<8x128xf32> to vector<8x32xf32>
    %123 = vector.extract_strided_slice %112 {offsets = [0, 64], sizes = [8, 32], strides = [1, 1]} : vector<8x128xf32> to vector<8x32xf32>
    %124 = math.tanh %123 : vector<8x32xf32>
    %125 = arith.mulf %121, %81 : vector<8x32xf32>
    %126 = arith.mulf %120, %124 : vector<8x32xf32>
    %127 = arith.addf %125, %126 : vector<8x32xf32>
    %128 = math.tanh %127 : vector<8x32xf32>
    %129 = arith.mulf %122, %128 : vector<8x32xf32>
    %cst_51 = arith.constant dense<0.000000e+00> : vector<8x128xf32>
    %130 = tpu.matmul %129, %9, %cst_51 {dimension_numbers = #tpu.dot_dimension_numbers<[1], [0], [0], [1], [0, 0, 1, 1], [], []>} : vector<8x32xf32>, vector<32x128xf32>, vector<8x128xf32> -> vector<8x128xf32>
    %131 = vector.broadcast %10 : vector<1x128xf32> to vector<8x128xf32>
    %132 = arith.addf %130, %131 : vector<8x128xf32>
    %c8 = arith.constant 8 : index
    %c0_52 = arith.constant 0 : index
    %133 = vector.load %arg10[%c8, %c0_52] : memref<64x128xf32, #tpu.memory_space<vmem>>, vector<8x128xf32>
    tpu.vector_store %arg10[%c8, %c0_52], %132 {strides = array<i32>} : memref<64x128xf32, #tpu.memory_space<vmem>>, vector<8x128xf32>,
    %134 = vector.extract_strided_slice %7 {offsets = [24, 0], sizes = [8, 128], strides = [1, 1]} : vector<64x128xf32> to vector<8x128xf32>
    %cst_53 = arith.constant dense<0.000000e+00> : vector<8x128xf32>
    %135 = tpu.matmul %107, %8, %cst_53 {dimension_numbers = #tpu.dot_dimension_numbers<[1], [0], [0], [1], [0, 0, 1, 1], [], []>} : vector<8x32xf32>, vector<32x128xf32>, vector<8x128xf32> -> vector<8x128xf32>
    %136 = arith.addf %134, %135 : vector<8x128xf32>
    %cst_54 = arith.constant 5.000000e-01 : f32
    %137 = vector.broadcast %cst_54 : f32 to vector<8x128xf32>
    %138 = arith.mulf %136, %137 : vector<8x128xf32>
    %139 = math.tanh %138 : vector<8x128xf32>
    %cst_55 = arith.constant 5.000000e-01 : f32
    %140 = vector.broadcast %cst_55 : f32 to vector<8x128xf32>
    %141 = arith.mulf %139, %140 : vector<8x128xf32>
    %cst_56 = arith.constant 5.000000e-01 : f32
    %142 = vector.broadcast %cst_56 : f32 to vector<8x128xf32>
    %143 = arith.addf %141, %142 : vector<8x128xf32>
    %144 = vector.extract_strided_slice %143 {offsets = [0, 0], sizes = [8, 32], strides = [1, 1]} : vector<8x128xf32> to vector<8x32xf32>
    %145 = vector.extract_strided_slice %143 {offsets = [0, 32], sizes = [8, 32], strides = [1, 1]} : vector<8x128xf32> to vector<8x32xf32>
    %146 = vector.extract_strided_slice %143 {offsets = [0, 96], sizes = [8, 32], strides = [1, 1]} : vector<8x128xf32> to vector<8x32xf32>
    %147 = vector.extract_strided_slice %136 {offsets = [0, 64], sizes = [8, 32], strides = [1, 1]} : vector<8x128xf32> to vector<8x32xf32>
    %148 = math.tanh %147 : vector<8x32xf32>
    %149 = arith.mulf %145, %105 : vector<8x32xf32>
    %150 = arith.mulf %144, %148 : vector<8x32xf32>
    %151 = arith.addf %149, %150 : vector<8x32xf32>
    %152 = math.tanh %151 : vector<8x32xf32>
    %153 = arith.mulf %146, %152 : vector<8x32xf32>
    %cst_57 = arith.constant dense<0.000000e+00> : vector<8x128xf32>
    %154 = tpu.matmul %107, %11, %cst_57 {dimension_numbers = #tpu.dot_dimension_numbers<[1], [0], [0], [1], [0, 0, 1, 1], [], []>} : vector<8x32xf32>, vector<32x128xf32>, vector<8x128xf32> -> vector<8x128xf32>
    %cst_58 = arith.constant dense<0.000000e+00> : vector<8x128xf32>
    %155 = tpu.matmul %129, %12, %cst_58 {dimension_numbers = #tpu.dot_dimension_numbers<[1], [0], [0], [1], [0, 0, 1, 1], [], []>} : vector<8x32xf32>, vector<32x128xf32>, vector<8x128xf32> -> vector<8x128xf32>
    %156 = arith.addf %154, %155 : vector<8x128xf32>
    %157 = vector.broadcast %13 : vector<1x128xf32> to vector<8x128xf32>
    %158 = arith.addf %156, %157 : vector<8x128xf32>
    %cst_59 = arith.constant 5.000000e-01 : f32
    %159 = vector.broadcast %cst_59 : f32 to vector<8x128xf32>
    %160 = arith.mulf %158, %159 : vector<8x128xf32>
    %161 = math.tanh %160 : vector<8x128xf32>
    %cst_60 = arith.constant 5.000000e-01 : f32
    %162 = vector.broadcast %cst_60 : f32 to vector<8x128xf32>
    %163 = arith.mulf %161, %162 : vector<8x128xf32>
    %cst_61 = arith.constant 5.000000e-01 : f32
    %164 = vector.broadcast %cst_61 : f32 to vector<8x128xf32>
    %165 = arith.addf %163, %164 : vector<8x128xf32>
    %166 = vector.extract_strided_slice %165 {offsets = [0, 0], sizes = [8, 32], strides = [1, 1]} : vector<8x128xf32> to vector<8x32xf32>
    %167 = vector.extract_strided_slice %165 {offsets = [0, 32], sizes = [8, 32], strides = [1, 1]} : vector<8x128xf32> to vector<8x32xf32>
    %168 = vector.extract_strided_slice %165 {offsets = [0, 96], sizes = [8, 32], strides = [1, 1]} : vector<8x128xf32> to vector<8x32xf32>
    %169 = vector.extract_strided_slice %158 {offsets = [0, 64], sizes = [8, 32], strides = [1, 1]} : vector<8x128xf32> to vector<8x32xf32>
    %170 = math.tanh %169 : vector<8x32xf32>
    %171 = arith.mulf %167, %127 : vector<8x32xf32>
    %172 = arith.mulf %166, %170 : vector<8x32xf32>
    %173 = arith.addf %171, %172 : vector<8x32xf32>
    %174 = math.tanh %173 : vector<8x32xf32>
    %175 = arith.mulf %168, %174 : vector<8x32xf32>
    %cst_62 = arith.constant dense<0.000000e+00> : vector<8x128xf32>
    %176 = tpu.matmul %175, %9, %cst_62 {dimension_numbers = #tpu.dot_dimension_numbers<[1], [0], [0], [1], [0, 0, 1, 1], [], []>} : vector<8x32xf32>, vector<32x128xf32>, vector<8x128xf32> -> vector<8x128xf32>
    %177 = vector.broadcast %10 : vector<1x128xf32> to vector<8x128xf32>
    %178 = arith.addf %176, %177 : vector<8x128xf32>
    %c16 = arith.constant 16 : index
    %c0_63 = arith.constant 0 : index
    %179 = vector.load %arg10[%c16, %c0_63] : memref<64x128xf32, #tpu.memory_space<vmem>>, vector<8x128xf32>
    tpu.vector_store %arg10[%c16, %c0_63], %178 {strides = array<i32>} : memref<64x128xf32, #tpu.memory_space<vmem>>, vector<8x128xf32>,
    %180 = vector.extract_strided_slice %7 {offsets = [32, 0], sizes = [8, 128], strides = [1, 1]} : vector<64x128xf32> to vector<8x128xf32>
    %cst_64 = arith.constant dense<0.000000e+00> : vector<8x128xf32>
    %181 = tpu.matmul %153, %8, %cst_64 {dimension_numbers = #tpu.dot_dimension_numbers<[1], [0], [0], [1], [0, 0, 1, 1], [], []>} : vector<8x32xf32>, vector<32x128xf32>, vector<8x128xf32> -> vector<8x128xf32>
    %182 = arith.addf %180, %181 : vector<8x128xf32>
    %cst_65 = arith.constant 5.000000e-01 : f32
    %183 = vector.broadcast %cst_65 : f32 to vector<8x128xf32>
    %184 = arith.mulf %182, %183 : vector<8x128xf32>
    %185 = math.tanh %184 : vector<8x128xf32>
    %cst_66 = arith.constant 5.000000e-01 : f32
    %186 = vector.broadcast %cst_66 : f32 to vector<8x128xf32>
    %187 = arith.mulf %185, %186 : vector<8x128xf32>
    %cst_67 = arith.constant 5.000000e-01 : f32
    %188 = vector.broadcast %cst_67 : f32 to vector<8x128xf32>
    %189 = arith.addf %187, %188 : vector<8x128xf32>
    %190 = vector.extract_strided_slice %189 {offsets = [0, 0], sizes = [8, 32], strides = [1, 1]} : vector<8x128xf32> to vector<8x32xf32>
    %191 = vector.extract_strided_slice %189 {offsets = [0, 32], sizes = [8, 32], strides = [1, 1]} : vector<8x128xf32> to vector<8x32xf32>
    %192 = vector.extract_strided_slice %189 {offsets = [0, 96], sizes = [8, 32], strides = [1, 1]} : vector<8x128xf32> to vector<8x32xf32>
    %193 = vector.extract_strided_slice %182 {offsets = [0, 64], sizes = [8, 32], strides = [1, 1]} : vector<8x128xf32> to vector<8x32xf32>
    %194 = math.tanh %193 : vector<8x32xf32>
    %195 = arith.mulf %191, %151 : vector<8x32xf32>
    %196 = arith.mulf %190, %194 : vector<8x32xf32>
    %197 = arith.addf %195, %196 : vector<8x32xf32>
    %198 = math.tanh %197 : vector<8x32xf32>
    %199 = arith.mulf %192, %198 : vector<8x32xf32>
    %cst_68 = arith.constant dense<0.000000e+00> : vector<8x128xf32>
    %200 = tpu.matmul %153, %11, %cst_68 {dimension_numbers = #tpu.dot_dimension_numbers<[1], [0], [0], [1], [0, 0, 1, 1], [], []>} : vector<8x32xf32>, vector<32x128xf32>, vector<8x128xf32> -> vector<8x128xf32>
    %cst_69 = arith.constant dense<0.000000e+00> : vector<8x128xf32>
    %201 = tpu.matmul %175, %12, %cst_69 {dimension_numbers = #tpu.dot_dimension_numbers<[1], [0], [0], [1], [0, 0, 1, 1], [], []>} : vector<8x32xf32>, vector<32x128xf32>, vector<8x128xf32> -> vector<8x128xf32>
    %202 = arith.addf %200, %201 : vector<8x128xf32>
    %203 = vector.broadcast %13 : vector<1x128xf32> to vector<8x128xf32>
    %204 = arith.addf %202, %203 : vector<8x128xf32>
    %cst_70 = arith.constant 5.000000e-01 : f32
    %205 = vector.broadcast %cst_70 : f32 to vector<8x128xf32>
    %206 = arith.mulf %204, %205 : vector<8x128xf32>
    %207 = math.tanh %206 : vector<8x128xf32>
    %cst_71 = arith.constant 5.000000e-01 : f32
    %208 = vector.broadcast %cst_71 : f32 to vector<8x128xf32>
    %209 = arith.mulf %207, %208 : vector<8x128xf32>
    %cst_72 = arith.constant 5.000000e-01 : f32
    %210 = vector.broadcast %cst_72 : f32 to vector<8x128xf32>
    %211 = arith.addf %209, %210 : vector<8x128xf32>
    %212 = vector.extract_strided_slice %211 {offsets = [0, 0], sizes = [8, 32], strides = [1, 1]} : vector<8x128xf32> to vector<8x32xf32>
    %213 = vector.extract_strided_slice %211 {offsets = [0, 32], sizes = [8, 32], strides = [1, 1]} : vector<8x128xf32> to vector<8x32xf32>
    %214 = vector.extract_strided_slice %211 {offsets = [0, 96], sizes = [8, 32], strides = [1, 1]} : vector<8x128xf32> to vector<8x32xf32>
    %215 = vector.extract_strided_slice %204 {offsets = [0, 64], sizes = [8, 32], strides = [1, 1]} : vector<8x128xf32> to vector<8x32xf32>
    %216 = math.tanh %215 : vector<8x32xf32>
    %217 = arith.mulf %213, %173 : vector<8x32xf32>
    %218 = arith.mulf %212, %216 : vector<8x32xf32>
    %219 = arith.addf %217, %218 : vector<8x32xf32>
    %220 = math.tanh %219 : vector<8x32xf32>
    %221 = arith.mulf %214, %220 : vector<8x32xf32>
    %cst_73 = arith.constant dense<0.000000e+00> : vector<8x128xf32>
    %222 = tpu.matmul %221, %9, %cst_73 {dimension_numbers = #tpu.dot_dimension_numbers<[1], [0], [0], [1], [0, 0, 1, 1], [], []>} : vector<8x32xf32>, vector<32x128xf32>, vector<8x128xf32> -> vector<8x128xf32>
    %223 = vector.broadcast %10 : vector<1x128xf32> to vector<8x128xf32>
    %224 = arith.addf %222, %223 : vector<8x128xf32>
    %c24 = arith.constant 24 : index
    %c0_74 = arith.constant 0 : index
    %225 = vector.load %arg10[%c24, %c0_74] : memref<64x128xf32, #tpu.memory_space<vmem>>, vector<8x128xf32>
    tpu.vector_store %arg10[%c24, %c0_74], %224 {strides = array<i32>} : memref<64x128xf32, #tpu.memory_space<vmem>>, vector<8x128xf32>,
    %226 = vector.extract_strided_slice %7 {offsets = [40, 0], sizes = [8, 128], strides = [1, 1]} : vector<64x128xf32> to vector<8x128xf32>
    %cst_75 = arith.constant dense<0.000000e+00> : vector<8x128xf32>
    %227 = tpu.matmul %199, %8, %cst_75 {dimension_numbers = #tpu.dot_dimension_numbers<[1], [0], [0], [1], [0, 0, 1, 1], [], []>} : vector<8x32xf32>, vector<32x128xf32>, vector<8x128xf32> -> vector<8x128xf32>
    %228 = arith.addf %226, %227 : vector<8x128xf32>
    %cst_76 = arith.constant 5.000000e-01 : f32
    %229 = vector.broadcast %cst_76 : f32 to vector<8x128xf32>
    %230 = arith.mulf %228, %229 : vector<8x128xf32>
    %231 = math.tanh %230 : vector<8x128xf32>
    %cst_77 = arith.constant 5.000000e-01 : f32
    %232 = vector.broadcast %cst_77 : f32 to vector<8x128xf32>
    %233 = arith.mulf %231, %232 : vector<8x128xf32>
    %cst_78 = arith.constant 5.000000e-01 : f32
    %234 = vector.broadcast %cst_78 : f32 to vector<8x128xf32>
    %235 = arith.addf %233, %234 : vector<8x128xf32>
    %236 = vector.extract_strided_slice %235 {offsets = [0, 0], sizes = [8, 32], strides = [1, 1]} : vector<8x128xf32> to vector<8x32xf32>
    %237 = vector.extract_strided_slice %235 {offsets = [0, 32], sizes = [8, 32], strides = [1, 1]} : vector<8x128xf32> to vector<8x32xf32>
    %238 = vector.extract_strided_slice %235 {offsets = [0, 96], sizes = [8, 32], strides = [1, 1]} : vector<8x128xf32> to vector<8x32xf32>
    %239 = vector.extract_strided_slice %228 {offsets = [0, 64], sizes = [8, 32], strides = [1, 1]} : vector<8x128xf32> to vector<8x32xf32>
    %240 = math.tanh %239 : vector<8x32xf32>
    %241 = arith.mulf %237, %197 : vector<8x32xf32>
    %242 = arith.mulf %236, %240 : vector<8x32xf32>
    %243 = arith.addf %241, %242 : vector<8x32xf32>
    %244 = math.tanh %243 : vector<8x32xf32>
    %245 = arith.mulf %238, %244 : vector<8x32xf32>
    %cst_79 = arith.constant dense<0.000000e+00> : vector<8x128xf32>
    %246 = tpu.matmul %199, %11, %cst_79 {dimension_numbers = #tpu.dot_dimension_numbers<[1], [0], [0], [1], [0, 0, 1, 1], [], []>} : vector<8x32xf32>, vector<32x128xf32>, vector<8x128xf32> -> vector<8x128xf32>
    %cst_80 = arith.constant dense<0.000000e+00> : vector<8x128xf32>
    %247 = tpu.matmul %221, %12, %cst_80 {dimension_numbers = #tpu.dot_dimension_numbers<[1], [0], [0], [1], [0, 0, 1, 1], [], []>} : vector<8x32xf32>, vector<32x128xf32>, vector<8x128xf32> -> vector<8x128xf32>
    %248 = arith.addf %246, %247 : vector<8x128xf32>
    %249 = vector.broadcast %13 : vector<1x128xf32> to vector<8x128xf32>
    %250 = arith.addf %248, %249 : vector<8x128xf32>
    %cst_81 = arith.constant 5.000000e-01 : f32
    %251 = vector.broadcast %cst_81 : f32 to vector<8x128xf32>
    %252 = arith.mulf %250, %251 : vector<8x128xf32>
    %253 = math.tanh %252 : vector<8x128xf32>
    %cst_82 = arith.constant 5.000000e-01 : f32
    %254 = vector.broadcast %cst_82 : f32 to vector<8x128xf32>
    %255 = arith.mulf %253, %254 : vector<8x128xf32>
    %cst_83 = arith.constant 5.000000e-01 : f32
    %256 = vector.broadcast %cst_83 : f32 to vector<8x128xf32>
    %257 = arith.addf %255, %256 : vector<8x128xf32>
    %258 = vector.extract_strided_slice %257 {offsets = [0, 0], sizes = [8, 32], strides = [1, 1]} : vector<8x128xf32> to vector<8x32xf32>
    %259 = vector.extract_strided_slice %257 {offsets = [0, 32], sizes = [8, 32], strides = [1, 1]} : vector<8x128xf32> to vector<8x32xf32>
    %260 = vector.extract_strided_slice %257 {offsets = [0, 96], sizes = [8, 32], strides = [1, 1]} : vector<8x128xf32> to vector<8x32xf32>
    %261 = vector.extract_strided_slice %250 {offsets = [0, 64], sizes = [8, 32], strides = [1, 1]} : vector<8x128xf32> to vector<8x32xf32>
    %262 = math.tanh %261 : vector<8x32xf32>
    %263 = arith.mulf %259, %219 : vector<8x32xf32>
    %264 = arith.mulf %258, %262 : vector<8x32xf32>
    %265 = arith.addf %263, %264 : vector<8x32xf32>
    %266 = math.tanh %265 : vector<8x32xf32>
    %267 = arith.mulf %260, %266 : vector<8x32xf32>
    %cst_84 = arith.constant dense<0.000000e+00> : vector<8x128xf32>
    %268 = tpu.matmul %267, %9, %cst_84 {dimension_numbers = #tpu.dot_dimension_numbers<[1], [0], [0], [1], [0, 0, 1, 1], [], []>} : vector<8x32xf32>, vector<32x128xf32>, vector<8x128xf32> -> vector<8x128xf32>
    %269 = vector.broadcast %10 : vector<1x128xf32> to vector<8x128xf32>
    %270 = arith.addf %268, %269 : vector<8x128xf32>
    %c32 = arith.constant 32 : index
    %c0_85 = arith.constant 0 : index
    %271 = vector.load %arg10[%c32, %c0_85] : memref<64x128xf32, #tpu.memory_space<vmem>>, vector<8x128xf32>
    tpu.vector_store %arg10[%c32, %c0_85], %270 {strides = array<i32>} : memref<64x128xf32, #tpu.memory_space<vmem>>, vector<8x128xf32>,
    %272 = vector.extract_strided_slice %7 {offsets = [48, 0], sizes = [8, 128], strides = [1, 1]} : vector<64x128xf32> to vector<8x128xf32>
    %cst_86 = arith.constant dense<0.000000e+00> : vector<8x128xf32>
    %273 = tpu.matmul %245, %8, %cst_86 {dimension_numbers = #tpu.dot_dimension_numbers<[1], [0], [0], [1], [0, 0, 1, 1], [], []>} : vector<8x32xf32>, vector<32x128xf32>, vector<8x128xf32> -> vector<8x128xf32>
    %274 = arith.addf %272, %273 : vector<8x128xf32>
    %cst_87 = arith.constant 5.000000e-01 : f32
    %275 = vector.broadcast %cst_87 : f32 to vector<8x128xf32>
    %276 = arith.mulf %274, %275 : vector<8x128xf32>
    %277 = math.tanh %276 : vector<8x128xf32>
    %cst_88 = arith.constant 5.000000e-01 : f32
    %278 = vector.broadcast %cst_88 : f32 to vector<8x128xf32>
    %279 = arith.mulf %277, %278 : vector<8x128xf32>
    %cst_89 = arith.constant 5.000000e-01 : f32
    %280 = vector.broadcast %cst_89 : f32 to vector<8x128xf32>
    %281 = arith.addf %279, %280 : vector<8x128xf32>
    %282 = vector.extract_strided_slice %281 {offsets = [0, 0], sizes = [8, 32], strides = [1, 1]} : vector<8x128xf32> to vector<8x32xf32>
    %283 = vector.extract_strided_slice %281 {offsets = [0, 32], sizes = [8, 32], strides = [1, 1]} : vector<8x128xf32> to vector<8x32xf32>
    %284 = vector.extract_strided_slice %281 {offsets = [0, 96], sizes = [8, 32], strides = [1, 1]} : vector<8x128xf32> to vector<8x32xf32>
    %285 = vector.extract_strided_slice %274 {offsets = [0, 64], sizes = [8, 32], strides = [1, 1]} : vector<8x128xf32> to vector<8x32xf32>
    %286 = math.tanh %285 : vector<8x32xf32>
    %287 = arith.mulf %283, %243 : vector<8x32xf32>
    %288 = arith.mulf %282, %286 : vector<8x32xf32>
    %289 = arith.addf %287, %288 : vector<8x32xf32>
    %290 = math.tanh %289 : vector<8x32xf32>
    %291 = arith.mulf %284, %290 : vector<8x32xf32>
    %cst_90 = arith.constant dense<0.000000e+00> : vector<8x128xf32>
    %292 = tpu.matmul %245, %11, %cst_90 {dimension_numbers = #tpu.dot_dimension_numbers<[1], [0], [0], [1], [0, 0, 1, 1], [], []>} : vector<8x32xf32>, vector<32x128xf32>, vector<8x128xf32> -> vector<8x128xf32>
    %cst_91 = arith.constant dense<0.000000e+00> : vector<8x128xf32>
    %293 = tpu.matmul %267, %12, %cst_91 {dimension_numbers = #tpu.dot_dimension_numbers<[1], [0], [0], [1], [0, 0, 1, 1], [], []>} : vector<8x32xf32>, vector<32x128xf32>, vector<8x128xf32> -> vector<8x128xf32>
    %294 = arith.addf %292, %293 : vector<8x128xf32>
    %295 = vector.broadcast %13 : vector<1x128xf32> to vector<8x128xf32>
    %296 = arith.addf %294, %295 : vector<8x128xf32>
    %cst_92 = arith.constant 5.000000e-01 : f32
    %297 = vector.broadcast %cst_92 : f32 to vector<8x128xf32>
    %298 = arith.mulf %296, %297 : vector<8x128xf32>
    %299 = math.tanh %298 : vector<8x128xf32>
    %cst_93 = arith.constant 5.000000e-01 : f32
    %300 = vector.broadcast %cst_93 : f32 to vector<8x128xf32>
    %301 = arith.mulf %299, %300 : vector<8x128xf32>
    %cst_94 = arith.constant 5.000000e-01 : f32
    %302 = vector.broadcast %cst_94 : f32 to vector<8x128xf32>
    %303 = arith.addf %301, %302 : vector<8x128xf32>
    %304 = vector.extract_strided_slice %303 {offsets = [0, 0], sizes = [8, 32], strides = [1, 1]} : vector<8x128xf32> to vector<8x32xf32>
    %305 = vector.extract_strided_slice %303 {offsets = [0, 32], sizes = [8, 32], strides = [1, 1]} : vector<8x128xf32> to vector<8x32xf32>
    %306 = vector.extract_strided_slice %303 {offsets = [0, 96], sizes = [8, 32], strides = [1, 1]} : vector<8x128xf32> to vector<8x32xf32>
    %307 = vector.extract_strided_slice %296 {offsets = [0, 64], sizes = [8, 32], strides = [1, 1]} : vector<8x128xf32> to vector<8x32xf32>
    %308 = math.tanh %307 : vector<8x32xf32>
    %309 = arith.mulf %305, %265 : vector<8x32xf32>
    %310 = arith.mulf %304, %308 : vector<8x32xf32>
    %311 = arith.addf %309, %310 : vector<8x32xf32>
    %312 = math.tanh %311 : vector<8x32xf32>
    %313 = arith.mulf %306, %312 : vector<8x32xf32>
    %cst_95 = arith.constant dense<0.000000e+00> : vector<8x128xf32>
    %314 = tpu.matmul %313, %9, %cst_95 {dimension_numbers = #tpu.dot_dimension_numbers<[1], [0], [0], [1], [0, 0, 1, 1], [], []>} : vector<8x32xf32>, vector<32x128xf32>, vector<8x128xf32> -> vector<8x128xf32>
    %315 = vector.broadcast %10 : vector<1x128xf32> to vector<8x128xf32>
    %316 = arith.addf %314, %315 : vector<8x128xf32>
    %c40 = arith.constant 40 : index
    %c0_96 = arith.constant 0 : index
    %317 = vector.load %arg10[%c40, %c0_96] : memref<64x128xf32, #tpu.memory_space<vmem>>, vector<8x128xf32>
    tpu.vector_store %arg10[%c40, %c0_96], %316 {strides = array<i32>} : memref<64x128xf32, #tpu.memory_space<vmem>>, vector<8x128xf32>,
    %318 = vector.extract_strided_slice %7 {offsets = [56, 0], sizes = [8, 128], strides = [1, 1]} : vector<64x128xf32> to vector<8x128xf32>
    %cst_97 = arith.constant dense<0.000000e+00> : vector<8x128xf32>
    %319 = tpu.matmul %291, %8, %cst_97 {dimension_numbers = #tpu.dot_dimension_numbers<[1], [0], [0], [1], [0, 0, 1, 1], [], []>} : vector<8x32xf32>, vector<32x128xf32>, vector<8x128xf32> -> vector<8x128xf32>
    %320 = arith.addf %318, %319 : vector<8x128xf32>
    %cst_98 = arith.constant 5.000000e-01 : f32
    %321 = vector.broadcast %cst_98 : f32 to vector<8x128xf32>
    %322 = arith.mulf %320, %321 : vector<8x128xf32>
    %323 = math.tanh %322 : vector<8x128xf32>
    %cst_99 = arith.constant 5.000000e-01 : f32
    %324 = vector.broadcast %cst_99 : f32 to vector<8x128xf32>
    %325 = arith.mulf %323, %324 : vector<8x128xf32>
    %cst_100 = arith.constant 5.000000e-01 : f32
    %326 = vector.broadcast %cst_100 : f32 to vector<8x128xf32>
    %327 = arith.addf %325, %326 : vector<8x128xf32>
    %328 = vector.extract_strided_slice %327 {offsets = [0, 0], sizes = [8, 32], strides = [1, 1]} : vector<8x128xf32> to vector<8x32xf32>
    %329 = vector.extract_strided_slice %327 {offsets = [0, 32], sizes = [8, 32], strides = [1, 1]} : vector<8x128xf32> to vector<8x32xf32>
    %330 = vector.extract_strided_slice %327 {offsets = [0, 96], sizes = [8, 32], strides = [1, 1]} : vector<8x128xf32> to vector<8x32xf32>
    %331 = vector.extract_strided_slice %320 {offsets = [0, 64], sizes = [8, 32], strides = [1, 1]} : vector<8x128xf32> to vector<8x32xf32>
    %332 = math.tanh %331 : vector<8x32xf32>
    %333 = arith.mulf %329, %289 : vector<8x32xf32>
    %334 = arith.mulf %328, %332 : vector<8x32xf32>
    %335 = arith.addf %333, %334 : vector<8x32xf32>
    %336 = math.tanh %335 : vector<8x32xf32>
    %337 = arith.mulf %330, %336 : vector<8x32xf32>
    %cst_101 = arith.constant dense<0.000000e+00> : vector<8x128xf32>
    %338 = tpu.matmul %291, %11, %cst_101 {dimension_numbers = #tpu.dot_dimension_numbers<[1], [0], [0], [1], [0, 0, 1, 1], [], []>} : vector<8x32xf32>, vector<32x128xf32>, vector<8x128xf32> -> vector<8x128xf32>
    %cst_102 = arith.constant dense<0.000000e+00> : vector<8x128xf32>
    %339 = tpu.matmul %313, %12, %cst_102 {dimension_numbers = #tpu.dot_dimension_numbers<[1], [0], [0], [1], [0, 0, 1, 1], [], []>} : vector<8x32xf32>, vector<32x128xf32>, vector<8x128xf32> -> vector<8x128xf32>
    %340 = arith.addf %338, %339 : vector<8x128xf32>
    %341 = vector.broadcast %13 : vector<1x128xf32> to vector<8x128xf32>
    %342 = arith.addf %340, %341 : vector<8x128xf32>
    %cst_103 = arith.constant 5.000000e-01 : f32
    %343 = vector.broadcast %cst_103 : f32 to vector<8x128xf32>
    %344 = arith.mulf %342, %343 : vector<8x128xf32>
    %345 = math.tanh %344 : vector<8x128xf32>
    %cst_104 = arith.constant 5.000000e-01 : f32
    %346 = vector.broadcast %cst_104 : f32 to vector<8x128xf32>
    %347 = arith.mulf %345, %346 : vector<8x128xf32>
    %cst_105 = arith.constant 5.000000e-01 : f32
    %348 = vector.broadcast %cst_105 : f32 to vector<8x128xf32>
    %349 = arith.addf %347, %348 : vector<8x128xf32>
    %350 = vector.extract_strided_slice %349 {offsets = [0, 0], sizes = [8, 32], strides = [1, 1]} : vector<8x128xf32> to vector<8x32xf32>
    %351 = vector.extract_strided_slice %349 {offsets = [0, 32], sizes = [8, 32], strides = [1, 1]} : vector<8x128xf32> to vector<8x32xf32>
    %352 = vector.extract_strided_slice %349 {offsets = [0, 96], sizes = [8, 32], strides = [1, 1]} : vector<8x128xf32> to vector<8x32xf32>
    %353 = vector.extract_strided_slice %342 {offsets = [0, 64], sizes = [8, 32], strides = [1, 1]} : vector<8x128xf32> to vector<8x32xf32>
    %354 = math.tanh %353 : vector<8x32xf32>
    %355 = arith.mulf %351, %311 : vector<8x32xf32>
    %356 = arith.mulf %350, %354 : vector<8x32xf32>
    %357 = arith.addf %355, %356 : vector<8x32xf32>
    %358 = math.tanh %357 : vector<8x32xf32>
    %359 = arith.mulf %352, %358 : vector<8x32xf32>
    %cst_106 = arith.constant dense<0.000000e+00> : vector<8x128xf32>
    %360 = tpu.matmul %359, %9, %cst_106 {dimension_numbers = #tpu.dot_dimension_numbers<[1], [0], [0], [1], [0, 0, 1, 1], [], []>} : vector<8x32xf32>, vector<32x128xf32>, vector<8x128xf32> -> vector<8x128xf32>
    %361 = vector.broadcast %10 : vector<1x128xf32> to vector<8x128xf32>
    %362 = arith.addf %360, %361 : vector<8x128xf32>
    %c48 = arith.constant 48 : index
    %c0_107 = arith.constant 0 : index
    %363 = vector.load %arg10[%c48, %c0_107] : memref<64x128xf32, #tpu.memory_space<vmem>>, vector<8x128xf32>
    tpu.vector_store %arg10[%c48, %c0_107], %362 {strides = array<i32>} : memref<64x128xf32, #tpu.memory_space<vmem>>, vector<8x128xf32>,
    %cst_108 = arith.constant dense<0.000000e+00> : vector<8x128xf32>
    %364 = tpu.matmul %337, %11, %cst_108 {dimension_numbers = #tpu.dot_dimension_numbers<[1], [0], [0], [1], [0, 0, 1, 1], [], []>} : vector<8x32xf32>, vector<32x128xf32>, vector<8x128xf32> -> vector<8x128xf32>
    %cst_109 = arith.constant dense<0.000000e+00> : vector<8x128xf32>
    %365 = tpu.matmul %359, %12, %cst_109 {dimension_numbers = #tpu.dot_dimension_numbers<[1], [0], [0], [1], [0, 0, 1, 1], [], []>} : vector<8x32xf32>, vector<32x128xf32>, vector<8x128xf32> -> vector<8x128xf32>
    %366 = arith.addf %364, %365 : vector<8x128xf32>
    %367 = vector.broadcast %13 : vector<1x128xf32> to vector<8x128xf32>
    %368 = arith.addf %366, %367 : vector<8x128xf32>
    %cst_110 = arith.constant 5.000000e-01 : f32
    %369 = vector.broadcast %cst_110 : f32 to vector<8x128xf32>
    %370 = arith.mulf %368, %369 : vector<8x128xf32>
    %371 = math.tanh %370 : vector<8x128xf32>
    %cst_111 = arith.constant 5.000000e-01 : f32
    %372 = vector.broadcast %cst_111 : f32 to vector<8x128xf32>
    %373 = arith.mulf %371, %372 : vector<8x128xf32>
    %cst_112 = arith.constant 5.000000e-01 : f32
    %374 = vector.broadcast %cst_112 : f32 to vector<8x128xf32>
    %375 = arith.addf %373, %374 : vector<8x128xf32>
    %376 = vector.extract_strided_slice %375 {offsets = [0, 0], sizes = [8, 32], strides = [1, 1]} : vector<8x128xf32> to vector<8x32xf32>
    %377 = vector.extract_strided_slice %375 {offsets = [0, 32], sizes = [8, 32], strides = [1, 1]} : vector<8x128xf32> to vector<8x32xf32>
    %378 = vector.extract_strided_slice %375 {offsets = [0, 96], sizes = [8, 32], strides = [1, 1]} : vector<8x128xf32> to vector<8x32xf32>
    %379 = vector.extract_strided_slice %368 {offsets = [0, 64], sizes = [8, 32], strides = [1, 1]} : vector<8x128xf32> to vector<8x32xf32>
    %380 = math.tanh %379 : vector<8x32xf32>
    %381 = arith.mulf %377, %357 : vector<8x32xf32>
    %382 = arith.mulf %376, %380 : vector<8x32xf32>
    %383 = arith.addf %381, %382 : vector<8x32xf32>
    %384 = math.tanh %383 : vector<8x32xf32>
    %385 = arith.mulf %378, %384 : vector<8x32xf32>
    %cst_113 = arith.constant dense<0.000000e+00> : vector<8x128xf32>
    %386 = tpu.matmul %385, %9, %cst_113 {dimension_numbers = #tpu.dot_dimension_numbers<[1], [0], [0], [1], [0, 0, 1, 1], [], []>} : vector<8x32xf32>, vector<32x128xf32>, vector<8x128xf32> -> vector<8x128xf32>
    %387 = vector.broadcast %10 : vector<1x128xf32> to vector<8x128xf32>
    %388 = arith.addf %386, %387 : vector<8x128xf32>
    %c56 = arith.constant 56 : index
    %c0_114 = arith.constant 0 : index
    %389 = vector.load %arg10[%c56, %c0_114] : memref<64x128xf32, #tpu.memory_space<vmem>>, vector<8x128xf32>
    tpu.vector_store %arg10[%c56, %c0_114], %388 {strides = array<i32>} : memref<64x128xf32, #tpu.memory_space<vmem>>, vector<8x128xf32>,
    %c0_115 = arith.constant 0 : index
    %c0_116 = arith.constant 0 : index
    %c0_117 = arith.constant 0 : index
    %390 = vector.load %arg11[%c0_115, %c0_116, %c0_117] : memref<2x8x32xf32, #tpu.memory_space<vmem>>, vector<1x8x32xf32>
    %391 = vector.shape_cast %390 : vector<1x8x32xf32> to vector<8x32xf32>
    %392 = vector.shape_cast %337 : vector<8x32xf32> to vector<1x8x32xf32>
    tpu.vector_store %arg11[%c0_115, %c0_116, %c0_117], %392 {strides = array<i32>} : memref<2x8x32xf32, #tpu.memory_space<vmem>>, vector<1x8x32xf32>,
    %c0_118 = arith.constant 0 : index
    %c0_119 = arith.constant 0 : index
    %c0_120 = arith.constant 0 : index
    %393 = vector.load %arg12[%c0_118, %c0_119, %c0_120] : memref<2x8x32xf32, #tpu.memory_space<vmem>>, vector<1x8x32xf32>
    %394 = vector.shape_cast %393 : vector<1x8x32xf32> to vector<8x32xf32>
    %395 = vector.shape_cast %335 : vector<8x32xf32> to vector<1x8x32xf32>
    tpu.vector_store %arg12[%c0_118, %c0_119, %c0_120], %395 {strides = array<i32>} : memref<2x8x32xf32, #tpu.memory_space<vmem>>, vector<1x8x32xf32>,
    %c1_121 = arith.constant 1 : index
    %c0_122 = arith.constant 0 : index
    %c0_123 = arith.constant 0 : index
    %396 = vector.load %arg11[%c1_121, %c0_122, %c0_123] : memref<2x8x32xf32, #tpu.memory_space<vmem>>, vector<1x8x32xf32>
    %397 = vector.shape_cast %396 : vector<1x8x32xf32> to vector<8x32xf32>
    %398 = vector.shape_cast %385 : vector<8x32xf32> to vector<1x8x32xf32>
    tpu.vector_store %arg11[%c1_121, %c0_122, %c0_123], %398 {strides = array<i32>} : memref<2x8x32xf32, #tpu.memory_space<vmem>>, vector<1x8x32xf32>,
    %c1_124 = arith.constant 1 : index
    %c0_125 = arith.constant 0 : index
    %c0_126 = arith.constant 0 : index
    %399 = vector.load %arg12[%c1_124, %c0_125, %c0_126] : memref<2x8x32xf32, #tpu.memory_space<vmem>>, vector<1x8x32xf32>
    %400 = vector.shape_cast %399 : vector<1x8x32xf32> to vector<8x32xf32>
    %401 = vector.shape_cast %383 : vector<8x32xf32> to vector<1x8x32xf32>
    tpu.vector_store %arg12[%c1_124, %c0_125, %c0_126], %401 {strides = array<i32>} : memref<2x8x32xf32, #tpu.memory_space<vmem>>, vector<1x8x32xf32>,
    return
  }
}

</mosaic_0001>

<llo_original>
// kernel: rnn_model_forward.1
$region0: #{rnn_model_forward.1}
  #allocation0 [shape = 'u32[]', space=smem, size = 0x4, offset = 0x4, fixed_abs, tag = 'smem constant byte address 0x4 - core index']
  #allocation1 [shape = 'u32[144,128]{1,0:T(1,128)}', space=vmem, size = 0x12000, scoped, tag = 'internal scratch']
  %s0 = inlined_call_operand.vmem [shape: s32[64,1], index: 0, kind: input, shape index: {}]
  %s1 = inlined_call_operand.vmem [shape: f32[128,128], index: 1, kind: input, shape index: {}]
  %s2 = inlined_call_operand.hbm [shape: f32[32,128], index: 2, kind: input, shape index: {}]
  %s3 = inlined_call_operand.vmem [shape: f32[32,128], index: 3, kind: input, shape index: {}]
  %s4 = inlined_call_operand.hbm [shape: f32[32,128], index: 4, kind: input, shape index: {}]
  %s5 = inlined_call_operand.vmem [shape: f32[1,128], index: 5, kind: input, shape index: {}]
  %s6 = inlined_call_operand.hbm [shape: f32[32,128], index: 6, kind: input, shape index: {}]
  %s7 = inlined_call_operand.hbm [shape: f32[1,128], index: 7, kind: input, shape index: {}]
  %s8 = inlined_call_operand.vmem [shape: f32[2,8,32], index: 8, kind: input, shape index: {}]
  %s9 = inlined_call_operand.vmem [shape: f32[2,8,32], index: 9, kind: input, shape index: {}]
  %s10 = inlined_call_operand.vmem [shape: f32[64,128], index: 10, kind: output, shape index: {0}]
  %s11 = inlined_call_operand.vmem [shape: f32[2,8,32], index: 11, kind: output, shape index: {1}]
  %s12 = inlined_call_operand.vmem [shape: f32[2,8,32], index: 12, kind: output, shape index: {2}]
  %13 = xla_tuple %s10, %s11, %s12
  %s14 = sld [smem:[#allocation0]]
  $region82: #{rnn_model_forward.1} parent=0
    _
  %s16 = ssub.s32 1, %s14
  %s17 = scalar_select 0, %s16, %s14
  $region1: #{rnn_model_forward.1} parent=0
    #allocation2 [shape = 'u8[16384]{0}', space=vmem, size = 0x4000, scoped, tag = 'input window, operand 2, single buffered']
    #allocation3 [shape = 's32[1]{0}', space=sflag, size = 0x4, scoped, tag = 'scoped memory for rnn_model_forward.1']
    #allocation4 [shape = 'u8[16384]{0}', space=vmem, size = 0x4000, scoped, tag = 'input window, operand 4, single buffered']
    #allocation5 [shape = 's32[1]{0}', space=sflag, size = 0x4, scoped, tag = 'scoped memory for rnn_model_forward.1']
    #allocation6 [shape = 'u8[16384]{0}', space=vmem, size = 0x4000, scoped, tag = 'input window, operand 6, single buffered']
    #allocation7 [shape = 'u8[512]{0}', space=vmem, size = 0x400, scoped, tag = 'input window, operand 7, single buffered']
    #allocation8 [shape = 's32[1]{0}', space=sflag, size = 0x4, scoped, tag = 'scoped memory for rnn_model_forward.1']
    %18 = vsyncpa [#allocation3], 0
    %19 = vsyncpa [#allocation5], 0
    %20 = vsyncpa [#allocation8], 0
    // Predicated region
    $region2: #{rnn_model_forward.1} parent=1 // pred_check
      _
    $region3: #{rnn_model_forward.1} parent=1 // pred_check_branch
      %22 = sbr.rel (0) target = $region5
    $region4: #{rnn_model_forward.1} parent=1 // pred_region
      _
    $region5: #{rnn_model_forward.1} parent=1 // pred_fallthru
      _
    // Predicated region
    $region6: #{rnn_model_forward.1} parent=1 // pred_check
      _
    $region7: #{rnn_model_forward.1} parent=1 // pred_check_branch
      %24 = sbr.rel (0) target = $region9
    $region8: #{rnn_model_forward.1} parent=1 // pred_region
      _
    $region9: #{rnn_model_forward.1} parent=1 // pred_fallthru
      _
    // Predicated region
    $region10: #{rnn_model_forward.1} parent=1 // pred_check
      _
    $region11: #{rnn_model_forward.1} parent=1 // pred_check_branch
      %26 = sbr.rel (0) target = $region13
    $region12: #{rnn_model_forward.1} parent=1 // pred_region
      %s28 = ssub.s32 512, 512
      %29 = vsyncadd [#allocation3], %s28
      %s30 = sshll.u32 [#allocation2], 4
      %s31 = int_to_ptr.vmem [resolvable:$true] %s30
      %36 = dma.hbm_to_vmem [thread:$0]  %s2, 512, %s31, [#allocation3], 128, 128, 8
    $region13: #{rnn_model_forward.1} parent=1 // pred_fallthru
      _
    // Predicated region
    $region14: #{rnn_model_forward.1} parent=1 // pred_check
      _
    $region15: #{rnn_model_forward.1} parent=1 // pred_check_branch
      %38 = sbr.rel (0) target = $region17
    $region16: #{rnn_model_forward.1} parent=1 // pred_region
      _
    $region17: #{rnn_model_forward.1} parent=1 // pred_fallthru
      _
    // Predicated region
    $region18: #{rnn_model_forward.1} parent=1 // pred_check
      _
    $region19: #{rnn_model_forward.1} parent=1 // pred_check_branch
      %40 = sbr.rel (0) target = $region21
    $region20: #{rnn_model_forward.1} parent=1 // pred_region
      %s42 = ssub.s32 512, 512
      %43 = vsyncadd [#allocation5], %s42
      %s44 = sshll.u32 [#allocation4], 4
      %s45 = int_to_ptr.vmem [resolvable:$true] %s44
      %50 = dma.hbm_to_vmem [thread:$0]  %s4, 512, %s45, [#allocation5], 128, 128, 8
    $region21: #{rnn_model_forward.1} parent=1 // pred_fallthru
      _
    // Predicated region
    $region22: #{rnn_model_forward.1} parent=1 // pred_check
      _
    $region23: #{rnn_model_forward.1} parent=1 // pred_check_branch
      %52 = sbr.rel (0) target = $region25
    $region24: #{rnn_model_forward.1} parent=1 // pred_region
      _
    $region25: #{rnn_model_forward.1} parent=1 // pred_fallthru
      _
    // Predicated region
    $region26: #{rnn_model_forward.1} parent=1 // pred_check
      _
    $region27: #{rnn_model_forward.1} parent=1 // pred_check_branch
      %54 = sbr.rel (0) target = $region29
    $region28: #{rnn_model_forward.1} parent=1 // pred_region
      %s56 = ssub.s32 512, 512
      %57 = vsyncadd [#allocation5], %s56
      %s58 = sshll.u32 [#allocation6], 4
      %s59 = int_to_ptr.vmem [resolvable:$true] %s58
      %64 = dma.hbm_to_vmem [thread:$0]  %s6, 512, %s59, [#allocation5], 128, 128, 8
    $region29: #{rnn_model_forward.1} parent=1 // pred_fallthru
      _
    // Predicated region
    $region30: #{rnn_model_forward.1} parent=1 // pred_check
      _
    $region31: #{rnn_model_forward.1} parent=1 // pred_check_branch
      %66 = sbr.rel (0) target = $region33
    $region32: #{rnn_model_forward.1} parent=1 // pred_region
      %s68 = ssub.s32 16, 16
      %69 = vsyncadd [#allocation8], %s68
      %s71 = sshll.u32 [#allocation7], 4
      %s72 = int_to_ptr.vmem [resolvable:$true] %s71
      %74 = dma.hbm_to_vmem [thread:$0]  %s7, 16, %s72, [#allocation8]
    $region33: #{rnn_model_forward.1} parent=1 // pred_fallthru
      _
    // Predicated region
    $region34: #{rnn_model_forward.1} parent=1 // pred_check
      _
    $region35: #{rnn_model_forward.1} parent=1 // pred_check_branch
      %76 = sbr.rel (0) target = $region37
    $region36: #{rnn_model_forward.1} parent=1 // pred_region
      _
    $region37: #{rnn_model_forward.1} parent=1 // pred_fallthru
      _
    // Predicated region
    $region38: #{rnn_model_forward.1} parent=1 // pred_check
      _
    $region39: #{rnn_model_forward.1} parent=1 // pred_check_branch
      %78 = sbr.rel (0) target = $region41
    $region40: #{rnn_model_forward.1} parent=1 // pred_region
      _
    $region41: #{rnn_model_forward.1} parent=1 // pred_fallthru
      _
    // Predicated region
    $region42: #{rnn_model_forward.1} parent=1 // pred_check
      _
    $region43: #{rnn_model_forward.1} parent=1 // pred_check_branch
      %80 = sbr.rel (0) target = $region45
    $region44: #{rnn_model_forward.1} parent=1 // pred_region
      %81 = dma.done [#allocation3], 512
    $region45: #{rnn_model_forward.1} parent=1 // pred_fallthru
      _
    // Predicated region
    $region46: #{rnn_model_forward.1} parent=1 // pred_check
      _
    $region47: #{rnn_model_forward.1} parent=1 // pred_check_branch
      %83 = sbr.rel (0) target = $region49
    $region48: #{rnn_model_forward.1} parent=1 // pred_region
      %84 = dma.done [#allocation5], 512
    $region49: #{rnn_model_forward.1} parent=1 // pred_fallthru
      _
    // Predicated region
    $region50: #{rnn_model_forward.1} parent=1 // pred_check
      _
    $region51: #{rnn_model_forward.1} parent=1 // pred_check_branch
      %86 = sbr.rel (0) target = $region53
    $region52: #{rnn_model_forward.1} parent=1 // pred_region
      %87 = dma.done [#allocation5], 512
    $region53: #{rnn_model_forward.1} parent=1 // pred_fallthru
      _
    // Predicated region
    $region54: #{rnn_model_forward.1} parent=1 // pred_check
      _
    $region55: #{rnn_model_forward.1} parent=1 // pred_check_branch
      %89 = sbr.rel (0) target = $region57
    $region56: #{rnn_model_forward.1} parent=1 // pred_region
      %90 = dma.done [#allocation8], 16
    $region57: #{rnn_model_forward.1} parent=1 // pred_fallthru
      _
    %v91 = vld [vmem:[%s0] sm:$0xff]
    %v92 = vld [vmem:[%s0 + $0x8] sm:$0xff]
    %v93 = vld [vmem:[%s0 + $0x10] sm:$0xff]
    %v94 = vld [vmem:[%s0 + $0x18] sm:$0xff]
    %v95 = vld [vmem:[%s0 + $0x20] sm:$0xff]
    %v96 = vld [vmem:[%s0 + $0x28] sm:$0xff]
    %v97 = vld [vmem:[%s0 + $0x30] sm:$0xff]
    %v98 = vld [vmem:[%s0 + $0x38] sm:$0xff]
    %v99 = vlaneseq
    %v100 = vand.u32 %v99, 127
    %101 = vset.pattern.permute.xlu0 0
    %102 = vperm.xlu0 %101, %v91
    %v103 = vpop.permute.xlu0 %102
    %104 = vset.pattern.permute.xlu0 0
    %105 = vperm.xlu0 %104, %v92
    %v106 = vpop.permute.xlu0 %105
    %107 = vset.pattern.permute.xlu0 0
    %108 = vperm.xlu0 %107, %v93
    %v109 = vpop.permute.xlu0 %108
    %110 = vset.pattern.permute.xlu0 0
    %111 = vperm.xlu0 %110, %v94
    %v112 = vpop.permute.xlu0 %111
    %113 = vset.pattern.permute.xlu0 0
    %114 = vperm.xlu0 %113, %v95
    %v115 = vpop.permute.xlu0 %114
    %116 = vset.pattern.permute.xlu0 0
    %117 = vperm.xlu0 %116, %v96
    %v118 = vpop.permute.xlu0 %117
    %119 = vset.pattern.permute.xlu0 0
    %120 = vperm.xlu0 %119, %v97
    %v121 = vpop.permute.xlu0 %120
    %122 = vset.pattern.permute.xlu0 0
    %123 = vperm.xlu0 %122, %v98
    %v124 = vpop.permute.xlu0 %123
    %vm125 = vcmp.eq.s32.totalorder %v100, %v103
    %vm126 = vcmp.eq.s32.totalorder %v100, %v106
    %vm127 = vcmp.eq.s32.totalorder %v100, %v109
    %vm128 = vcmp.eq.s32.totalorder %v100, %v112
    %vm129 = vcmp.eq.s32.totalorder %v100, %v115
    %vm130 = vcmp.eq.s32.totalorder %v100, %v118
    %vm131 = vcmp.eq.s32.totalorder %v100, %v121
    %vm132 = vcmp.eq.s32.totalorder %v100, %v124
    %v133 = vsel %vm125, 1, 0
    %v134 = vsel %vm126, 1, 0
    %v135 = vsel %vm127, 1, 0
    %v136 = vsel %vm128, 1, 0
    %v137 = vsel %vm129, 1, 0
    %v138 = vsel %vm130, 1, 0
    %v139 = vsel %vm131, 1, 0
    %v140 = vsel %vm132, 1, 0
    %v141 = vcvt.s32.f32 %v133
    %v142 = vcvt.s32.f32 %v134
    %v143 = vcvt.s32.f32 %v135
    %v144 = vcvt.s32.f32 %v136
    %v145 = vcvt.s32.f32 %v137
    %v146 = vcvt.s32.f32 %v138
    %v147 = vcvt.s32.f32 %v139
    %v148 = vcvt.s32.f32 %v140
    %v149 = vld [vmem:[%s1] sm:$0xff]
    %v150 = vld [vmem:[%s1 + $0x8] sm:$0xff]
    %v151 = vld [vmem:[%s1 + $0x10] sm:$0xff]
    %v152 = vld [vmem:[%s1 + $0x18] sm:$0xff]
    %v153 = vld [vmem:[%s1 + $0x20] sm:$0xff]
    %v154 = vld [vmem:[%s1 + $0x28] sm:$0xff]
    %v155 = vld [vmem:[%s1 + $0x30] sm:$0xff]
    %v156 = vld [vmem:[%s1 + $0x38] sm:$0xff]
    %v157 = vld [vmem:[%s1 + $0x40] sm:$0xff]
    %v158 = vld [vmem:[%s1 + $0x48] sm:$0xff]
    %v159 = vld [vmem:[%s1 + $0x50] sm:$0xff]
    %v160 = vld [vmem:[%s1 + $0x58] sm:$0xff]
    %v161 = vld [vmem:[%s1 + $0x60] sm:$0xff]
    %v162 = vld [vmem:[%s1 + $0x68] sm:$0xff]
    %v163 = vld [vmem:[%s1 + $0x70] sm:$0xff]
    %v164 = vld [vmem:[%s1 + $0x78] sm:$0xff]
    %165 = vmatprep.subr.mxu0 0.0
    %166 = vmatpush1.msra.mxu0 %v149
    %167 = vmatprep.subr.mxu0 0.0
    %168 = vmatpush1.msra.mxu0 %v150
    %169 = vmatprep.subr.mxu0 0.0
    %170 = vmatpush1.msra.mxu0 %v151
    %171 = vmatprep.subr.mxu0 0.0
    %172 = vmatpush1.msra.mxu0 %v152
    %173 = vmatprep.subr.mxu0 0.0
    %174 = vmatpush1.msra.mxu0 %v153
    %175 = vmatprep.subr.mxu0 0.0
    %176 = vmatpush1.msra.mxu0 %v154
    %177 = vmatprep.subr.mxu0 0.0
    %178 = vmatpush1.msra.mxu0 %v155
    %179 = vmatprep.subr.mxu0 0.0
    %180 = vmatpush1.msra.mxu0 %v156
    %181 = vmatprep.subr.mxu0 0.0
    %182 = vmatpush1.msra.mxu0 %v157
    %183 = vmatprep.subr.mxu0 0.0
    %184 = vmatpush1.msra.mxu0 %v158
    %185 = vmatprep.subr.mxu0 0.0
    %186 = vmatpush1.msra.mxu0 %v159
    %187 = vmatprep.subr.mxu0 0.0
    %188 = vmatpush1.msra.mxu0 %v160
    %189 = vmatprep.subr.mxu0 0.0
    %190 = vmatpush1.msra.mxu0 %v161
    %191 = vmatprep.subr.mxu0 0.0
    %192 = vmatpush1.msra.mxu0 %v162
    %193 = vmatprep.subr.mxu0 0.0
    %194 = vmatpush1.msra.mxu0 %v163
    %195 = vmatprep.subr.mxu0 0.0
    %196 = vmatpush1.msra.mxu0 %v164
    %197 = vmatprep.subr.mxu0 0.0
    %198 = vmatpush1.msra.mxu0 0.0
    %199 = vmatprep.subr.mxu0 0.0
    %200 = vmatpush1.msra.mxu0 0.0
    %201 = vmatprep.subr.mxu0 0.0
    %202 = vmatpush1.msra.mxu0 0.0
    %203 = vmatprep.subr.mxu0 0.0
    %204 = vmatpush1.msra.mxu0 0.0
    %205 = vmatprep.subr.mxu0 0.0
    %206 = vmatpush1.msra.mxu0 0.0
    %207 = vmatprep.subr.mxu0 0.0
    %208 = vmatpush1.msra.mxu0 0.0
    %209 = vmatprep.subr.mxu0 0.0
    %210 = vmatpush1.msra.mxu0 0.0
    %211 = vmatprep.subr.mxu0 0.0
    %212 = vmatpush1.msra.mxu0 0.0
    %213 = vmatprep.subr.mxu0 0.0
    %214 = vmatpush1.msra.mxu0 0.0
    %215 = vmatprep.subr.mxu0 0.0
    %216 = vmatpush1.msra.mxu0 0.0
    %217 = vmatprep.subr.mxu0 0.0
    %218 = vmatpush1.msra.mxu0 0.0
    %219 = vmatprep.subr.mxu0 0.0
    %220 = vmatpush1.msra.mxu0 0.0
    %221 = vmatprep.subr.mxu0 0.0
    %222 = vmatpush1.msra.mxu0 0.0
    %223 = vmatprep.subr.mxu0 0.0
    %224 = vmatpush1.msra.mxu0 0.0
    %225 = vmatprep.subr.mxu0 0.0
    %226 = vmatpush1.msra.mxu0 0.0
    %227 = vmatprep.subr.mxu0 0.0
    %228 = vmatpush1.msra.mxu0 0.0
    %229 = vmatprep.mubr.f32.mxu0 0.0
    %230 = vmatmul.mubr.f32.gmra.mrb[0].mxu0 %v141
    %v231 = vpop.f32.mrb[0].mxu0
    %v232 = vadd.f32 0.0, %v231
    %v233 = vpop.f32.mrb[0].mxu0
    %234 = vmatprep.mubr.f32.mxu0 0.0
    %235 = vmatmul.mubr.f32.gmra.mrb[0].mxu0 %v142
    %v236 = vpop.f32.mrb[0].mxu0
    %v237 = vadd.f32 0.0, %v236
    %v238 = vpop.f32.mrb[0].mxu0
    %239 = vmatprep.mubr.f32.mxu0 0.0
    %240 = vmatmul.mubr.f32.gmra.mrb[0].mxu0 %v143
    %v241 = vpop.f32.mrb[0].mxu0
    %v242 = vadd.f32 0.0, %v241
    %v243 = vpop.f32.mrb[0].mxu0
    %244 = vmatprep.mubr.f32.mxu0 0.0
    %245 = vmatmul.mubr.f32.gmra.mrb[0].mxu0 %v144
    %v246 = vpop.f32.mrb[0].mxu0
    %v247 = vadd.f32 0.0, %v246
    %v248 = vpop.f32.mrb[0].mxu0
    %249 = vmatprep.mubr.f32.mxu0 0.0
    %250 = vmatmul.mubr.f32.gmra.mrb[0].mxu0 %v145
    %v251 = vpop.f32.mrb[0].mxu0
    %v252 = vadd.f32 0.0, %v251
    %v253 = vpop.f32.mrb[0].mxu0
    %254 = vmatprep.mubr.f32.mxu0 0.0
    %255 = vmatmul.mubr.f32.gmra.mrb[0].mxu0 %v146
    %v256 = vpop.f32.mrb[0].mxu0
    %v257 = vadd.f32 0.0, %v256
    %v258 = vpop.f32.mrb[0].mxu0
    %259 = vmatprep.mubr.f32.mxu0 0.0
    %260 = vmatmul.mubr.f32.gmra.mrb[0].mxu0 %v147
    %v261 = vpop.f32.mrb[0].mxu0
    %v262 = vadd.f32 0.0, %v261
    %v263 = vpop.f32.mrb[0].mxu0
    %264 = vmatprep.mubr.f32.mxu0 0.0
    %265 = vmatmul.mubr.f32.gmra.mrb[0].mxu0 %v148
    %v266 = vpop.f32.mrb[0].mxu0
    %v267 = vadd.f32 0.0, %v266
    %v268 = vpop.f32.mrb[0].mxu0
    %269 = vdwg.mxu0
    %v270 = vld [vmem:[#allocation2] sm:$0xff]
    %v271 = vld [vmem:[#allocation2 + $0x8] sm:$0xff]
    %v272 = vld [vmem:[#allocation2 + $0x10] sm:$0xff]
    %v273 = vld [vmem:[#allocation2 + $0x18] sm:$0xff]
    %v274 = vld [vmem:[#allocation6] sm:$0xff]
    %v275 = vld [vmem:[#allocation6 + $0x8] sm:$0xff]
    %v276 = vld [vmem:[#allocation6 + $0x10] sm:$0xff]
    %v277 = vld [vmem:[#allocation6 + $0x18] sm:$0xff]
    %v278 = vld [vmem:[#allocation7] sm:$0x1]
    %v279 = vld [vmem:[%s3] sm:$0xff]
    %v280 = vld [vmem:[%s3 + $0x8] sm:$0xff]
    %v281 = vld [vmem:[%s3 + $0x10] sm:$0xff]
    %v282 = vld [vmem:[%s3 + $0x18] sm:$0xff]
    %v283 = vld [vmem:[#allocation4] sm:$0xff]
    %v284 = vld [vmem:[#allocation4 + $0x8] sm:$0xff]
    %v285 = vld [vmem:[#allocation4 + $0x10] sm:$0xff]
    %v286 = vld [vmem:[#allocation4 + $0x18] sm:$0xff]
    %v287 = vld [vmem:[%s5] sm:$0x1]
    %v288 = vld [vmem:[%s8] sm:$0xff]
    %s289 = scalar_lea.vmem %s8, 8
    %v290 = vld [vmem:[%s289] sm:$0xff]
    %v291 = vld [vmem:[%s9] sm:$0xff]
    %s292 = scalar_lea.vmem %s9, 8
    %v293 = vld [vmem:[%s292] sm:$0xff]
    %vm294 = vcmask 261120
    %v296 = vsel %vm294, %v288, 0
    %298 = vmatprep.subr.mxu0 0.0
    %299 = vmatpush1.msra.mxu0 %v270
    %300 = vmatprep.subr.mxu0 0.0
    %301 = vmatpush1.msra.mxu0 %v271
    %302 = vmatprep.subr.mxu0 0.0
    %303 = vmatpush1.msra.mxu0 %v272
    %304 = vmatprep.subr.mxu0 0.0
    %305 = vmatpush1.msra.mxu0 %v273
    %306 = vmatprep.subr.mxu0 0.0
    %307 = vmatpush1.msra.mxu0 0.0
    %308 = vmatprep.subr.mxu0 0.0
    %309 = vmatpush1.msra.mxu0 0.0
    %310 = vmatprep.subr.mxu0 0.0
    %311 = vmatpush1.msra.mxu0 0.0
    %312 = vmatprep.subr.mxu0 0.0
    %313 = vmatpush1.msra.mxu0 0.0
    %314 = vmatprep.subr.mxu0 0.0
    %315 = vmatpush1.msra.mxu0 0.0
    %316 = vmatprep.subr.mxu0 0.0
    %317 = vmatpush1.msra.mxu0 0.0
    %318 = vmatprep.subr.mxu0 0.0
    %319 = vmatpush1.msra.mxu0 0.0
    %320 = vmatprep.subr.mxu0 0.0
    %321 = vmatpush1.msra.mxu0 0.0
    %322 = vmatprep.subr.mxu0 0.0
    %323 = vmatpush1.msra.mxu0 0.0
    %324 = vmatprep.subr.mxu0 0.0
    %325 = vmatpush1.msra.mxu0 0.0
    %326 = vmatprep.subr.mxu0 0.0
    %327 = vmatpush1.msra.mxu0 0.0
    %328 = vmatprep.subr.mxu0 0.0
    %329 = vmatpush1.msra.mxu0 0.0
    %330 = vmatprep.subr.mxu0 0.0
    %331 = vmatpush1.msra.mxu0 0.0
    %332 = vmatprep.subr.mxu0 0.0
    %333 = vmatpush1.msra.mxu0 0.0
    %334 = vmatprep.subr.mxu0 0.0
    %335 = vmatpush1.msra.mxu0 0.0
    %336 = vmatprep.subr.mxu0 0.0
    %337 = vmatpush1.msra.mxu0 0.0
    %338 = vmatprep.subr.mxu0 0.0
    %339 = vmatpush1.msra.mxu0 0.0
    %340 = vmatprep.subr.mxu0 0.0
    %341 = vmatpush1.msra.mxu0 0.0
    %342 = vmatprep.subr.mxu0 0.0
    %343 = vmatpush1.msra.mxu0 0.0
    %344 = vmatprep.subr.mxu0 0.0
    %345 = vmatpush1.msra.mxu0 0.0
    %346 = vmatprep.subr.mxu0 0.0
    %347 = vmatpush1.msra.mxu0 0.0
    %348 = vmatprep.subr.mxu0 0.0
    %349 = vmatpush1.msra.mxu0 0.0
    %350 = vmatprep.subr.mxu0 0.0
    %351 = vmatpush1.msra.mxu0 0.0
    %352 = vmatprep.subr.mxu0 0.0
    %353 = vmatpush1.msra.mxu0 0.0
    %354 = vmatprep.subr.mxu0 0.0
    %355 = vmatpush1.msra.mxu0 0.0
    %356 = vmatprep.subr.mxu0 0.0
    %357 = vmatpush1.msra.mxu0 0.0
    %358 = vmatprep.subr.mxu0 0.0
    %359 = vmatpush1.msra.mxu0 0.0
    %360 = vmatprep.subr.mxu0 0.0
    %361 = vmatpush1.msra.mxu0 0.0
    %362 = vmatprep.mubr.f32.mxu0 0.0
    %363 = vmatmul.mubr.f32.gmra.mrb[0].mxu0 %v296
    %v364 = vpop.f32.mrb[0].mxu0
    %v365 = vadd.f32 0.0, %v364
    %v366 = vpop.f32.mrb[0].mxu0
    %367 = vdwg.mxu0
    %v368 = vadd.f32 %v232, %v365
    %v369 = vmul.f32 %v368, 0.5
    %v370 = vtanh.pop %v369
    %v371 = vmul.f32 %v370, 0.5
    %v372 = vadd.f32 %v371, 0.5
    %v373 = vtanh.pop %v368
    %375 = vrot.lane.b32.xlu0 %v291, 32
    %v376 = vpop.permute.xlu0 %375
    %v378 = vmul.f32 %v372, %v376
    %380 = vrot.lane.b32.xlu0 %v373, 64
    %v381 = vpop.permute.xlu0 %380
    %v383 = vmul.f32 %v372, %v381
    %385 = vrot.lane.b32.xlu0 %v383, 32
    %v386 = vpop.permute.xlu0 %385
    %v388 = vadd.f32 %v378, %v386
    %v389 = vtanh.pop %v388
    %391 = vrot.lane.b32.xlu0 %v389, 64
    %v392 = vpop.permute.xlu0 %391
    %v394 = vmul.f32 %v372, %v392
    %396 = vrot.lane.b32.xlu0 %v394, 32
    %v397 = vpop.permute.xlu0 %396
    %v398 = vsel %vm294, %v397, 0
    %400 = vmatprep.subr.mxu0 0.0
    %401 = vmatpush1.msra.mxu0 %v270
    %402 = vmatprep.subr.mxu0 0.0
    %403 = vmatpush1.msra.mxu0 %v271
    %404 = vmatprep.subr.mxu0 0.0
    %405 = vmatpush1.msra.mxu0 %v272
    %406 = vmatprep.subr.mxu0 0.0
    %407 = vmatpush1.msra.mxu0 %v273
    %408 = vmatprep.subr.mxu0 0.0
    %409 = vmatpush1.msra.mxu0 0.0
    %410 = vmatprep.subr.mxu0 0.0
    %411 = vmatpush1.msra.mxu0 0.0
    %412 = vmatprep.subr.mxu0 0.0
    %413 = vmatpush1.msra.mxu0 0.0
    %414 = vmatprep.subr.mxu0 0.0
    %415 = vmatpush1.msra.mxu0 0.0
    %416 = vmatprep.subr.mxu0 0.0
    %417 = vmatpush1.msra.mxu0 0.0
    %418 = vmatprep.subr.mxu0 0.0
    %419 = vmatpush1.msra.mxu0 0.0
    %420 = vmatprep.subr.mxu0 0.0
    %421 = vmatpush1.msra.mxu0 0.0
    %422 = vmatprep.subr.mxu0 0.0
    %423 = vmatpush1.msra.mxu0 0.0
    %424 = vmatprep.subr.mxu0 0.0
    %425 = vmatpush1.msra.mxu0 0.0
    %426 = vmatprep.subr.mxu0 0.0
    %427 = vmatpush1.msra.mxu0 0.0
    %428 = vmatprep.subr.mxu0 0.0
    %429 = vmatpush1.msra.mxu0 0.0
    %430 = vmatprep.subr.mxu0 0.0
    %431 = vmatpush1.msra.mxu0 0.0
    %432 = vmatprep.subr.mxu0 0.0
    %433 = vmatpush1.msra.mxu0 0.0
    %434 = vmatprep.subr.mxu0 0.0
    %435 = vmatpush1.msra.mxu0 0.0
    %436 = vmatprep.subr.mxu0 0.0
    %437 = vmatpush1.msra.mxu0 0.0
    %438 = vmatprep.subr.mxu0 0.0
    %439 = vmatpush1.msra.mxu0 0.0
    %440 = vmatprep.subr.mxu0 0.0
    %441 = vmatpush1.msra.mxu0 0.0
    %442 = vmatprep.subr.mxu0 0.0
    %443 = vmatpush1.msra.mxu0 0.0
    %444 = vmatprep.subr.mxu0 0.0
    %445 = vmatpush1.msra.mxu0 0.0
    %446 = vmatprep.subr.mxu0 0.0
    %447 = vmatpush1.msra.mxu0 0.0
    %448 = vmatprep.subr.mxu0 0.0
    %449 = vmatpush1.msra.mxu0 0.0
    %450 = vmatprep.subr.mxu0 0.0
    %451 = vmatpush1.msra.mxu0 0.0
    %452 = vmatprep.subr.mxu0 0.0
    %453 = vmatpush1.msra.mxu0 0.0
    %454 = vmatprep.subr.mxu0 0.0
    %455 = vmatpush1.msra.mxu0 0.0
    %456 = vmatprep.subr.mxu0 0.0
    %457 = vmatpush1.msra.mxu0 0.0
    %458 = vmatprep.subr.mxu0 0.0
    %459 = vmatpush1.msra.mxu0 0.0
    %460 = vmatprep.subr.mxu0 0.0
    %461 = vmatpush1.msra.mxu0 0.0
    %462 = vmatprep.subr.mxu0 0.0
    %463 = vmatpush1.msra.mxu0 0.0
    %464 = vmatprep.mubr.f32.mxu0 0.0
    %465 = vmatmul.mubr.f32.gmra.mrb[0].mxu0 %v398
    %v466 = vpop.f32.mrb[0].mxu0
    %v467 = vadd.f32 0.0, %v466
    %v468 = vpop.f32.mrb[0].mxu0
    %469 = vdwg.mxu0
    %v470 = vadd.f32 %v237, %v467
    %v471 = vmul.f32 %v470, 0.5
    %v472 = vtanh.pop %v471
    %v473 = vmul.f32 %v472, 0.5
    %v474 = vadd.f32 %v473, 0.5
    %v475 = vtanh.pop %v470
    %v476 = vmul.f32 %v474, %v388
    %478 = vrot.lane.b32.xlu0 %v475, 64
    %v479 = vpop.permute.xlu0 %478
    %v481 = vmul.f32 %v474, %v479
    %483 = vrot.lane.b32.xlu0 %v481, 32
    %v484 = vpop.permute.xlu0 %483
    %v486 = vadd.f32 %v476, %v484
    %v487 = vtanh.pop %v486
    %489 = vrot.lane.b32.xlu0 %v487, 64
    %v490 = vpop.permute.xlu0 %489
    %v492 = vmul.f32 %v474, %v490
    %v494 = vsel %vm294, %v290, 0
    %496 = vmatprep.subr.mxu0 0.0
    %497 = vmatpush1.msra.mxu0 %v283
    %498 = vmatprep.subr.mxu0 0.0
    %499 = vmatpush1.msra.mxu0 %v284
    %500 = vmatprep.subr.mxu0 0.0
    %501 = vmatpush1.msra.mxu0 %v285
    %502 = vmatprep.subr.mxu0 0.0
    %503 = vmatpush1.msra.mxu0 %v286
    %504 = vmatprep.subr.mxu0 0.0
    %505 = vmatpush1.msra.mxu0 0.0
    %506 = vmatprep.subr.mxu0 0.0
    %507 = vmatpush1.msra.mxu0 0.0
    %508 = vmatprep.subr.mxu0 0.0
    %509 = vmatpush1.msra.mxu0 0.0
    %510 = vmatprep.subr.mxu0 0.0
    %511 = vmatpush1.msra.mxu0 0.0
    %512 = vmatprep.subr.mxu0 0.0
    %513 = vmatpush1.msra.mxu0 0.0
    %514 = vmatprep.subr.mxu0 0.0
    %515 = vmatpush1.msra.mxu0 0.0
    %516 = vmatprep.subr.mxu0 0.0
    %517 = vmatpush1.msra.mxu0 0.0
    %518 = vmatprep.subr.mxu0 0.0
    %519 = vmatpush1.msra.mxu0 0.0
    %520 = vmatprep.subr.mxu0 0.0
    %521 = vmatpush1.msra.mxu0 0.0
    %522 = vmatprep.subr.mxu0 0.0
    %523 = vmatpush1.msra.mxu0 0.0
    %524 = vmatprep.subr.mxu0 0.0
    %525 = vmatpush1.msra.mxu0 0.0
    %526 = vmatprep.subr.mxu0 0.0
    %527 = vmatpush1.msra.mxu0 0.0
    %528 = vmatprep.subr.mxu0 0.0
    %529 = vmatpush1.msra.mxu0 0.0
    %530 = vmatprep.subr.mxu0 0.0
    %531 = vmatpush1.msra.mxu0 0.0
    %532 = vmatprep.subr.mxu0 0.0
    %533 = vmatpush1.msra.mxu0 0.0
    %534 = vmatprep.subr.mxu0 0.0
    %535 = vmatpush1.msra.mxu0 0.0
    %536 = vmatprep.subr.mxu0 0.0
    %537 = vmatpush1.msra.mxu0 0.0
    %538 = vmatprep.subr.mxu0 0.0
    %539 = vmatpush1.msra.mxu0 0.0
    %540 = vmatprep.subr.mxu0 0.0
    %541 = vmatpush1.msra.mxu0 0.0
    %542 = vmatprep.subr.mxu0 0.0
    %543 = vmatpush1.msra.mxu0 0.0
    %544 = vmatprep.subr.mxu0 0.0
    %545 = vmatpush1.msra.mxu0 0.0
    %546 = vmatprep.subr.mxu0 0.0
    %547 = vmatpush1.msra.mxu0 0.0
    %548 = vmatprep.subr.mxu0 0.0
    %549 = vmatpush1.msra.mxu0 0.0
    %550 = vmatprep.subr.mxu0 0.0
    %551 = vmatpush1.msra.mxu0 0.0
    %552 = vmatprep.subr.mxu0 0.0
    %553 = vmatpush1.msra.mxu0 0.0
    %554 = vmatprep.subr.mxu0 0.0
    %555 = vmatpush1.msra.mxu0 0.0
    %556 = vmatprep.subr.mxu0 0.0
    %557 = vmatpush1.msra.mxu0 0.0
    %558 = vmatprep.subr.mxu0 0.0
    %559 = vmatpush1.msra.mxu0 0.0
    %560 = vmatprep.mubr.f32.mxu0 0.0
    %561 = vmatmul.mubr.f32.gmra.mrb[0].mxu0 %v494
    %v562 = vpop.f32.mrb[0].mxu0
    %v563 = vadd.f32 0.0, %v562
    %v564 = vpop.f32.mrb[0].mxu0
    %565 = vdwg.mxu0
    %566 = vmatprep.subr.mxu0 0.0
    %567 = vmatpush1.msra.mxu0 %v279
    %568 = vmatprep.subr.mxu0 0.0
    %569 = vmatpush1.msra.mxu0 %v280
    %570 = vmatprep.subr.mxu0 0.0
    %571 = vmatpush1.msra.mxu0 %v281
    %572 = vmatprep.subr.mxu0 0.0
    %573 = vmatpush1.msra.mxu0 %v282
    %574 = vmatprep.subr.mxu0 0.0
    %575 = vmatpush1.msra.mxu0 0.0
    %576 = vmatprep.subr.mxu0 0.0
    %577 = vmatpush1.msra.mxu0 0.0
    %578 = vmatprep.subr.mxu0 0.0
    %579 = vmatpush1.msra.mxu0 0.0
    %580 = vmatprep.subr.mxu0 0.0
    %581 = vmatpush1.msra.mxu0 0.0
    %582 = vmatprep.subr.mxu0 0.0
    %583 = vmatpush1.msra.mxu0 0.0
    %584 = vmatprep.subr.mxu0 0.0
    %585 = vmatpush1.msra.mxu0 0.0
    %586 = vmatprep.subr.mxu0 0.0
    %587 = vmatpush1.msra.mxu0 0.0
    %588 = vmatprep.subr.mxu0 0.0
    %589 = vmatpush1.msra.mxu0 0.0
    %590 = vmatprep.subr.mxu0 0.0
    %591 = vmatpush1.msra.mxu0 0.0
    %592 = vmatprep.subr.mxu0 0.0
    %593 = vmatpush1.msra.mxu0 0.0
    %594 = vmatprep.subr.mxu0 0.0
    %595 = vmatpush1.msra.mxu0 0.0
    %596 = vmatprep.subr.mxu0 0.0
    %597 = vmatpush1.msra.mxu0 0.0
    %598 = vmatprep.subr.mxu0 0.0
    %599 = vmatpush1.msra.mxu0 0.0
    %600 = vmatprep.subr.mxu0 0.0
    %601 = vmatpush1.msra.mxu0 0.0
    %602 = vmatprep.subr.mxu0 0.0
    %603 = vmatpush1.msra.mxu0 0.0
    %604 = vmatprep.subr.mxu0 0.0
    %605 = vmatpush1.msra.mxu0 0.0
    %606 = vmatprep.subr.mxu0 0.0
    %607 = vmatpush1.msra.mxu0 0.0
    %608 = vmatprep.subr.mxu0 0.0
    %609 = vmatpush1.msra.mxu0 0.0
    %610 = vmatprep.subr.mxu0 0.0
    %611 = vmatpush1.msra.mxu0 0.0
    %612 = vmatprep.subr.mxu0 0.0
    %613 = vmatpush1.msra.mxu0 0.0
    %614 = vmatprep.subr.mxu0 0.0
    %615 = vmatpush1.msra.mxu0 0.0
    %616 = vmatprep.subr.mxu0 0.0
    %617 = vmatpush1.msra.mxu0 0.0
    %618 = vmatprep.subr.mxu0 0.0
    %619 = vmatpush1.msra.mxu0 0.0
    %620 = vmatprep.subr.mxu0 0.0
    %621 = vmatpush1.msra.mxu0 0.0
    %622 = vmatprep.subr.mxu0 0.0
    %623 = vmatpush1.msra.mxu0 0.0
    %624 = vmatprep.subr.mxu0 0.0
    %625 = vmatpush1.msra.mxu0 0.0
    %626 = vmatprep.subr.mxu0 0.0
    %627 = vmatpush1.msra.mxu0 0.0
    %628 = vmatprep.subr.mxu0 0.0
    %629 = vmatpush1.msra.mxu0 0.0
    %630 = vmatprep.mubr.f32.mxu0 0.0
    %631 = vmatmul.mubr.f32.gmra.mrb[0].mxu0 %v398
    %v632 = vpop.f32.mrb[0].mxu0
    %v633 = vadd.f32 %v563, %v632
    %v634 = vpop.f32.mrb[0].mxu0
    %635 = vdwg.mxu0
    %v637 = vlaneseq
    %v638 = vshrl.u32 %v637, 7
    %v639 = vsub.s32 0, %v638
    %v640 = vrot.slane %v287, %v639
    %v642 = vadd.f32 %v633, %v640
    %v643 = vmul.f32 %v642, 0.5
    %v644 = vtanh.pop %v643
    %v645 = vmul.f32 %v644, 0.5
    %v646 = vadd.f32 %v645, 0.5
    %v647 = vtanh.pop %v642
    %649 = vrot.lane.b32.xlu0 %v293, 32
    %v650 = vpop.permute.xlu0 %649
    %v652 = vmul.f32 %v646, %v650
    %654 = vrot.lane.b32.xlu0 %v647, 64
    %v655 = vpop.permute.xlu0 %654
    %v657 = vmul.f32 %v646, %v655
    %659 = vrot.lane.b32.xlu0 %v657, 32
    %v660 = vpop.permute.xlu0 %659
    %v662 = vadd.f32 %v652, %v660
    %v663 = vtanh.pop %v662
    %665 = vrot.lane.b32.xlu0 %v663, 64
    %v666 = vpop.permute.xlu0 %665
    %v668 = vmul.f32 %v646, %v666
    %v670 = vlaneseq
    %v671 = vshrl.u32 %v670, 7
    %v672 = vsub.s32 0, %v671
    %v673 = vrot.slane %v278, %v672
    %676 = vrot.lane.b32.xlu0 %v668, 32
    %v677 = vpop.permute.xlu0 %676
    %v678 = vsel %vm294, %v677, 0
    %680 = vmatprep.subr.mxu0 0.0
    %681 = vmatpush1.msra.mxu0 %v274
    %682 = vmatprep.subr.mxu0 0.0
    %683 = vmatpush1.msra.mxu0 %v275
    %684 = vmatprep.subr.mxu0 0.0
    %685 = vmatpush1.msra.mxu0 %v276
    %686 = vmatprep.subr.mxu0 0.0
    %687 = vmatpush1.msra.mxu0 %v277
    %688 = vmatprep.subr.mxu0 0.0
    %689 = vmatpush1.msra.mxu0 0.0
    %690 = vmatprep.subr.mxu0 0.0
    %691 = vmatpush1.msra.mxu0 0.0
    %692 = vmatprep.subr.mxu0 0.0
    %693 = vmatpush1.msra.mxu0 0.0
    %694 = vmatprep.subr.mxu0 0.0
    %695 = vmatpush1.msra.mxu0 0.0
    %696 = vmatprep.subr.mxu0 0.0
    %697 = vmatpush1.msra.mxu0 0.0
    %698 = vmatprep.subr.mxu0 0.0
    %699 = vmatpush1.msra.mxu0 0.0
    %700 = vmatprep.subr.mxu0 0.0
    %701 = vmatpush1.msra.mxu0 0.0
    %702 = vmatprep.subr.mxu0 0.0
    %703 = vmatpush1.msra.mxu0 0.0
    %704 = vmatprep.subr.mxu0 0.0
    %705 = vmatpush1.msra.mxu0 0.0
    %706 = vmatprep.subr.mxu0 0.0
    %707 = vmatpush1.msra.mxu0 0.0
    %708 = vmatprep.subr.mxu0 0.0
    %709 = vmatpush1.msra.mxu0 0.0
    %710 = vmatprep.subr.mxu0 0.0
    %711 = vmatpush1.msra.mxu0 0.0
    %712 = vmatprep.subr.mxu0 0.0
    %713 = vmatpush1.msra.mxu0 0.0
    %714 = vmatprep.subr.mxu0 0.0
    %715 = vmatpush1.msra.mxu0 0.0
    %716 = vmatprep.subr.mxu0 0.0
    %717 = vmatpush1.msra.mxu0 0.0
    %718 = vmatprep.subr.mxu0 0.0
    %719 = vmatpush1.msra.mxu0 0.0
    %720 = vmatprep.subr.mxu0 0.0
    %721 = vmatpush1.msra.mxu0 0.0
    %722 = vmatprep.subr.mxu0 0.0
    %723 = vmatpush1.msra.mxu0 0.0
    %724 = vmatprep.subr.mxu0 0.0
    %725 = vmatpush1.msra.mxu0 0.0
    %726 = vmatprep.subr.mxu0 0.0
    %727 = vmatpush1.msra.mxu0 0.0
    %728 = vmatprep.subr.mxu0 0.0
    %729 = vmatpush1.msra.mxu0 0.0
    %730 = vmatprep.subr.mxu0 0.0
    %731 = vmatpush1.msra.mxu0 0.0
    %732 = vmatprep.subr.mxu0 0.0
    %733 = vmatpush1.msra.mxu0 0.0
    %734 = vmatprep.subr.mxu0 0.0
    %735 = vmatpush1.msra.mxu0 0.0
    %736 = vmatprep.subr.mxu0 0.0
    %737 = vmatpush1.msra.mxu0 0.0
    %738 = vmatprep.subr.mxu0 0.0
    %739 = vmatpush1.msra.mxu0 0.0
    %740 = vmatprep.subr.mxu0 0.0
    %741 = vmatpush1.msra.mxu0 0.0
    %742 = vmatprep.subr.mxu0 0.0
    %743 = vmatpush1.msra.mxu0 0.0
    %744 = vmatprep.mubr.f32.mxu0 0.0
    %745 = vmatmul.mubr.f32.gmra.mrb[0].mxu0 %v678
    %v746 = vpop.f32.mrb[0].mxu0
    %v747 = vadd.f32 %v673, %v746
    %v748 = vpop.f32.mrb[0].mxu0
    %749 = vdwg.mxu0
    %750 = vst [vmem:[%s10] sm:$0xff] %v747
    %752 = vrot.lane.b32.xlu0 %v492, 32
    %v753 = vpop.permute.xlu0 %752
    %v754 = vsel %vm294, %v753, 0
    %756 = vmatprep.subr.mxu0 0.0
    %757 = vmatpush1.msra.mxu0 %v270
    %758 = vmatprep.subr.mxu0 0.0
    %759 = vmatpush1.msra.mxu0 %v271
    %760 = vmatprep.subr.mxu0 0.0
    %761 = vmatpush1.msra.mxu0 %v272
    %762 = vmatprep.subr.mxu0 0.0
    %763 = vmatpush1.msra.mxu0 %v273
    %764 = vmatprep.subr.mxu0 0.0
    %765 = vmatpush1.msra.mxu0 0.0
    %766 = vmatprep.subr.mxu0 0.0
    %767 = vmatpush1.msra.mxu0 0.0
    %768 = vmatprep.subr.mxu0 0.0
    %769 = vmatpush1.msra.mxu0 0.0
    %770 = vmatprep.subr.mxu0 0.0
    %771 = vmatpush1.msra.mxu0 0.0
    %772 = vmatprep.subr.mxu0 0.0
    %773 = vmatpush1.msra.mxu0 0.0
    %774 = vmatprep.subr.mxu0 0.0
    %775 = vmatpush1.msra.mxu0 0.0
    %776 = vmatprep.subr.mxu0 0.0
    %777 = vmatpush1.msra.mxu0 0.0
    %778 = vmatprep.subr.mxu0 0.0
    %779 = vmatpush1.msra.mxu0 0.0
    %780 = vmatprep.subr.mxu0 0.0
    %781 = vmatpush1.msra.mxu0 0.0
    %782 = vmatprep.subr.mxu0 0.0
    %783 = vmatpush1.msra.mxu0 0.0
    %784 = vmatprep.subr.mxu0 0.0
    %785 = vmatpush1.msra.mxu0 0.0
    %786 = vmatprep.subr.mxu0 0.0
    %787 = vmatpush1.msra.mxu0 0.0
    %788 = vmatprep.subr.mxu0 0.0
    %789 = vmatpush1.msra.mxu0 0.0
    %790 = vmatprep.subr.mxu0 0.0
    %791 = vmatpush1.msra.mxu0 0.0
    %792 = vmatprep.subr.mxu0 0.0
    %793 = vmatpush1.msra.mxu0 0.0
    %794 = vmatprep.subr.mxu0 0.0
    %795 = vmatpush1.msra.mxu0 0.0
    %796 = vmatprep.subr.mxu0 0.0
    %797 = vmatpush1.msra.mxu0 0.0
    %798 = vmatprep.subr.mxu0 0.0
    %799 = vmatpush1.msra.mxu0 0.0
    %800 = vmatprep.subr.mxu0 0.0
    %801 = vmatpush1.msra.mxu0 0.0
    %802 = vmatprep.subr.mxu0 0.0
    %803 = vmatpush1.msra.mxu0 0.0
    %804 = vmatprep.subr.mxu0 0.0
    %805 = vmatpush1.msra.mxu0 0.0
    %806 = vmatprep.subr.mxu0 0.0
    %807 = vmatpush1.msra.mxu0 0.0
    %808 = vmatprep.subr.mxu0 0.0
    %809 = vmatpush1.msra.mxu0 0.0
    %810 = vmatprep.subr.mxu0 0.0
    %811 = vmatpush1.msra.mxu0 0.0
    %812 = vmatprep.subr.mxu0 0.0
    %813 = vmatpush1.msra.mxu0 0.0
    %814 = vmatprep.subr.mxu0 0.0
    %815 = vmatpush1.msra.mxu0 0.0
    %816 = vmatprep.subr.mxu0 0.0
    %817 = vmatpush1.msra.mxu0 0.0
    %818 = vmatprep.subr.mxu0 0.0
    %819 = vmatpush1.msra.mxu0 0.0
    %820 = vmatprep.mubr.f32.mxu0 0.0
    %821 = vmatmul.mubr.f32.gmra.mrb[0].mxu0 %v754
    %v822 = vpop.f32.mrb[0].mxu0
    %v823 = vadd.f32 0.0, %v822
    %v824 = vpop.f32.mrb[0].mxu0
    %825 = vdwg.mxu0
    %v826 = vadd.f32 %v242, %v823
    %v827 = vmul.f32 %v826, 0.5
    %v828 = vtanh.pop %v827
    %v829 = vmul.f32 %v828, 0.5
    %v830 = vadd.f32 %v829, 0.5
    %v831 = vtanh.pop %v826
    %v832 = vmul.f32 %v830, %v486
    %834 = vrot.lane.b32.xlu0 %v831, 64
    %v835 = vpop.permute.xlu0 %834
    %v837 = vmul.f32 %v830, %v835
    %839 = vrot.lane.b32.xlu0 %v837, 32
    %v840 = vpop.permute.xlu0 %839
    %v842 = vadd.f32 %v832, %v840
    %v843 = vtanh.pop %v842
    %845 = vrot.lane.b32.xlu0 %v843, 64
    %v846 = vpop.permute.xlu0 %845
    %v848 = vmul.f32 %v830, %v846
    %849 = vmatprep.subr.mxu0 0.0
    %850 = vmatpush1.msra.mxu0 %v283
    %851 = vmatprep.subr.mxu0 0.0
    %852 = vmatpush1.msra.mxu0 %v284
    %853 = vmatprep.subr.mxu0 0.0
    %854 = vmatpush1.msra.mxu0 %v285
    %855 = vmatprep.subr.mxu0 0.0
    %856 = vmatpush1.msra.mxu0 %v286
    %857 = vmatprep.subr.mxu0 0.0
    %858 = vmatpush1.msra.mxu0 0.0
    %859 = vmatprep.subr.mxu0 0.0
    %860 = vmatpush1.msra.mxu0 0.0
    %861 = vmatprep.subr.mxu0 0.0
    %862 = vmatpush1.msra.mxu0 0.0
    %863 = vmatprep.subr.mxu0 0.0
    %864 = vmatpush1.msra.mxu0 0.0
    %865 = vmatprep.subr.mxu0 0.0
    %866 = vmatpush1.msra.mxu0 0.0
    %867 = vmatprep.subr.mxu0 0.0
    %868 = vmatpush1.msra.mxu0 0.0
    %869 = vmatprep.subr.mxu0 0.0
    %870 = vmatpush1.msra.mxu0 0.0
    %871 = vmatprep.subr.mxu0 0.0
    %872 = vmatpush1.msra.mxu0 0.0
    %873 = vmatprep.subr.mxu0 0.0
    %874 = vmatpush1.msra.mxu0 0.0
    %875 = vmatprep.subr.mxu0 0.0
    %876 = vmatpush1.msra.mxu0 0.0
    %877 = vmatprep.subr.mxu0 0.0
    %878 = vmatpush1.msra.mxu0 0.0
    %879 = vmatprep.subr.mxu0 0.0
    %880 = vmatpush1.msra.mxu0 0.0
    %881 = vmatprep.subr.mxu0 0.0
    %882 = vmatpush1.msra.mxu0 0.0
    %883 = vmatprep.subr.mxu0 0.0
    %884 = vmatpush1.msra.mxu0 0.0
    %885 = vmatprep.subr.mxu0 0.0
    %886 = vmatpush1.msra.mxu0 0.0
    %887 = vmatprep.subr.mxu0 0.0
    %888 = vmatpush1.msra.mxu0 0.0
    %889 = vmatprep.subr.mxu0 0.0
    %890 = vmatpush1.msra.mxu0 0.0
    %891 = vmatprep.subr.mxu0 0.0
    %892 = vmatpush1.msra.mxu0 0.0
    %893 = vmatprep.subr.mxu0 0.0
    %894 = vmatpush1.msra.mxu0 0.0
    %895 = vmatprep.subr.mxu0 0.0
    %896 = vmatpush1.msra.mxu0 0.0
    %897 = vmatprep.subr.mxu0 0.0
    %898 = vmatpush1.msra.mxu0 0.0
    %899 = vmatprep.subr.mxu0 0.0
    %900 = vmatpush1.msra.mxu0 0.0
    %901 = vmatprep.subr.mxu0 0.0
    %902 = vmatpush1.msra.mxu0 0.0
    %903 = vmatprep.subr.mxu0 0.0
    %904 = vmatpush1.msra.mxu0 0.0
    %905 = vmatprep.subr.mxu0 0.0
    %906 = vmatpush1.msra.mxu0 0.0
    %907 = vmatprep.subr.mxu0 0.0
    %908 = vmatpush1.msra.mxu0 0.0
    %909 = vmatprep.subr.mxu0 0.0
    %910 = vmatpush1.msra.mxu0 0.0
    %911 = vmatprep.subr.mxu0 0.0
    %912 = vmatpush1.msra.mxu0 0.0
    %913 = vmatprep.mubr.f32.mxu0 0.0
    %914 = vmatmul.mubr.f32.gmra.mrb[0].mxu0 %v678
    %v915 = vpop.f32.mrb[0].mxu0
    %v916 = vadd.f32 0.0, %v915
    %v917 = vpop.f32.mrb[0].mxu0
    %918 = vdwg.mxu0
    %919 = vmatprep.subr.mxu0 0.0
    %920 = vmatpush1.msra.mxu0 %v279
    %921 = vmatprep.subr.mxu0 0.0
    %922 = vmatpush1.msra.mxu0 %v280
    %923 = vmatprep.subr.mxu0 0.0
    %924 = vmatpush1.msra.mxu0 %v281
    %925 = vmatprep.subr.mxu0 0.0
    %926 = vmatpush1.msra.mxu0 %v282
    %927 = vmatprep.subr.mxu0 0.0
    %928 = vmatpush1.msra.mxu0 0.0
    %929 = vmatprep.subr.mxu0 0.0
    %930 = vmatpush1.msra.mxu0 0.0
    %931 = vmatprep.subr.mxu0 0.0
    %932 = vmatpush1.msra.mxu0 0.0
    %933 = vmatprep.subr.mxu0 0.0
    %934 = vmatpush1.msra.mxu0 0.0
    %935 = vmatprep.subr.mxu0 0.0
    %936 = vmatpush1.msra.mxu0 0.0
    %937 = vmatprep.subr.mxu0 0.0
    %938 = vmatpush1.msra.mxu0 0.0
    %939 = vmatprep.subr.mxu0 0.0
    %940 = vmatpush1.msra.mxu0 0.0
    %941 = vmatprep.subr.mxu0 0.0
    %942 = vmatpush1.msra.mxu0 0.0
    %943 = vmatprep.subr.mxu0 0.0
    %944 = vmatpush1.msra.mxu0 0.0
    %945 = vmatprep.subr.mxu0 0.0
    %946 = vmatpush1.msra.mxu0 0.0
    %947 = vmatprep.subr.mxu0 0.0
    %948 = vmatpush1.msra.mxu0 0.0
    %949 = vmatprep.subr.mxu0 0.0
    %950 = vmatpush1.msra.mxu0 0.0
    %951 = vmatprep.subr.mxu0 0.0
    %952 = vmatpush1.msra.mxu0 0.0
    %953 = vmatprep.subr.mxu0 0.0
    %954 = vmatpush1.msra.mxu0 0.0
    %955 = vmatprep.subr.mxu0 0.0
    %956 = vmatpush1.msra.mxu0 0.0
    %957 = vmatprep.subr.mxu0 0.0
    %958 = vmatpush1.msra.mxu0 0.0
    %959 = vmatprep.subr.mxu0 0.0
    %960 = vmatpush1.msra.mxu0 0.0
    %961 = vmatprep.subr.mxu0 0.0
    %962 = vmatpush1.msra.mxu0 0.0
    %963 = vmatprep.subr.mxu0 0.0
    %964 = vmatpush1.msra.mxu0 0.0
    %965 = vmatprep.subr.mxu0 0.0
    %966 = vmatpush1.msra.mxu0 0.0
    %967 = vmatprep.subr.mxu0 0.0
    %968 = vmatpush1.msra.mxu0 0.0
    %969 = vmatprep.subr.mxu0 0.0
    %970 = vmatpush1.msra.mxu0 0.0
    %971 = vmatprep.subr.mxu0 0.0
    %972 = vmatpush1.msra.mxu0 0.0
    %973 = vmatprep.subr.mxu0 0.0
    %974 = vmatpush1.msra.mxu0 0.0
    %975 = vmatprep.subr.mxu0 0.0
    %976 = vmatpush1.msra.mxu0 0.0
    %977 = vmatprep.subr.mxu0 0.0
    %978 = vmatpush1.msra.mxu0 0.0
    %979 = vmatprep.subr.mxu0 0.0
    %980 = vmatpush1.msra.mxu0 0.0
    %981 = vmatprep.subr.mxu0 0.0
    %982 = vmatpush1.msra.mxu0 0.0
    %983 = vmatprep.mubr.f32.mxu0 0.0
    %984 = vmatmul.mubr.f32.gmra.mrb[0].mxu0 %v754
    %v985 = vpop.f32.mrb[0].mxu0
    %v986 = vadd.f32 %v916, %v985
    %v987 = vpop.f32.mrb[0].mxu0
    %988 = vdwg.mxu0
    %v989 = vadd.f32 %v986, %v640
    %v990 = vmul.f32 %v989, 0.5
    %v991 = vtanh.pop %v990
    %v992 = vmul.f32 %v991, 0.5
    %v993 = vadd.f32 %v992, 0.5
    %v994 = vtanh.pop %v989
    %v995 = vmul.f32 %v993, %v662
    %997 = vrot.lane.b32.xlu0 %v994, 64
    %v998 = vpop.permute.xlu0 %997
    %v1000 = vmul.f32 %v993, %v998
    %1002 = vrot.lane.b32.xlu0 %v1000, 32
    %v1003 = vpop.permute.xlu0 %1002
    %v1005 = vadd.f32 %v995, %v1003
    %v1006 = vtanh.pop %v1005
    %1008 = vrot.lane.b32.xlu0 %v1006, 64
    %v1009 = vpop.permute.xlu0 %1008
    %v1011 = vmul.f32 %v993, %v1009
    %1013 = vrot.lane.b32.xlu0 %v1011, 32
    %v1014 = vpop.permute.xlu0 %1013
    %v1015 = vsel %vm294, %v1014, 0
    %1017 = vmatprep.subr.mxu0 0.0
    %1018 = vmatpush1.msra.mxu0 %v274
    %1019 = vmatprep.subr.mxu0 0.0
    %1020 = vmatpush1.msra.mxu0 %v275
    %1021 = vmatprep.subr.mxu0 0.0
    %1022 = vmatpush1.msra.mxu0 %v276
    %1023 = vmatprep.subr.mxu0 0.0
    %1024 = vmatpush1.msra.mxu0 %v277
    %1025 = vmatprep.subr.mxu0 0.0
    %1026 = vmatpush1.msra.mxu0 0.0
    %1027 = vmatprep.subr.mxu0 0.0
    %1028 = vmatpush1.msra.mxu0 0.0
    %1029 = vmatprep.subr.mxu0 0.0
    %1030 = vmatpush1.msra.mxu0 0.0
    %1031 = vmatprep.subr.mxu0 0.0
    %1032 = vmatpush1.msra.mxu0 0.0
    %1033 = vmatprep.subr.mxu0 0.0
    %1034 = vmatpush1.msra.mxu0 0.0
    %1035 = vmatprep.subr.mxu0 0.0
    %1036 = vmatpush1.msra.mxu0 0.0
    %1037 = vmatprep.subr.mxu0 0.0
    %1038 = vmatpush1.msra.mxu0 0.0
    %1039 = vmatprep.subr.mxu0 0.0
    %1040 = vmatpush1.msra.mxu0 0.0
    %1041 = vmatprep.subr.mxu0 0.0
    %1042 = vmatpush1.msra.mxu0 0.0
    %1043 = vmatprep.subr.mxu0 0.0
    %1044 = vmatpush1.msra.mxu0 0.0
    %1045 = vmatprep.subr.mxu0 0.0
    %1046 = vmatpush1.msra.mxu0 0.0
    %1047 = vmatprep.subr.mxu0 0.0
    %1048 = vmatpush1.msra.mxu0 0.0
    %1049 = vmatprep.subr.mxu0 0.0
    %1050 = vmatpush1.msra.mxu0 0.0
    %1051 = vmatprep.subr.mxu0 0.0
    %1052 = vmatpush1.msra.mxu0 0.0
    %1053 = vmatprep.subr.mxu0 0.0
    %1054 = vmatpush1.msra.mxu0 0.0
    %1055 = vmatprep.subr.mxu0 0.0
    %1056 = vmatpush1.msra.mxu0 0.0
    %1057 = vmatprep.subr.mxu0 0.0
    %1058 = vmatpush1.msra.mxu0 0.0
    %1059 = vmatprep.subr.mxu0 0.0
    %1060 = vmatpush1.msra.mxu0 0.0
    %1061 = vmatprep.subr.mxu0 0.0
    %1062 = vmatpush1.msra.mxu0 0.0
    %1063 = vmatprep.subr.mxu0 0.0
    %1064 = vmatpush1.msra.mxu0 0.0
    %1065 = vmatprep.subr.mxu0 0.0
    %1066 = vmatpush1.msra.mxu0 0.0
    %1067 = vmatprep.subr.mxu0 0.0
    %1068 = vmatpush1.msra.mxu0 0.0
    %1069 = vmatprep.subr.mxu0 0.0
    %1070 = vmatpush1.msra.mxu0 0.0
    %1071 = vmatprep.subr.mxu0 0.0
    %1072 = vmatpush1.msra.mxu0 0.0
    %1073 = vmatprep.subr.mxu0 0.0
    %1074 = vmatpush1.msra.mxu0 0.0
    %1075 = vmatprep.subr.mxu0 0.0
    %1076 = vmatpush1.msra.mxu0 0.0
    %1077 = vmatprep.subr.mxu0 0.0
    %1078 = vmatpush1.msra.mxu0 0.0
    %1079 = vmatprep.subr.mxu0 0.0
    %1080 = vmatpush1.msra.mxu0 0.0
    %1081 = vmatprep.mubr.f32.mxu0 0.0
    %1082 = vmatmul.mubr.f32.gmra.mrb[0].mxu0 %v1015
    %v1083 = vpop.f32.mrb[0].mxu0
    %v1084 = vadd.f32 %v673, %v1083
    %v1085 = vpop.f32.mrb[0].mxu0
    %1086 = vdwg.mxu0
    %1087 = vst [vmem:[%s10 + $0x8] sm:$0xff] %v1084
    %1089 = vrot.lane.b32.xlu0 %v848, 32
    %v1090 = vpop.permute.xlu0 %1089
    %v1091 = vsel %vm294, %v1090, 0
    %1093 = vmatprep.subr.mxu0 0.0
    %1094 = vmatpush1.msra.mxu0 %v270
    %1095 = vmatprep.subr.mxu0 0.0
    %1096 = vmatpush1.msra.mxu0 %v271
    %1097 = vmatprep.subr.mxu0 0.0
    %1098 = vmatpush1.msra.mxu0 %v272
    %1099 = vmatprep.subr.mxu0 0.0
    %1100 = vmatpush1.msra.mxu0 %v273
    %1101 = vmatprep.subr.mxu0 0.0
    %1102 = vmatpush1.msra.mxu0 0.0
    %1103 = vmatprep.subr.mxu0 0.0
    %1104 = vmatpush1.msra.mxu0 0.0
    %1105 = vmatprep.subr.mxu0 0.0
    %1106 = vmatpush1.msra.mxu0 0.0
    %1107 = vmatprep.subr.mxu0 0.0
    %1108 = vmatpush1.msra.mxu0 0.0
    %1109 = vmatprep.subr.mxu0 0.0
    %1110 = vmatpush1.msra.mxu0 0.0
    %1111 = vmatprep.subr.mxu0 0.0
    %1112 = vmatpush1.msra.mxu0 0.0
    %1113 = vmatprep.subr.mxu0 0.0
    %1114 = vmatpush1.msra.mxu0 0.0
    %1115 = vmatprep.subr.mxu0 0.0
    %1116 = vmatpush1.msra.mxu0 0.0
    %1117 = vmatprep.subr.mxu0 0.0
    %1118 = vmatpush1.msra.mxu0 0.0
    %1119 = vmatprep.subr.mxu0 0.0
    %1120 = vmatpush1.msra.mxu0 0.0
    %1121 = vmatprep.subr.mxu0 0.0
    %1122 = vmatpush1.msra.mxu0 0.0
    %1123 = vmatprep.subr.mxu0 0.0
    %1124 = vmatpush1.msra.mxu0 0.0
    %1125 = vmatprep.subr.mxu0 0.0
    %1126 = vmatpush1.msra.mxu0 0.0
    %1127 = vmatprep.subr.mxu0 0.0
    %1128 = vmatpush1.msra.mxu0 0.0
    %1129 = vmatprep.subr.mxu0 0.0
    %1130 = vmatpush1.msra.mxu0 0.0
    %1131 = vmatprep.subr.mxu0 0.0
    %1132 = vmatpush1.msra.mxu0 0.0
    %1133 = vmatprep.subr.mxu0 0.0
    %1134 = vmatpush1.msra.mxu0 0.0
    %1135 = vmatprep.subr.mxu0 0.0
    %1136 = vmatpush1.msra.mxu0 0.0
    %1137 = vmatprep.subr.mxu0 0.0
    %1138 = vmatpush1.msra.mxu0 0.0
    %1139 = vmatprep.subr.mxu0 0.0
    %1140 = vmatpush1.msra.mxu0 0.0
    %1141 = vmatprep.subr.mxu0 0.0
    %1142 = vmatpush1.msra.mxu0 0.0
    %1143 = vmatprep.subr.mxu0 0.0
    %1144 = vmatpush1.msra.mxu0 0.0
    %1145 = vmatprep.subr.mxu0 0.0
    %1146 = vmatpush1.msra.mxu0 0.0
    %1147 = vmatprep.subr.mxu0 0.0
    %1148 = vmatpush1.msra.mxu0 0.0
    %1149 = vmatprep.subr.mxu0 0.0
    %1150 = vmatpush1.msra.mxu0 0.0
    %1151 = vmatprep.subr.mxu0 0.0
    %1152 = vmatpush1.msra.mxu0 0.0
    %1153 = vmatprep.subr.mxu0 0.0
    %1154 = vmatpush1.msra.mxu0 0.0
    %1155 = vmatprep.subr.mxu0 0.0
    %1156 = vmatpush1.msra.mxu0 0.0
    %1157 = vmatprep.mubr.f32.mxu0 0.0
    %1158 = vmatmul.mubr.f32.gmra.mrb[0].mxu0 %v1091
    %v1159 = vpop.f32.mrb[0].mxu0
    %v1160 = vadd.f32 0.0, %v1159
    %v1161 = vpop.f32.mrb[0].mxu0
    %1162 = vdwg.mxu0
    %v1163 = vadd.f32 %v247, %v1160
    %v1164 = vmul.f32 %v1163, 0.5
    %v1165 = vtanh.pop %v1164
    %v1166 = vmul.f32 %v1165, 0.5
    %v1167 = vadd.f32 %v1166, 0.5
    %v1168 = vtanh.pop %v1163
    %v1169 = vmul.f32 %v1167, %v842
    %1171 = vrot.lane.b32.xlu0 %v1168, 64
    %v1172 = vpop.permute.xlu0 %1171
    %v1174 = vmul.f32 %v1167, %v1172
    %1176 = vrot.lane.b32.xlu0 %v1174, 32
    %v1177 = vpop.permute.xlu0 %1176
    %v1179 = vadd.f32 %v1169, %v1177
    %v1180 = vtanh.pop %v1179
    %1182 = vrot.lane.b32.xlu0 %v1180, 64
    %v1183 = vpop.permute.xlu0 %1182
    %v1185 = vmul.f32 %v1167, %v1183
    %1186 = vmatprep.subr.mxu0 0.0
    %1187 = vmatpush1.msra.mxu0 %v283
    %1188 = vmatprep.subr.mxu0 0.0
    %1189 = vmatpush1.msra.mxu0 %v284
    %1190 = vmatprep.subr.mxu0 0.0
    %1191 = vmatpush1.msra.mxu0 %v285
    %1192 = vmatprep.subr.mxu0 0.0
    %1193 = vmatpush1.msra.mxu0 %v286
    %1194 = vmatprep.subr.mxu0 0.0
    %1195 = vmatpush1.msra.mxu0 0.0
    %1196 = vmatprep.subr.mxu0 0.0
    %1197 = vmatpush1.msra.mxu0 0.0
    %1198 = vmatprep.subr.mxu0 0.0
    %1199 = vmatpush1.msra.mxu0 0.0
    %1200 = vmatprep.subr.mxu0 0.0
    %1201 = vmatpush1.msra.mxu0 0.0
    %1202 = vmatprep.subr.mxu0 0.0
    %1203 = vmatpush1.msra.mxu0 0.0
    %1204 = vmatprep.subr.mxu0 0.0
    %1205 = vmatpush1.msra.mxu0 0.0
    %1206 = vmatprep.subr.mxu0 0.0
    %1207 = vmatpush1.msra.mxu0 0.0
    %1208 = vmatprep.subr.mxu0 0.0
    %1209 = vmatpush1.msra.mxu0 0.0
    %1210 = vmatprep.subr.mxu0 0.0
    %1211 = vmatpush1.msra.mxu0 0.0
    %1212 = vmatprep.subr.mxu0 0.0
    %1213 = vmatpush1.msra.mxu0 0.0
    %1214 = vmatprep.subr.mxu0 0.0
    %1215 = vmatpush1.msra.mxu0 0.0
    %1216 = vmatprep.subr.mxu0 0.0
    %1217 = vmatpush1.msra.mxu0 0.0
    %1218 = vmatprep.subr.mxu0 0.0
    %1219 = vmatpush1.msra.mxu0 0.0
    %1220 = vmatprep.subr.mxu0 0.0
    %1221 = vmatpush1.msra.mxu0 0.0
    %1222 = vmatprep.subr.mxu0 0.0
    %1223 = vmatpush1.msra.mxu0 0.0
    %1224 = vmatprep.subr.mxu0 0.0
    %1225 = vmatpush1.msra.mxu0 0.0
    %1226 = vmatprep.subr.mxu0 0.0
    %1227 = vmatpush1.msra.mxu0 0.0
    %1228 = vmatprep.subr.mxu0 0.0
    %1229 = vmatpush1.msra.mxu0 0.0
    %1230 = vmatprep.subr.mxu0 0.0
    %1231 = vmatpush1.msra.mxu0 0.0
    %1232 = vmatprep.subr.mxu0 0.0
    %1233 = vmatpush1.msra.mxu0 0.0
    %1234 = vmatprep.subr.mxu0 0.0
    %1235 = vmatpush1.msra.mxu0 0.0
    %1236 = vmatprep.subr.mxu0 0.0
    %1237 = vmatpush1.msra.mxu0 0.0
    %1238 = vmatprep.subr.mxu0 0.0
    %1239 = vmatpush1.msra.mxu0 0.0
    %1240 = vmatprep.subr.mxu0 0.0
    %1241 = vmatpush1.msra.mxu0 0.0
    %1242 = vmatprep.subr.mxu0 0.0
    %1243 = vmatpush1.msra.mxu0 0.0
    %1244 = vmatprep.subr.mxu0 0.0
    %1245 = vmatpush1.msra.mxu0 0.0
    %1246 = vmatprep.subr.mxu0 0.0
    %1247 = vmatpush1.msra.mxu0 0.0
    %1248 = vmatprep.subr.mxu0 0.0
    %1249 = vmatpush1.msra.mxu0 0.0
    %1250 = vmatprep.mubr.f32.mxu0 0.0
    %1251 = vmatmul.mubr.f32.gmra.mrb[0].mxu0 %v1015
    %v1252 = vpop.f32.mrb[0].mxu0
    %v1253 = vadd.f32 0.0, %v1252
    %v1254 = vpop.f32.mrb[0].mxu0
    %1255 = vdwg.mxu0
    %1256 = vmatprep.subr.mxu0 0.0
    %1257 = vmatpush1.msra.mxu0 %v279
    %1258 = vmatprep.subr.mxu0 0.0
    %1259 = vmatpush1.msra.mxu0 %v280
    %1260 = vmatprep.subr.mxu0 0.0
    %1261 = vmatpush1.msra.mxu0 %v281
    %1262 = vmatprep.subr.mxu0 0.0
    %1263 = vmatpush1.msra.mxu0 %v282
    %1264 = vmatprep.subr.mxu0 0.0
    %1265 = vmatpush1.msra.mxu0 0.0
    %1266 = vmatprep.subr.mxu0 0.0
    %1267 = vmatpush1.msra.mxu0 0.0
    %1268 = vmatprep.subr.mxu0 0.0
    %1269 = vmatpush1.msra.mxu0 0.0
    %1270 = vmatprep.subr.mxu0 0.0
    %1271 = vmatpush1.msra.mxu0 0.0
    %1272 = vmatprep.subr.mxu0 0.0
    %1273 = vmatpush1.msra.mxu0 0.0
    %1274 = vmatprep.subr.mxu0 0.0
    %1275 = vmatpush1.msra.mxu0 0.0
    %1276 = vmatprep.subr.mxu0 0.0
    %1277 = vmatpush1.msra.mxu0 0.0
    %1278 = vmatprep.subr.mxu0 0.0
    %1279 = vmatpush1.msra.mxu0 0.0
    %1280 = vmatprep.subr.mxu0 0.0
    %1281 = vmatpush1.msra.mxu0 0.0
    %1282 = vmatprep.subr.mxu0 0.0
    %1283 = vmatpush1.msra.mxu0 0.0
    %1284 = vmatprep.subr.mxu0 0.0
    %1285 = vmatpush1.msra.mxu0 0.0
    %1286 = vmatprep.subr.mxu0 0.0
    %1287 = vmatpush1.msra.mxu0 0.0
    %1288 = vmatprep.subr.mxu0 0.0
    %1289 = vmatpush1.msra.mxu0 0.0
    %1290 = vmatprep.subr.mxu0 0.0
    %1291 = vmatpush1.msra.mxu0 0.0
    %1292 = vmatprep.subr.mxu0 0.0
    %1293 = vmatpush1.msra.mxu0 0.0
    %1294 = vmatprep.subr.mxu0 0.0
    %1295 = vmatpush1.msra.mxu0 0.0
    %1296 = vmatprep.subr.mxu0 0.0
    %1297 = vmatpush1.msra.mxu0 0.0
    %1298 = vmatprep.subr.mxu0 0.0
    %1299 = vmatpush1.msra.mxu0 0.0
    %1300 = vmatprep.subr.mxu0 0.0
    %1301 = vmatpush1.msra.mxu0 0.0
    %1302 = vmatprep.subr.mxu0 0.0
    %1303 = vmatpush1.msra.mxu0 0.0
    %1304 = vmatprep.subr.mxu0 0.0
    %1305 = vmatpush1.msra.mxu0 0.0
    %1306 = vmatprep.subr.mxu0 0.0
    %1307 = vmatpush1.msra.mxu0 0.0
    %1308 = vmatprep.subr.mxu0 0.0
    %1309 = vmatpush1.msra.mxu0 0.0
    %1310 = vmatprep.subr.mxu0 0.0
    %1311 = vmatpush1.msra.mxu0 0.0
    %1312 = vmatprep.subr.mxu0 0.0
    %1313 = vmatpush1.msra.mxu0 0.0
    %1314 = vmatprep.subr.mxu0 0.0
    %1315 = vmatpush1.msra.mxu0 0.0
    %1316 = vmatprep.subr.mxu0 0.0
    %1317 = vmatpush1.msra.mxu0 0.0
    %1318 = vmatprep.subr.mxu0 0.0
    %1319 = vmatpush1.msra.mxu0 0.0
    %1320 = vmatprep.mubr.f32.mxu0 0.0
    %1321 = vmatmul.mubr.f32.gmra.mrb[0].mxu0 %v1091
    %v1322 = vpop.f32.mrb[0].mxu0
    %v1323 = vadd.f32 %v1253, %v1322
    %v1324 = vpop.f32.mrb[0].mxu0
    %1325 = vdwg.mxu0
    %v1326 = vadd.f32 %v1323, %v640
    %v1327 = vmul.f32 %v1326, 0.5
    %v1328 = vtanh.pop %v1327
    %v1329 = vmul.f32 %v1328, 0.5
    %v1330 = vadd.f32 %v1329, 0.5
    %v1331 = vtanh.pop %v1326
    %v1332 = vmul.f32 %v1330, %v1005
    %1334 = vrot.lane.b32.xlu0 %v1331, 64
    %v1335 = vpop.permute.xlu0 %1334
    %v1337 = vmul.f32 %v1330, %v1335
    %1339 = vrot.lane.b32.xlu0 %v1337, 32
    %v1340 = vpop.permute.xlu0 %1339
    %v1342 = vadd.f32 %v1332, %v1340
    %v1343 = vtanh.pop %v1342
    %1345 = vrot.lane.b32.xlu0 %v1343, 64
    %v1346 = vpop.permute.xlu0 %1345
    %v1348 = vmul.f32 %v1330, %v1346
    %1350 = vrot.lane.b32.xlu0 %v1348, 32
    %v1351 = vpop.permute.xlu0 %1350
    %v1352 = vsel %vm294, %v1351, 0
    %1354 = vmatprep.subr.mxu0 0.0
    %1355 = vmatpush1.msra.mxu0 %v274
    %1356 = vmatprep.subr.mxu0 0.0
    %1357 = vmatpush1.msra.mxu0 %v275
    %1358 = vmatprep.subr.mxu0 0.0
    %1359 = vmatpush1.msra.mxu0 %v276
    %1360 = vmatprep.subr.mxu0 0.0
    %1361 = vmatpush1.msra.mxu0 %v277
    %1362 = vmatprep.subr.mxu0 0.0
    %1363 = vmatpush1.msra.mxu0 0.0
    %1364 = vmatprep.subr.mxu0 0.0
    %1365 = vmatpush1.msra.mxu0 0.0
    %1366 = vmatprep.subr.mxu0 0.0
    %1367 = vmatpush1.msra.mxu0 0.0
    %1368 = vmatprep.subr.mxu0 0.0
    %1369 = vmatpush1.msra.mxu0 0.0
    %1370 = vmatprep.subr.mxu0 0.0
    %1371 = vmatpush1.msra.mxu0 0.0
    %1372 = vmatprep.subr.mxu0 0.0
    %1373 = vmatpush1.msra.mxu0 0.0
    %1374 = vmatprep.subr.mxu0 0.0
    %1375 = vmatpush1.msra.mxu0 0.0
    %1376 = vmatprep.subr.mxu0 0.0
    %1377 = vmatpush1.msra.mxu0 0.0
    %1378 = vmatprep.subr.mxu0 0.0
    %1379 = vmatpush1.msra.mxu0 0.0
    %1380 = vmatprep.subr.mxu0 0.0
    %1381 = vmatpush1.msra.mxu0 0.0
    %1382 = vmatprep.subr.mxu0 0.0
    %1383 = vmatpush1.msra.mxu0 0.0
    %1384 = vmatprep.subr.mxu0 0.0
    %1385 = vmatpush1.msra.mxu0 0.0
    %1386 = vmatprep.subr.mxu0 0.0
    %1387 = vmatpush1.msra.mxu0 0.0
    %1388 = vmatprep.subr.mxu0 0.0
    %1389 = vmatpush1.msra.mxu0 0.0
    %1390 = vmatprep.subr.mxu0 0.0
    %1391 = vmatpush1.msra.mxu0 0.0
    %1392 = vmatprep.subr.mxu0 0.0
    %1393 = vmatpush1.msra.mxu0 0.0
    %1394 = vmatprep.subr.mxu0 0.0
    %1395 = vmatpush1.msra.mxu0 0.0
    %1396 = vmatprep.subr.mxu0 0.0
    %1397 = vmatpush1.msra.mxu0 0.0
    %1398 = vmatprep.subr.mxu0 0.0
    %1399 = vmatpush1.msra.mxu0 0.0
    %1400 = vmatprep.subr.mxu0 0.0
    %1401 = vmatpush1.msra.mxu0 0.0
    %1402 = vmatprep.subr.mxu0 0.0
    %1403 = vmatpush1.msra.mxu0 0.0
    %1404 = vmatprep.subr.mxu0 0.0
    %1405 = vmatpush1.msra.mxu0 0.0
    %1406 = vmatprep.subr.mxu0 0.0
    %1407 = vmatpush1.msra.mxu0 0.0
    %1408 = vmatprep.subr.mxu0 0.0
    %1409 = vmatpush1.msra.mxu0 0.0
    %1410 = vmatprep.subr.mxu0 0.0
    %1411 = vmatpush1.msra.mxu0 0.0
    %1412 = vmatprep.subr.mxu0 0.0
    %1413 = vmatpush1.msra.mxu0 0.0
    %1414 = vmatprep.subr.mxu0 0.0
    %1415 = vmatpush1.msra.mxu0 0.0
    %1416 = vmatprep.subr.mxu0 0.0
    %1417 = vmatpush1.msra.mxu0 0.0
    %1418 = vmatprep.mubr.f32.mxu0 0.0
    %1419 = vmatmul.mubr.f32.gmra.mrb[0].mxu0 %v1352
    %v1420 = vpop.f32.mrb[0].mxu0
    %v1421 = vadd.f32 %v673, %v1420
    %v1422 = vpop.f32.mrb[0].mxu0
    %1423 = vdwg.mxu0
    %1424 = vst [vmem:[%s10 + $0x10] sm:$0xff] %v1421
    %1426 = vrot.lane.b32.xlu0 %v1185, 32
    %v1427 = vpop.permute.xlu0 %1426
    %v1428 = vsel %vm294, %v1427, 0
    %1430 = vmatprep.subr.mxu0 0.0
    %1431 = vmatpush1.msra.mxu0 %v270
    %1432 = vmatprep.subr.mxu0 0.0
    %1433 = vmatpush1.msra.mxu0 %v271
    %1434 = vmatprep.subr.mxu0 0.0
    %1435 = vmatpush1.msra.mxu0 %v272
    %1436 = vmatprep.subr.mxu0 0.0
    %1437 = vmatpush1.msra.mxu0 %v273
    %1438 = vmatprep.subr.mxu0 0.0
    %1439 = vmatpush1.msra.mxu0 0.0
    %1440 = vmatprep.subr.mxu0 0.0
    %1441 = vmatpush1.msra.mxu0 0.0
    %1442 = vmatprep.subr.mxu0 0.0
    %1443 = vmatpush1.msra.mxu0 0.0
    %1444 = vmatprep.subr.mxu0 0.0
    %1445 = vmatpush1.msra.mxu0 0.0
    %1446 = vmatprep.subr.mxu0 0.0
    %1447 = vmatpush1.msra.mxu0 0.0
    %1448 = vmatprep.subr.mxu0 0.0
    %1449 = vmatpush1.msra.mxu0 0.0
    %1450 = vmatprep.subr.mxu0 0.0
    %1451 = vmatpush1.msra.mxu0 0.0
    %1452 = vmatprep.subr.mxu0 0.0
    %1453 = vmatpush1.msra.mxu0 0.0
    %1454 = vmatprep.subr.mxu0 0.0
    %1455 = vmatpush1.msra.mxu0 0.0
    %1456 = vmatprep.subr.mxu0 0.0
    %1457 = vmatpush1.msra.mxu0 0.0
    %1458 = vmatprep.subr.mxu0 0.0
    %1459 = vmatpush1.msra.mxu0 0.0
    %1460 = vmatprep.subr.mxu0 0.0
    %1461 = vmatpush1.msra.mxu0 0.0
    %1462 = vmatprep.subr.mxu0 0.0
    %1463 = vmatpush1.msra.mxu0 0.0
    %1464 = vmatprep.subr.mxu0 0.0
    %1465 = vmatpush1.msra.mxu0 0.0
    %1466 = vmatprep.subr.mxu0 0.0
    %1467 = vmatpush1.msra.mxu0 0.0
    %1468 = vmatprep.subr.mxu0 0.0
    %1469 = vmatpush1.msra.mxu0 0.0
    %1470 = vmatprep.subr.mxu0 0.0
    %1471 = vmatpush1.msra.mxu0 0.0
    %1472 = vmatprep.subr.mxu0 0.0
    %1473 = vmatpush1.msra.mxu0 0.0
    %1474 = vmatprep.subr.mxu0 0.0
    %1475 = vmatpush1.msra.mxu0 0.0
    %1476 = vmatprep.subr.mxu0 0.0
    %1477 = vmatpush1.msra.mxu0 0.0
    %1478 = vmatprep.subr.mxu0 0.0
    %1479 = vmatpush1.msra.mxu0 0.0
    %1480 = vmatprep.subr.mxu0 0.0
    %1481 = vmatpush1.msra.mxu0 0.0
    %1482 = vmatprep.subr.mxu0 0.0
    %1483 = vmatpush1.msra.mxu0 0.0
    %1484 = vmatprep.subr.mxu0 0.0
    %1485 = vmatpush1.msra.mxu0 0.0
    %1486 = vmatprep.subr.mxu0 0.0
    %1487 = vmatpush1.msra.mxu0 0.0
    %1488 = vmatprep.subr.mxu0 0.0
    %1489 = vmatpush1.msra.mxu0 0.0
    %1490 = vmatprep.subr.mxu0 0.0
    %1491 = vmatpush1.msra.mxu0 0.0
    %1492 = vmatprep.subr.mxu0 0.0
    %1493 = vmatpush1.msra.mxu0 0.0
    %1494 = vmatprep.mubr.f32.mxu0 0.0
    %1495 = vmatmul.mubr.f32.gmra.mrb[0].mxu0 %v1428
    %v1496 = vpop.f32.mrb[0].mxu0
    %v1497 = vadd.f32 0.0, %v1496
    %v1498 = vpop.f32.mrb[0].mxu0
    %1499 = vdwg.mxu0
    %v1500 = vadd.f32 %v252, %v1497
    %v1501 = vmul.f32 %v1500, 0.5
    %v1502 = vtanh.pop %v1501
    %v1503 = vmul.f32 %v1502, 0.5
    %v1504 = vadd.f32 %v1503, 0.5
    %v1505 = vtanh.pop %v1500
    %v1506 = vmul.f32 %v1504, %v1179
    %1508 = vrot.lane.b32.xlu0 %v1505, 64
    %v1509 = vpop.permute.xlu0 %1508
    %v1511 = vmul.f32 %v1504, %v1509
    %1513 = vrot.lane.b32.xlu0 %v1511, 32
    %v1514 = vpop.permute.xlu0 %1513
    %v1516 = vadd.f32 %v1506, %v1514
    %v1517 = vtanh.pop %v1516
    %1519 = vrot.lane.b32.xlu0 %v1517, 64
    %v1520 = vpop.permute.xlu0 %1519
    %v1522 = vmul.f32 %v1504, %v1520
    %1523 = vmatprep.subr.mxu0 0.0
    %1524 = vmatpush1.msra.mxu0 %v283
    %1525 = vmatprep.subr.mxu0 0.0
    %1526 = vmatpush1.msra.mxu0 %v284
    %1527 = vmatprep.subr.mxu0 0.0
    %1528 = vmatpush1.msra.mxu0 %v285
    %1529 = vmatprep.subr.mxu0 0.0
    %1530 = vmatpush1.msra.mxu0 %v286
    %1531 = vmatprep.subr.mxu0 0.0
    %1532 = vmatpush1.msra.mxu0 0.0
    %1533 = vmatprep.subr.mxu0 0.0
    %1534 = vmatpush1.msra.mxu0 0.0
    %1535 = vmatprep.subr.mxu0 0.0
    %1536 = vmatpush1.msra.mxu0 0.0
    %1537 = vmatprep.subr.mxu0 0.0
    %1538 = vmatpush1.msra.mxu0 0.0
    %1539 = vmatprep.subr.mxu0 0.0
    %1540 = vmatpush1.msra.mxu0 0.0
    %1541 = vmatprep.subr.mxu0 0.0
    %1542 = vmatpush1.msra.mxu0 0.0
    %1543 = vmatprep.subr.mxu0 0.0
    %1544 = vmatpush1.msra.mxu0 0.0
    %1545 = vmatprep.subr.mxu0 0.0
    %1546 = vmatpush1.msra.mxu0 0.0
    %1547 = vmatprep.subr.mxu0 0.0
    %1548 = vmatpush1.msra.mxu0 0.0
    %1549 = vmatprep.subr.mxu0 0.0
    %1550 = vmatpush1.msra.mxu0 0.0
    %1551 = vmatprep.subr.mxu0 0.0
    %1552 = vmatpush1.msra.mxu0 0.0
    %1553 = vmatprep.subr.mxu0 0.0
    %1554 = vmatpush1.msra.mxu0 0.0
    %1555 = vmatprep.subr.mxu0 0.0
    %1556 = vmatpush1.msra.mxu0 0.0
    %1557 = vmatprep.subr.mxu0 0.0
    %1558 = vmatpush1.msra.mxu0 0.0
    %1559 = vmatprep.subr.mxu0 0.0
    %1560 = vmatpush1.msra.mxu0 0.0
    %1561 = vmatprep.subr.mxu0 0.0
    %1562 = vmatpush1.msra.mxu0 0.0
    %1563 = vmatprep.subr.mxu0 0.0
    %1564 = vmatpush1.msra.mxu0 0.0
    %1565 = vmatprep.subr.mxu0 0.0
    %1566 = vmatpush1.msra.mxu0 0.0
    %1567 = vmatprep.subr.mxu0 0.0
    %1568 = vmatpush1.msra.mxu0 0.0
    %1569 = vmatprep.subr.mxu0 0.0
    %1570 = vmatpush1.msra.mxu0 0.0
    %1571 = vmatprep.subr.mxu0 0.0
    %1572 = vmatpush1.msra.mxu0 0.0
    %1573 = vmatprep.subr.mxu0 0.0
    %1574 = vmatpush1.msra.mxu0 0.0
    %1575 = vmatprep.subr.mxu0 0.0
    %1576 = vmatpush1.msra.mxu0 0.0
    %1577 = vmatprep.subr.mxu0 0.0
    %1578 = vmatpush1.msra.mxu0 0.0
    %1579 = vmatprep.subr.mxu0 0.0
    %1580 = vmatpush1.msra.mxu0 0.0
    %1581 = vmatprep.subr.mxu0 0.0
    %1582 = vmatpush1.msra.mxu0 0.0
    %1583 = vmatprep.subr.mxu0 0.0
    %1584 = vmatpush1.msra.mxu0 0.0
    %1585 = vmatprep.subr.mxu0 0.0
    %1586 = vmatpush1.msra.mxu0 0.0
    %1587 = vmatprep.mubr.f32.mxu0 0.0
    %1588 = vmatmul.mubr.f32.gmra.mrb[0].mxu0 %v1352
    %v1589 = vpop.f32.mrb[0].mxu0
    %v1590 = vadd.f32 0.0, %v1589
    %v1591 = vpop.f32.mrb[0].mxu0
    %1592 = vdwg.mxu0
    %1593 = vmatprep.subr.mxu0 0.0
    %1594 = vmatpush1.msra.mxu0 %v279
    %1595 = vmatprep.subr.mxu0 0.0
    %1596 = vmatpush1.msra.mxu0 %v280
    %1597 = vmatprep.subr.mxu0 0.0
    %1598 = vmatpush1.msra.mxu0 %v281
    %1599 = vmatprep.subr.mxu0 0.0
    %1600 = vmatpush1.msra.mxu0 %v282
    %1601 = vmatprep.subr.mxu0 0.0
    %1602 = vmatpush1.msra.mxu0 0.0
    %1603 = vmatprep.subr.mxu0 0.0
    %1604 = vmatpush1.msra.mxu0 0.0
    %1605 = vmatprep.subr.mxu0 0.0
    %1606 = vmatpush1.msra.mxu0 0.0
    %1607 = vmatprep.subr.mxu0 0.0
    %1608 = vmatpush1.msra.mxu0 0.0
    %1609 = vmatprep.subr.mxu0 0.0
    %1610 = vmatpush1.msra.mxu0 0.0
    %1611 = vmatprep.subr.mxu0 0.0
    %1612 = vmatpush1.msra.mxu0 0.0
    %1613 = vmatprep.subr.mxu0 0.0
    %1614 = vmatpush1.msra.mxu0 0.0
    %1615 = vmatprep.subr.mxu0 0.0
    %1616 = vmatpush1.msra.mxu0 0.0
    %1617 = vmatprep.subr.mxu0 0.0
    %1618 = vmatpush1.msra.mxu0 0.0
    %1619 = vmatprep.subr.mxu0 0.0
    %1620 = vmatpush1.msra.mxu0 0.0
    %1621 = vmatprep.subr.mxu0 0.0
    %1622 = vmatpush1.msra.mxu0 0.0
    %1623 = vmatprep.subr.mxu0 0.0
    %1624 = vmatpush1.msra.mxu0 0.0
    %1625 = vmatprep.subr.mxu0 0.0
    %1626 = vmatpush1.msra.mxu0 0.0
    %1627 = vmatprep.subr.mxu0 0.0
    %1628 = vmatpush1.msra.mxu0 0.0
    %1629 = vmatprep.subr.mxu0 0.0
    %1630 = vmatpush1.msra.mxu0 0.0
    %1631 = vmatprep.subr.mxu0 0.0
    %1632 = vmatpush1.msra.mxu0 0.0
    %1633 = vmatprep.subr.mxu0 0.0
    %1634 = vmatpush1.msra.mxu0 0.0
    %1635 = vmatprep.subr.mxu0 0.0
    %1636 = vmatpush1.msra.mxu0 0.0
    %1637 = vmatprep.subr.mxu0 0.0
    %1638 = vmatpush1.msra.mxu0 0.0
    %1639 = vmatprep.subr.mxu0 0.0
    %1640 = vmatpush1.msra.mxu0 0.0
    %1641 = vmatprep.subr.mxu0 0.0
    %1642 = vmatpush1.msra.mxu0 0.0
    %1643 = vmatprep.subr.mxu0 0.0
    %1644 = vmatpush1.msra.mxu0 0.0
    %1645 = vmatprep.subr.mxu0 0.0
    %1646 = vmatpush1.msra.mxu0 0.0
    %1647 = vmatprep.subr.mxu0 0.0
    %1648 = vmatpush1.msra.mxu0 0.0
    %1649 = vmatprep.subr.mxu0 0.0
    %1650 = vmatpush1.msra.mxu0 0.0
    %1651 = vmatprep.subr.mxu0 0.0
    %1652 = vmatpush1.msra.mxu0 0.0
    %1653 = vmatprep.subr.mxu0 0.0
    %1654 = vmatpush1.msra.mxu0 0.0
    %1655 = vmatprep.subr.mxu0 0.0
    %1656 = vmatpush1.msra.mxu0 0.0
    %1657 = vmatprep.mubr.f32.mxu0 0.0
    %1658 = vmatmul.mubr.f32.gmra.mrb[0].mxu0 %v1428
    %v1659 = vpop.f32.mrb[0].mxu0
    %v1660 = vadd.f32 %v1590, %v1659
    %v1661 = vpop.f32.mrb[0].mxu0
    %1662 = vdwg.mxu0
    %v1663 = vadd.f32 %v1660, %v640
    %v1664 = vmul.f32 %v1663, 0.5
    %v1665 = vtanh.pop %v1664
    %v1666 = vmul.f32 %v1665, 0.5
    %v1667 = vadd.f32 %v1666, 0.5
    %v1668 = vtanh.pop %v1663
    %v1669 = vmul.f32 %v1667, %v1342
    %1671 = vrot.lane.b32.xlu0 %v1668, 64
    %v1672 = vpop.permute.xlu0 %1671
    %v1674 = vmul.f32 %v1667, %v1672
    %1676 = vrot.lane.b32.xlu0 %v1674, 32
    %v1677 = vpop.permute.xlu0 %1676
    %v1679 = vadd.f32 %v1669, %v1677
    %v1680 = vtanh.pop %v1679
    %1682 = vrot.lane.b32.xlu0 %v1680, 64
    %v1683 = vpop.permute.xlu0 %1682
    %v1685 = vmul.f32 %v1667, %v1683
    %1687 = vrot.lane.b32.xlu0 %v1685, 32
    %v1688 = vpop.permute.xlu0 %1687
    %v1689 = vsel %vm294, %v1688, 0
    %1691 = vmatprep.subr.mxu0 0.0
    %1692 = vmatpush1.msra.mxu0 %v274
    %1693 = vmatprep.subr.mxu0 0.0
    %1694 = vmatpush1.msra.mxu0 %v275
    %1695 = vmatprep.subr.mxu0 0.0
    %1696 = vmatpush1.msra.mxu0 %v276
    %1697 = vmatprep.subr.mxu0 0.0
    %1698 = vmatpush1.msra.mxu0 %v277
    %1699 = vmatprep.subr.mxu0 0.0
    %1700 = vmatpush1.msra.mxu0 0.0
    %1701 = vmatprep.subr.mxu0 0.0
    %1702 = vmatpush1.msra.mxu0 0.0
    %1703 = vmatprep.subr.mxu0 0.0
    %1704 = vmatpush1.msra.mxu0 0.0
    %1705 = vmatprep.subr.mxu0 0.0
    %1706 = vmatpush1.msra.mxu0 0.0
    %1707 = vmatprep.subr.mxu0 0.0
    %1708 = vmatpush1.msra.mxu0 0.0
    %1709 = vmatprep.subr.mxu0 0.0
    %1710 = vmatpush1.msra.mxu0 0.0
    %1711 = vmatprep.subr.mxu0 0.0
    %1712 = vmatpush1.msra.mxu0 0.0
    %1713 = vmatprep.subr.mxu0 0.0
    %1714 = vmatpush1.msra.mxu0 0.0
    %1715 = vmatprep.subr.mxu0 0.0
    %1716 = vmatpush1.msra.mxu0 0.0
    %1717 = vmatprep.subr.mxu0 0.0
    %1718 = vmatpush1.msra.mxu0 0.0
    %1719 = vmatprep.subr.mxu0 0.0
    %1720 = vmatpush1.msra.mxu0 0.0
    %1721 = vmatprep.subr.mxu0 0.0
    %1722 = vmatpush1.msra.mxu0 0.0
    %1723 = vmatprep.subr.mxu0 0.0
    %1724 = vmatpush1.msra.mxu0 0.0
    %1725 = vmatprep.subr.mxu0 0.0
    %1726 = vmatpush1.msra.mxu0 0.0
    %1727 = vmatprep.subr.mxu0 0.0
    %1728 = vmatpush1.msra.mxu0 0.0
    %1729 = vmatprep.subr.mxu0 0.0
    %1730 = vmatpush1.msra.mxu0 0.0
    %1731 = vmatprep.subr.mxu0 0.0
    %1732 = vmatpush1.msra.mxu0 0.0
    %1733 = vmatprep.subr.mxu0 0.0
    %1734 = vmatpush1.msra.mxu0 0.0
    %1735 = vmatprep.subr.mxu0 0.0
    %1736 = vmatpush1.msra.mxu0 0.0
    %1737 = vmatprep.subr.mxu0 0.0
    %1738 = vmatpush1.msra.mxu0 0.0
    %1739 = vmatprep.subr.mxu0 0.0
    %1740 = vmatpush1.msra.mxu0 0.0
    %1741 = vmatprep.subr.mxu0 0.0
    %1742 = vmatpush1.msra.mxu0 0.0
    %1743 = vmatprep.subr.mxu0 0.0
    %1744 = vmatpush1.msra.mxu0 0.0
    %1745 = vmatprep.subr.mxu0 0.0
    %1746 = vmatpush1.msra.mxu0 0.0
    %1747 = vmatprep.subr.mxu0 0.0
    %1748 = vmatpush1.msra.mxu0 0.0
    %1749 = vmatprep.subr.mxu0 0.0
    %1750 = vmatpush1.msra.mxu0 0.0
    %1751 = vmatprep.subr.mxu0 0.0
    %1752 = vmatpush1.msra.mxu0 0.0
    %1753 = vmatprep.subr.mxu0 0.0
    %1754 = vmatpush1.msra.mxu0 0.0
    %1755 = vmatprep.mubr.f32.mxu0 0.0
    %1756 = vmatmul.mubr.f32.gmra.mrb[0].mxu0 %v1689
    %v1757 = vpop.f32.mrb[0].mxu0
    %v1758 = vadd.f32 %v673, %v1757
    %v1759 = vpop.f32.mrb[0].mxu0
    %1760 = vdwg.mxu0
    %1761 = vst [vmem:[%s10 + $0x18] sm:$0xff] %v1758
    %1763 = vrot.lane.b32.xlu0 %v1522, 32
    %v1764 = vpop.permute.xlu0 %1763
    %v1765 = vsel %vm294, %v1764, 0
    %1767 = vmatprep.subr.mxu0 0.0
    %1768 = vmatpush1.msra.mxu0 %v270
    %1769 = vmatprep.subr.mxu0 0.0
    %1770 = vmatpush1.msra.mxu0 %v271
    %1771 = vmatprep.subr.mxu0 0.0
    %1772 = vmatpush1.msra.mxu0 %v272
    %1773 = vmatprep.subr.mxu0 0.0
    %1774 = vmatpush1.msra.mxu0 %v273
    %1775 = vmatprep.subr.mxu0 0.0
    %1776 = vmatpush1.msra.mxu0 0.0
    %1777 = vmatprep.subr.mxu0 0.0
    %1778 = vmatpush1.msra.mxu0 0.0
    %1779 = vmatprep.subr.mxu0 0.0
    %1780 = vmatpush1.msra.mxu0 0.0
    %1781 = vmatprep.subr.mxu0 0.0
    %1782 = vmatpush1.msra.mxu0 0.0
    %1783 = vmatprep.subr.mxu0 0.0
    %1784 = vmatpush1.msra.mxu0 0.0
    %1785 = vmatprep.subr.mxu0 0.0
    %1786 = vmatpush1.msra.mxu0 0.0
    %1787 = vmatprep.subr.mxu0 0.0
    %1788 = vmatpush1.msra.mxu0 0.0
    %1789 = vmatprep.subr.mxu0 0.0
    %1790 = vmatpush1.msra.mxu0 0.0
    %1791 = vmatprep.subr.mxu0 0.0
    %1792 = vmatpush1.msra.mxu0 0.0
    %1793 = vmatprep.subr.mxu0 0.0
    %1794 = vmatpush1.msra.mxu0 0.0
    %1795 = vmatprep.subr.mxu0 0.0
    %1796 = vmatpush1.msra.mxu0 0.0
    %1797 = vmatprep.subr.mxu0 0.0
    %1798 = vmatpush1.msra.mxu0 0.0
    %1799 = vmatprep.subr.mxu0 0.0
    %1800 = vmatpush1.msra.mxu0 0.0
    %1801 = vmatprep.subr.mxu0 0.0
    %1802 = vmatpush1.msra.mxu0 0.0
    %1803 = vmatprep.subr.mxu0 0.0
    %1804 = vmatpush1.msra.mxu0 0.0
    %1805 = vmatprep.subr.mxu0 0.0
    %1806 = vmatpush1.msra.mxu0 0.0
    %1807 = vmatprep.subr.mxu0 0.0
    %1808 = vmatpush1.msra.mxu0 0.0
    %1809 = vmatprep.subr.mxu0 0.0
    %1810 = vmatpush1.msra.mxu0 0.0
    %1811 = vmatprep.subr.mxu0 0.0
    %1812 = vmatpush1.msra.mxu0 0.0
    %1813 = vmatprep.subr.mxu0 0.0
    %1814 = vmatpush1.msra.mxu0 0.0
    %1815 = vmatprep.subr.mxu0 0.0
    %1816 = vmatpush1.msra.mxu0 0.0
    %1817 = vmatprep.subr.mxu0 0.0
    %1818 = vmatpush1.msra.mxu0 0.0
    %1819 = vmatprep.subr.mxu0 0.0
    %1820 = vmatpush1.msra.mxu0 0.0
    %1821 = vmatprep.subr.mxu0 0.0
    %1822 = vmatpush1.msra.mxu0 0.0
    %1823 = vmatprep.subr.mxu0 0.0
    %1824 = vmatpush1.msra.mxu0 0.0
    %1825 = vmatprep.subr.mxu0 0.0
    %1826 = vmatpush1.msra.mxu0 0.0
    %1827 = vmatprep.subr.mxu0 0.0
    %1828 = vmatpush1.msra.mxu0 0.0
    %1829 = vmatprep.subr.mxu0 0.0
    %1830 = vmatpush1.msra.mxu0 0.0
    %1831 = vmatprep.mubr.f32.mxu0 0.0
    %1832 = vmatmul.mubr.f32.gmra.mrb[0].mxu0 %v1765
    %v1833 = vpop.f32.mrb[0].mxu0
    %v1834 = vadd.f32 0.0, %v1833
    %v1835 = vpop.f32.mrb[0].mxu0
    %1836 = vdwg.mxu0
    %v1837 = vadd.f32 %v257, %v1834
    %v1838 = vmul.f32 %v1837, 0.5
    %v1839 = vtanh.pop %v1838
    %v1840 = vmul.f32 %v1839, 0.5
    %v1841 = vadd.f32 %v1840, 0.5
    %v1842 = vtanh.pop %v1837
    %v1843 = vmul.f32 %v1841, %v1516
    %1845 = vrot.lane.b32.xlu0 %v1842, 64
    %v1846 = vpop.permute.xlu0 %1845
    %v1848 = vmul.f32 %v1841, %v1846
    %1850 = vrot.lane.b32.xlu0 %v1848, 32
    %v1851 = vpop.permute.xlu0 %1850
    %v1853 = vadd.f32 %v1843, %v1851
    %v1854 = vtanh.pop %v1853
    %1856 = vrot.lane.b32.xlu0 %v1854, 64
    %v1857 = vpop.permute.xlu0 %1856
    %v1859 = vmul.f32 %v1841, %v1857
    %1860 = vmatprep.subr.mxu0 0.0
    %1861 = vmatpush1.msra.mxu0 %v283
    %1862 = vmatprep.subr.mxu0 0.0
    %1863 = vmatpush1.msra.mxu0 %v284
    %1864 = vmatprep.subr.mxu0 0.0
    %1865 = vmatpush1.msra.mxu0 %v285
    %1866 = vmatprep.subr.mxu0 0.0
    %1867 = vmatpush1.msra.mxu0 %v286
    %1868 = vmatprep.subr.mxu0 0.0
    %1869 = vmatpush1.msra.mxu0 0.0
    %1870 = vmatprep.subr.mxu0 0.0
    %1871 = vmatpush1.msra.mxu0 0.0
    %1872 = vmatprep.subr.mxu0 0.0
    %1873 = vmatpush1.msra.mxu0 0.0
    %1874 = vmatprep.subr.mxu0 0.0
    %1875 = vmatpush1.msra.mxu0 0.0
    %1876 = vmatprep.subr.mxu0 0.0
    %1877 = vmatpush1.msra.mxu0 0.0
    %1878 = vmatprep.subr.mxu0 0.0
    %1879 = vmatpush1.msra.mxu0 0.0
    %1880 = vmatprep.subr.mxu0 0.0
    %1881 = vmatpush1.msra.mxu0 0.0
    %1882 = vmatprep.subr.mxu0 0.0
    %1883 = vmatpush1.msra.mxu0 0.0
    %1884 = vmatprep.subr.mxu0 0.0
    %1885 = vmatpush1.msra.mxu0 0.0
    %1886 = vmatprep.subr.mxu0 0.0
    %1887 = vmatpush1.msra.mxu0 0.0
    %1888 = vmatprep.subr.mxu0 0.0
    %1889 = vmatpush1.msra.mxu0 0.0
    %1890 = vmatprep.subr.mxu0 0.0
    %1891 = vmatpush1.msra.mxu0 0.0
    %1892 = vmatprep.subr.mxu0 0.0
    %1893 = vmatpush1.msra.mxu0 0.0
    %1894 = vmatprep.subr.mxu0 0.0
    %1895 = vmatpush1.msra.mxu0 0.0
    %1896 = vmatprep.subr.mxu0 0.0
    %1897 = vmatpush1.msra.mxu0 0.0
    %1898 = vmatprep.subr.mxu0 0.0
    %1899 = vmatpush1.msra.mxu0 0.0
    %1900 = vmatprep.subr.mxu0 0.0
    %1901 = vmatpush1.msra.mxu0 0.0
    %1902 = vmatprep.subr.mxu0 0.0
    %1903 = vmatpush1.msra.mxu0 0.0
    %1904 = vmatprep.subr.mxu0 0.0
    %1905 = vmatpush1.msra.mxu0 0.0
    %1906 = vmatprep.subr.mxu0 0.0
    %1907 = vmatpush1.msra.mxu0 0.0
    %1908 = vmatprep.subr.mxu0 0.0
    %1909 = vmatpush1.msra.mxu0 0.0
    %1910 = vmatprep.subr.mxu0 0.0
    %1911 = vmatpush1.msra.mxu0 0.0
    %1912 = vmatprep.subr.mxu0 0.0
    %1913 = vmatpush1.msra.mxu0 0.0
    %1914 = vmatprep.subr.mxu0 0.0
    %1915 = vmatpush1.msra.mxu0 0.0
    %1916 = vmatprep.subr.mxu0 0.0
    %1917 = vmatpush1.msra.mxu0 0.0
    %1918 = vmatprep.subr.mxu0 0.0
    %1919 = vmatpush1.msra.mxu0 0.0
    %1920 = vmatprep.subr.mxu0 0.0
    %1921 = vmatpush1.msra.mxu0 0.0
    %1922 = vmatprep.subr.mxu0 0.0
    %1923 = vmatpush1.msra.mxu0 0.0
    %1924 = vmatprep.mubr.f32.mxu0 0.0
    %1925 = vmatmul.mubr.f32.gmra.mrb[0].mxu0 %v1689
    %v1926 = vpop.f32.mrb[0].mxu0
    %v1927 = vadd.f32 0.0, %v1926
    %v1928 = vpop.f32.mrb[0].mxu0
    %1929 = vdwg.mxu0
    %1930 = vmatprep.subr.mxu0 0.0
    %1931 = vmatpush1.msra.mxu0 %v279
    %1932 = vmatprep.subr.mxu0 0.0
    %1933 = vmatpush1.msra.mxu0 %v280
    %1934 = vmatprep.subr.mxu0 0.0
    %1935 = vmatpush1.msra.mxu0 %v281
    %1936 = vmatprep.subr.mxu0 0.0
    %1937 = vmatpush1.msra.mxu0 %v282
    %1938 = vmatprep.subr.mxu0 0.0
    %1939 = vmatpush1.msra.mxu0 0.0
    %1940 = vmatprep.subr.mxu0 0.0
    %1941 = vmatpush1.msra.mxu0 0.0
    %1942 = vmatprep.subr.mxu0 0.0
    %1943 = vmatpush1.msra.mxu0 0.0
    %1944 = vmatprep.subr.mxu0 0.0
    %1945 = vmatpush1.msra.mxu0 0.0
    %1946 = vmatprep.subr.mxu0 0.0
    %1947 = vmatpush1.msra.mxu0 0.0
    %1948 = vmatprep.subr.mxu0 0.0
    %1949 = vmatpush1.msra.mxu0 0.0
    %1950 = vmatprep.subr.mxu0 0.0
    %1951 = vmatpush1.msra.mxu0 0.0
    %1952 = vmatprep.subr.mxu0 0.0
    %1953 = vmatpush1.msra.mxu0 0.0
    %1954 = vmatprep.subr.mxu0 0.0
    %1955 = vmatpush1.msra.mxu0 0.0
    %1956 = vmatprep.subr.mxu0 0.0
    %1957 = vmatpush1.msra.mxu0 0.0
    %1958 = vmatprep.subr.mxu0 0.0
    %1959 = vmatpush1.msra.mxu0 0.0
    %1960 = vmatprep.subr.mxu0 0.0
    %1961 = vmatpush1.msra.mxu0 0.0
    %1962 = vmatprep.subr.mxu0 0.0
    %1963 = vmatpush1.msra.mxu0 0.0
    %1964 = vmatprep.subr.mxu0 0.0
    %1965 = vmatpush1.msra.mxu0 0.0
    %1966 = vmatprep.subr.mxu0 0.0
    %1967 = vmatpush1.msra.mxu0 0.0
    %1968 = vmatprep.subr.mxu0 0.0
    %1969 = vmatpush1.msra.mxu0 0.0
    %1970 = vmatprep.subr.mxu0 0.0
    %1971 = vmatpush1.msra.mxu0 0.0
    %1972 = vmatprep.subr.mxu0 0.0
    %1973 = vmatpush1.msra.mxu0 0.0
    %1974 = vmatprep.subr.mxu0 0.0
    %1975 = vmatpush1.msra.mxu0 0.0
    %1976 = vmatprep.subr.mxu0 0.0
    %1977 = vmatpush1.msra.mxu0 0.0
    %1978 = vmatprep.subr.mxu0 0.0
    %1979 = vmatpush1.msra.mxu0 0.0
    %1980 = vmatprep.subr.mxu0 0.0
    %1981 = vmatpush1.msra.mxu0 0.0
    %1982 = vmatprep.subr.mxu0 0.0
    %1983 = vmatpush1.msra.mxu0 0.0
    %1984 = vmatprep.subr.mxu0 0.0
    %1985 = vmatpush1.msra.mxu0 0.0
    %1986 = vmatprep.subr.mxu0 0.0
    %1987 = vmatpush1.msra.mxu0 0.0
    %1988 = vmatprep.subr.mxu0 0.0
    %1989 = vmatpush1.msra.mxu0 0.0
    %1990 = vmatprep.subr.mxu0 0.0
    %1991 = vmatpush1.msra.mxu0 0.0
    %1992 = vmatprep.subr.mxu0 0.0
    %1993 = vmatpush1.msra.mxu0 0.0
    %1994 = vmatprep.mubr.f32.mxu0 0.0
    %1995 = vmatmul.mubr.f32.gmra.mrb[0].mxu0 %v1765
    %v1996 = vpop.f32.mrb[0].mxu0
    %v1997 = vadd.f32 %v1927, %v1996
    %v1998 = vpop.f32.mrb[0].mxu0
    %1999 = vdwg.mxu0
    %v2000 = vadd.f32 %v1997, %v640
    %v2001 = vmul.f32 %v2000, 0.5
    %v2002 = vtanh.pop %v2001
    %v2003 = vmul.f32 %v2002, 0.5
    %v2004 = vadd.f32 %v2003, 0.5
    %v2005 = vtanh.pop %v2000
    %v2006 = vmul.f32 %v2004, %v1679
    %2008 = vrot.lane.b32.xlu0 %v2005, 64
    %v2009 = vpop.permute.xlu0 %2008
    %v2011 = vmul.f32 %v2004, %v2009
    %2013 = vrot.lane.b32.xlu0 %v2011, 32
    %v2014 = vpop.permute.xlu0 %2013
    %v2016 = vadd.f32 %v2006, %v2014
    %v2017 = vtanh.pop %v2016
    %2019 = vrot.lane.b32.xlu0 %v2017, 64
    %v2020 = vpop.permute.xlu0 %2019
    %v2022 = vmul.f32 %v2004, %v2020
    %2024 = vrot.lane.b32.xlu0 %v2022, 32
    %v2025 = vpop.permute.xlu0 %2024
    %v2026 = vsel %vm294, %v2025, 0
    %2028 = vmatprep.subr.mxu0 0.0
    %2029 = vmatpush1.msra.mxu0 %v274
    %2030 = vmatprep.subr.mxu0 0.0
    %2031 = vmatpush1.msra.mxu0 %v275
    %2032 = vmatprep.subr.mxu0 0.0
    %2033 = vmatpush1.msra.mxu0 %v276
    %2034 = vmatprep.subr.mxu0 0.0
    %2035 = vmatpush1.msra.mxu0 %v277
    %2036 = vmatprep.subr.mxu0 0.0
    %2037 = vmatpush1.msra.mxu0 0.0
    %2038 = vmatprep.subr.mxu0 0.0
    %2039 = vmatpush1.msra.mxu0 0.0
    %2040 = vmatprep.subr.mxu0 0.0
    %2041 = vmatpush1.msra.mxu0 0.0
    %2042 = vmatprep.subr.mxu0 0.0
    %2043 = vmatpush1.msra.mxu0 0.0
    %2044 = vmatprep.subr.mxu0 0.0
    %2045 = vmatpush1.msra.mxu0 0.0
    %2046 = vmatprep.subr.mxu0 0.0
    %2047 = vmatpush1.msra.mxu0 0.0
    %2048 = vmatprep.subr.mxu0 0.0
    %2049 = vmatpush1.msra.mxu0 0.0
    %2050 = vmatprep.subr.mxu0 0.0
    %2051 = vmatpush1.msra.mxu0 0.0
    %2052 = vmatprep.subr.mxu0 0.0
    %2053 = vmatpush1.msra.mxu0 0.0
    %2054 = vmatprep.subr.mxu0 0.0
    %2055 = vmatpush1.msra.mxu0 0.0
    %2056 = vmatprep.subr.mxu0 0.0
    %2057 = vmatpush1.msra.mxu0 0.0
    %2058 = vmatprep.subr.mxu0 0.0
    %2059 = vmatpush1.msra.mxu0 0.0
    %2060 = vmatprep.subr.mxu0 0.0
    %2061 = vmatpush1.msra.mxu0 0.0
    %2062 = vmatprep.subr.mxu0 0.0
    %2063 = vmatpush1.msra.mxu0 0.0
    %2064 = vmatprep.subr.mxu0 0.0
    %2065 = vmatpush1.msra.mxu0 0.0
    %2066 = vmatprep.subr.mxu0 0.0
    %2067 = vmatpush1.msra.mxu0 0.0
    %2068 = vmatprep.subr.mxu0 0.0
    %2069 = vmatpush1.msra.mxu0 0.0
    %2070 = vmatprep.subr.mxu0 0.0
    %2071 = vmatpush1.msra.mxu0 0.0
    %2072 = vmatprep.subr.mxu0 0.0
    %2073 = vmatpush1.msra.mxu0 0.0
    %2074 = vmatprep.subr.mxu0 0.0
    %2075 = vmatpush1.msra.mxu0 0.0
    %2076 = vmatprep.subr.mxu0 0.0
    %2077 = vmatpush1.msra.mxu0 0.0
    %2078 = vmatprep.subr.mxu0 0.0
    %2079 = vmatpush1.msra.mxu0 0.0
    %2080 = vmatprep.subr.mxu0 0.0
    %2081 = vmatpush1.msra.mxu0 0.0
    %2082 = vmatprep.subr.mxu0 0.0
    %2083 = vmatpush1.msra.mxu0 0.0
    %2084 = vmatprep.subr.mxu0 0.0
    %2085 = vmatpush1.msra.mxu0 0.0
    %2086 = vmatprep.subr.mxu0 0.0
    %2087 = vmatpush1.msra.mxu0 0.0
    %2088 = vmatprep.subr.mxu0 0.0
    %2089 = vmatpush1.msra.mxu0 0.0
    %2090 = vmatprep.subr.mxu0 0.0
    %2091 = vmatpush1.msra.mxu0 0.0
    %2092 = vmatprep.mubr.f32.mxu0 0.0
    %2093 = vmatmul.mubr.f32.gmra.mrb[0].mxu0 %v2026
    %v2094 = vpop.f32.mrb[0].mxu0
    %v2095 = vadd.f32 %v673, %v2094
    %v2096 = vpop.f32.mrb[0].mxu0
    %2097 = vdwg.mxu0
    %2098 = vst [vmem:[%s10 + $0x20] sm:$0xff] %v2095
    %2100 = vrot.lane.b32.xlu0 %v1859, 32
    %v2101 = vpop.permute.xlu0 %2100
    %v2102 = vsel %vm294, %v2101, 0
    %2104 = vmatprep.subr.mxu0 0.0
    %2105 = vmatpush1.msra.mxu0 %v270
    %2106 = vmatprep.subr.mxu0 0.0
    %2107 = vmatpush1.msra.mxu0 %v271
    %2108 = vmatprep.subr.mxu0 0.0
    %2109 = vmatpush1.msra.mxu0 %v272
    %2110 = vmatprep.subr.mxu0 0.0
    %2111 = vmatpush1.msra.mxu0 %v273
    %2112 = vmatprep.subr.mxu0 0.0
    %2113 = vmatpush1.msra.mxu0 0.0
    %2114 = vmatprep.subr.mxu0 0.0
    %2115 = vmatpush1.msra.mxu0 0.0
    %2116 = vmatprep.subr.mxu0 0.0
    %2117 = vmatpush1.msra.mxu0 0.0
    %2118 = vmatprep.subr.mxu0 0.0
    %2119 = vmatpush1.msra.mxu0 0.0
    %2120 = vmatprep.subr.mxu0 0.0
    %2121 = vmatpush1.msra.mxu0 0.0
    %2122 = vmatprep.subr.mxu0 0.0
    %2123 = vmatpush1.msra.mxu0 0.0
    %2124 = vmatprep.subr.mxu0 0.0
    %2125 = vmatpush1.msra.mxu0 0.0
    %2126 = vmatprep.subr.mxu0 0.0
    %2127 = vmatpush1.msra.mxu0 0.0
    %2128 = vmatprep.subr.mxu0 0.0
    %2129 = vmatpush1.msra.mxu0 0.0
    %2130 = vmatprep.subr.mxu0 0.0
    %2131 = vmatpush1.msra.mxu0 0.0
    %2132 = vmatprep.subr.mxu0 0.0
    %2133 = vmatpush1.msra.mxu0 0.0
    %2134 = vmatprep.subr.mxu0 0.0
    %2135 = vmatpush1.msra.mxu0 0.0
    %2136 = vmatprep.subr.mxu0 0.0
    %2137 = vmatpush1.msra.mxu0 0.0
    %2138 = vmatprep.subr.mxu0 0.0
    %2139 = vmatpush1.msra.mxu0 0.0
    %2140 = vmatprep.subr.mxu0 0.0
    %2141 = vmatpush1.msra.mxu0 0.0
    %2142 = vmatprep.subr.mxu0 0.0
    %2143 = vmatpush1.msra.mxu0 0.0
    %2144 = vmatprep.subr.mxu0 0.0
    %2145 = vmatpush1.msra.mxu0 0.0
    %2146 = vmatprep.subr.mxu0 0.0
    %2147 = vmatpush1.msra.mxu0 0.0
    %2148 = vmatprep.subr.mxu0 0.0
    %2149 = vmatpush1.msra.mxu0 0.0
    %2150 = vmatprep.subr.mxu0 0.0
    %2151 = vmatpush1.msra.mxu0 0.0
    %2152 = vmatprep.subr.mxu0 0.0
    %2153 = vmatpush1.msra.mxu0 0.0
    %2154 = vmatprep.subr.mxu0 0.0
    %2155 = vmatpush1.msra.mxu0 0.0
    %2156 = vmatprep.subr.mxu0 0.0
    %2157 = vmatpush1.msra.mxu0 0.0
    %2158 = vmatprep.subr.mxu0 0.0
    %2159 = vmatpush1.msra.mxu0 0.0
    %2160 = vmatprep.subr.mxu0 0.0
    %2161 = vmatpush1.msra.mxu0 0.0
    %2162 = vmatprep.subr.mxu0 0.0
    %2163 = vmatpush1.msra.mxu0 0.0
    %2164 = vmatprep.subr.mxu0 0.0
    %2165 = vmatpush1.msra.mxu0 0.0
    %2166 = vmatprep.subr.mxu0 0.0
    %2167 = vmatpush1.msra.mxu0 0.0
    %2168 = vmatprep.mubr.f32.mxu0 0.0
    %2169 = vmatmul.mubr.f32.gmra.mrb[0].mxu0 %v2102
    %v2170 = vpop.f32.mrb[0].mxu0
    %v2171 = vadd.f32 0.0, %v2170
    %v2172 = vpop.f32.mrb[0].mxu0
    %2173 = vdwg.mxu0
    %v2174 = vadd.f32 %v262, %v2171
    %v2175 = vmul.f32 %v2174, 0.5
    %v2176 = vtanh.pop %v2175
    %v2177 = vmul.f32 %v2176, 0.5
    %v2178 = vadd.f32 %v2177, 0.5
    %v2179 = vtanh.pop %v2174
    %v2180 = vmul.f32 %v2178, %v1853
    %2182 = vrot.lane.b32.xlu0 %v2179, 64
    %v2183 = vpop.permute.xlu0 %2182
    %v2185 = vmul.f32 %v2178, %v2183
    %2187 = vrot.lane.b32.xlu0 %v2185, 32
    %v2188 = vpop.permute.xlu0 %2187
    %v2190 = vadd.f32 %v2180, %v2188
    %v2191 = vtanh.pop %v2190
    %2193 = vrot.lane.b32.xlu0 %v2191, 64
    %v2194 = vpop.permute.xlu0 %2193
    %v2196 = vmul.f32 %v2178, %v2194
    %2197 = vmatprep.subr.mxu0 0.0
    %2198 = vmatpush1.msra.mxu0 %v283
    %2199 = vmatprep.subr.mxu0 0.0
    %2200 = vmatpush1.msra.mxu0 %v284
    %2201 = vmatprep.subr.mxu0 0.0
    %2202 = vmatpush1.msra.mxu0 %v285
    %2203 = vmatprep.subr.mxu0 0.0
    %2204 = vmatpush1.msra.mxu0 %v286
    %2205 = vmatprep.subr.mxu0 0.0
    %2206 = vmatpush1.msra.mxu0 0.0
    %2207 = vmatprep.subr.mxu0 0.0
    %2208 = vmatpush1.msra.mxu0 0.0
    %2209 = vmatprep.subr.mxu0 0.0
    %2210 = vmatpush1.msra.mxu0 0.0
    %2211 = vmatprep.subr.mxu0 0.0
    %2212 = vmatpush1.msra.mxu0 0.0
    %2213 = vmatprep.subr.mxu0 0.0
    %2214 = vmatpush1.msra.mxu0 0.0
    %2215 = vmatprep.subr.mxu0 0.0
    %2216 = vmatpush1.msra.mxu0 0.0
    %2217 = vmatprep.subr.mxu0 0.0
    %2218 = vmatpush1.msra.mxu0 0.0
    %2219 = vmatprep.subr.mxu0 0.0
    %2220 = vmatpush1.msra.mxu0 0.0
    %2221 = vmatprep.subr.mxu0 0.0
    %2222 = vmatpush1.msra.mxu0 0.0
    %2223 = vmatprep.subr.mxu0 0.0
    %2224 = vmatpush1.msra.mxu0 0.0
    %2225 = vmatprep.subr.mxu0 0.0
    %2226 = vmatpush1.msra.mxu0 0.0
    %2227 = vmatprep.subr.mxu0 0.0
    %2228 = vmatpush1.msra.mxu0 0.0
    %2229 = vmatprep.subr.mxu0 0.0
    %2230 = vmatpush1.msra.mxu0 0.0
    %2231 = vmatprep.subr.mxu0 0.0
    %2232 = vmatpush1.msra.mxu0 0.0
    %2233 = vmatprep.subr.mxu0 0.0
    %2234 = vmatpush1.msra.mxu0 0.0
    %2235 = vmatprep.subr.mxu0 0.0
    %2236 = vmatpush1.msra.mxu0 0.0
    %2237 = vmatprep.subr.mxu0 0.0
    %2238 = vmatpush1.msra.mxu0 0.0
    %2239 = vmatprep.subr.mxu0 0.0
    %2240 = vmatpush1.msra.mxu0 0.0
    %2241 = vmatprep.subr.mxu0 0.0
    %2242 = vmatpush1.msra.mxu0 0.0
    %2243 = vmatprep.subr.mxu0 0.0
    %2244 = vmatpush1.msra.mxu0 0.0
    %2245 = vmatprep.subr.mxu0 0.0
    %2246 = vmatpush1.msra.mxu0 0.0
    %2247 = vmatprep.subr.mxu0 0.0
    %2248 = vmatpush1.msra.mxu0 0.0
    %2249 = vmatprep.subr.mxu0 0.0
    %2250 = vmatpush1.msra.mxu0 0.0
    %2251 = vmatprep.subr.mxu0 0.0
    %2252 = vmatpush1.msra.mxu0 0.0
    %2253 = vmatprep.subr.mxu0 0.0
    %2254 = vmatpush1.msra.mxu0 0.0
    %2255 = vmatprep.subr.mxu0 0.0
    %2256 = vmatpush1.msra.mxu0 0.0
    %2257 = vmatprep.subr.mxu0 0.0
    %2258 = vmatpush1.msra.mxu0 0.0
    %2259 = vmatprep.subr.mxu0 0.0
    %2260 = vmatpush1.msra.mxu0 0.0
    %2261 = vmatprep.mubr.f32.mxu0 0.0
    %2262 = vmatmul.mubr.f32.gmra.mrb[0].mxu0 %v2026
    %v2263 = vpop.f32.mrb[0].mxu0
    %v2264 = vadd.f32 0.0, %v2263
    %v2265 = vpop.f32.mrb[0].mxu0
    %2266 = vdwg.mxu0
    %2267 = vmatprep.subr.mxu0 0.0
    %2268 = vmatpush1.msra.mxu0 %v279
    %2269 = vmatprep.subr.mxu0 0.0
    %2270 = vmatpush1.msra.mxu0 %v280
    %2271 = vmatprep.subr.mxu0 0.0
    %2272 = vmatpush1.msra.mxu0 %v281
    %2273 = vmatprep.subr.mxu0 0.0
    %2274 = vmatpush1.msra.mxu0 %v282
    %2275 = vmatprep.subr.mxu0 0.0
    %2276 = vmatpush1.msra.mxu0 0.0
    %2277 = vmatprep.subr.mxu0 0.0
    %2278 = vmatpush1.msra.mxu0 0.0
    %2279 = vmatprep.subr.mxu0 0.0
    %2280 = vmatpush1.msra.mxu0 0.0
    %2281 = vmatprep.subr.mxu0 0.0
    %2282 = vmatpush1.msra.mxu0 0.0
    %2283 = vmatprep.subr.mxu0 0.0
    %2284 = vmatpush1.msra.mxu0 0.0
    %2285 = vmatprep.subr.mxu0 0.0
    %2286 = vmatpush1.msra.mxu0 0.0
    %2287 = vmatprep.subr.mxu0 0.0
    %2288 = vmatpush1.msra.mxu0 0.0
    %2289 = vmatprep.subr.mxu0 0.0
    %2290 = vmatpush1.msra.mxu0 0.0
    %2291 = vmatprep.subr.mxu0 0.0
    %2292 = vmatpush1.msra.mxu0 0.0
    %2293 = vmatprep.subr.mxu0 0.0
    %2294 = vmatpush1.msra.mxu0 0.0
    %2295 = vmatprep.subr.mxu0 0.0
    %2296 = vmatpush1.msra.mxu0 0.0
    %2297 = vmatprep.subr.mxu0 0.0
    %2298 = vmatpush1.msra.mxu0 0.0
    %2299 = vmatprep.subr.mxu0 0.0
    %2300 = vmatpush1.msra.mxu0 0.0
    %2301 = vmatprep.subr.mxu0 0.0
    %2302 = vmatpush1.msra.mxu0 0.0
    %2303 = vmatprep.subr.mxu0 0.0
    %2304 = vmatpush1.msra.mxu0 0.0
    %2305 = vmatprep.subr.mxu0 0.0
    %2306 = vmatpush1.msra.mxu0 0.0
    %2307 = vmatprep.subr.mxu0 0.0
    %2308 = vmatpush1.msra.mxu0 0.0
    %2309 = vmatprep.subr.mxu0 0.0
    %2310 = vmatpush1.msra.mxu0 0.0
    %2311 = vmatprep.subr.mxu0 0.0
    %2312 = vmatpush1.msra.mxu0 0.0
    %2313 = vmatprep.subr.mxu0 0.0
    %2314 = vmatpush1.msra.mxu0 0.0
    %2315 = vmatprep.subr.mxu0 0.0
    %2316 = vmatpush1.msra.mxu0 0.0
    %2317 = vmatprep.subr.mxu0 0.0
    %2318 = vmatpush1.msra.mxu0 0.0
    %2319 = vmatprep.subr.mxu0 0.0
    %2320 = vmatpush1.msra.mxu0 0.0
    %2321 = vmatprep.subr.mxu0 0.0
    %2322 = vmatpush1.msra.mxu0 0.0
    %2323 = vmatprep.subr.mxu0 0.0
    %2324 = vmatpush1.msra.mxu0 0.0
    %2325 = vmatprep.subr.mxu0 0.0
    %2326 = vmatpush1.msra.mxu0 0.0
    %2327 = vmatprep.subr.mxu0 0.0
    %2328 = vmatpush1.msra.mxu0 0.0
    %2329 = vmatprep.subr.mxu0 0.0
    %2330 = vmatpush1.msra.mxu0 0.0
    %2331 = vmatprep.mubr.f32.mxu0 0.0
    %2332 = vmatmul.mubr.f32.gmra.mrb[0].mxu0 %v2102
    %v2333 = vpop.f32.mrb[0].mxu0
    %v2334 = vadd.f32 %v2264, %v2333
    %v2335 = vpop.f32.mrb[0].mxu0
    %2336 = vdwg.mxu0
    %v2337 = vadd.f32 %v2334, %v640
    %v2338 = vmul.f32 %v2337, 0.5
    %v2339 = vtanh.pop %v2338
    %v2340 = vmul.f32 %v2339, 0.5
    %v2341 = vadd.f32 %v2340, 0.5
    %v2342 = vtanh.pop %v2337
    %v2343 = vmul.f32 %v2341, %v2016
    %2345 = vrot.lane.b32.xlu0 %v2342, 64
    %v2346 = vpop.permute.xlu0 %2345
    %v2348 = vmul.f32 %v2341, %v2346
    %2350 = vrot.lane.b32.xlu0 %v2348, 32
    %v2351 = vpop.permute.xlu0 %2350
    %v2353 = vadd.f32 %v2343, %v2351
    %v2354 = vtanh.pop %v2353
    %2356 = vrot.lane.b32.xlu0 %v2354, 64
    %v2357 = vpop.permute.xlu0 %2356
    %v2359 = vmul.f32 %v2341, %v2357
    %2361 = vrot.lane.b32.xlu0 %v2359, 32
    %v2362 = vpop.permute.xlu0 %2361
    %v2363 = vsel %vm294, %v2362, 0
    %2365 = vmatprep.subr.mxu0 0.0
    %2366 = vmatpush1.msra.mxu0 %v274
    %2367 = vmatprep.subr.mxu0 0.0
    %2368 = vmatpush1.msra.mxu0 %v275
    %2369 = vmatprep.subr.mxu0 0.0
    %2370 = vmatpush1.msra.mxu0 %v276
    %2371 = vmatprep.subr.mxu0 0.0
    %2372 = vmatpush1.msra.mxu0 %v277
    %2373 = vmatprep.subr.mxu0 0.0
    %2374 = vmatpush1.msra.mxu0 0.0
    %2375 = vmatprep.subr.mxu0 0.0
    %2376 = vmatpush1.msra.mxu0 0.0
    %2377 = vmatprep.subr.mxu0 0.0
    %2378 = vmatpush1.msra.mxu0 0.0
    %2379 = vmatprep.subr.mxu0 0.0
    %2380 = vmatpush1.msra.mxu0 0.0
    %2381 = vmatprep.subr.mxu0 0.0
    %2382 = vmatpush1.msra.mxu0 0.0
    %2383 = vmatprep.subr.mxu0 0.0
    %2384 = vmatpush1.msra.mxu0 0.0
    %2385 = vmatprep.subr.mxu0 0.0
    %2386 = vmatpush1.msra.mxu0 0.0
    %2387 = vmatprep.subr.mxu0 0.0
    %2388 = vmatpush1.msra.mxu0 0.0
    %2389 = vmatprep.subr.mxu0 0.0
    %2390 = vmatpush1.msra.mxu0 0.0
    %2391 = vmatprep.subr.mxu0 0.0
    %2392 = vmatpush1.msra.mxu0 0.0
    %2393 = vmatprep.subr.mxu0 0.0
    %2394 = vmatpush1.msra.mxu0 0.0
    %2395 = vmatprep.subr.mxu0 0.0
    %2396 = vmatpush1.msra.mxu0 0.0
    %2397 = vmatprep.subr.mxu0 0.0
    %2398 = vmatpush1.msra.mxu0 0.0
    %2399 = vmatprep.subr.mxu0 0.0
    %2400 = vmatpush1.msra.mxu0 0.0
    %2401 = vmatprep.subr.mxu0 0.0
    %2402 = vmatpush1.msra.mxu0 0.0
    %2403 = vmatprep.subr.mxu0 0.0
    %2404 = vmatpush1.msra.mxu0 0.0
    %2405 = vmatprep.subr.mxu0 0.0
    %2406 = vmatpush1.msra.mxu0 0.0
    %2407 = vmatprep.subr.mxu0 0.0
    %2408 = vmatpush1.msra.mxu0 0.0
    %2409 = vmatprep.subr.mxu0 0.0
    %2410 = vmatpush1.msra.mxu0 0.0
    %2411 = vmatprep.subr.mxu0 0.0
    %2412 = vmatpush1.msra.mxu0 0.0
    %2413 = vmatprep.subr.mxu0 0.0
    %2414 = vmatpush1.msra.mxu0 0.0
    %2415 = vmatprep.subr.mxu0 0.0
    %2416 = vmatpush1.msra.mxu0 0.0
    %2417 = vmatprep.subr.mxu0 0.0
    %2418 = vmatpush1.msra.mxu0 0.0
    %2419 = vmatprep.subr.mxu0 0.0
    %2420 = vmatpush1.msra.mxu0 0.0
    %2421 = vmatprep.subr.mxu0 0.0
    %2422 = vmatpush1.msra.mxu0 0.0
    %2423 = vmatprep.subr.mxu0 0.0
    %2424 = vmatpush1.msra.mxu0 0.0
    %2425 = vmatprep.subr.mxu0 0.0
    %2426 = vmatpush1.msra.mxu0 0.0
    %2427 = vmatprep.subr.mxu0 0.0
    %2428 = vmatpush1.msra.mxu0 0.0
    %2429 = vmatprep.mubr.f32.mxu0 0.0
    %2430 = vmatmul.mubr.f32.gmra.mrb[0].mxu0 %v2363
    %v2431 = vpop.f32.mrb[0].mxu0
    %v2432 = vadd.f32 %v673, %v2431
    %v2433 = vpop.f32.mrb[0].mxu0
    %2434 = vdwg.mxu0
    %2435 = vst [vmem:[%s10 + $0x28] sm:$0xff] %v2432
    %2437 = vrot.lane.b32.xlu0 %v2196, 32
    %v2438 = vpop.permute.xlu0 %2437
    %v2439 = vsel %vm294, %v2438, 0
    %2441 = vmatprep.subr.mxu0 0.0
    %2442 = vmatpush1.msra.mxu0 %v270
    %2443 = vmatprep.subr.mxu0 0.0
    %2444 = vmatpush1.msra.mxu0 %v271
    %2445 = vmatprep.subr.mxu0 0.0
    %2446 = vmatpush1.msra.mxu0 %v272
    %2447 = vmatprep.subr.mxu0 0.0
    %2448 = vmatpush1.msra.mxu0 %v273
    %2449 = vmatprep.subr.mxu0 0.0
    %2450 = vmatpush1.msra.mxu0 0.0
    %2451 = vmatprep.subr.mxu0 0.0
    %2452 = vmatpush1.msra.mxu0 0.0
    %2453 = vmatprep.subr.mxu0 0.0
    %2454 = vmatpush1.msra.mxu0 0.0
    %2455 = vmatprep.subr.mxu0 0.0
    %2456 = vmatpush1.msra.mxu0 0.0
    %2457 = vmatprep.subr.mxu0 0.0
    %2458 = vmatpush1.msra.mxu0 0.0
    %2459 = vmatprep.subr.mxu0 0.0
    %2460 = vmatpush1.msra.mxu0 0.0
    %2461 = vmatprep.subr.mxu0 0.0
    %2462 = vmatpush1.msra.mxu0 0.0
    %2463 = vmatprep.subr.mxu0 0.0
    %2464 = vmatpush1.msra.mxu0 0.0
    %2465 = vmatprep.subr.mxu0 0.0
    %2466 = vmatpush1.msra.mxu0 0.0
    %2467 = vmatprep.subr.mxu0 0.0
    %2468 = vmatpush1.msra.mxu0 0.0
    %2469 = vmatprep.subr.mxu0 0.0
    %2470 = vmatpush1.msra.mxu0 0.0
    %2471 = vmatprep.subr.mxu0 0.0
    %2472 = vmatpush1.msra.mxu0 0.0
    %2473 = vmatprep.subr.mxu0 0.0
    %2474 = vmatpush1.msra.mxu0 0.0
    %2475 = vmatprep.subr.mxu0 0.0
    %2476 = vmatpush1.msra.mxu0 0.0
    %2477 = vmatprep.subr.mxu0 0.0
    %2478 = vmatpush1.msra.mxu0 0.0
    %2479 = vmatprep.subr.mxu0 0.0
    %2480 = vmatpush1.msra.mxu0 0.0
    %2481 = vmatprep.subr.mxu0 0.0
    %2482 = vmatpush1.msra.mxu0 0.0
    %2483 = vmatprep.subr.mxu0 0.0
    %2484 = vmatpush1.msra.mxu0 0.0
    %2485 = vmatprep.subr.mxu0 0.0
    %2486 = vmatpush1.msra.mxu0 0.0
    %2487 = vmatprep.subr.mxu0 0.0
    %2488 = vmatpush1.msra.mxu0 0.0
    %2489 = vmatprep.subr.mxu0 0.0
    %2490 = vmatpush1.msra.mxu0 0.0
    %2491 = vmatprep.subr.mxu0 0.0
    %2492 = vmatpush1.msra.mxu0 0.0
    %2493 = vmatprep.subr.mxu0 0.0
    %2494 = vmatpush1.msra.mxu0 0.0
    %2495 = vmatprep.subr.mxu0 0.0
    %2496 = vmatpush1.msra.mxu0 0.0
    %2497 = vmatprep.subr.mxu0 0.0
    %2498 = vmatpush1.msra.mxu0 0.0
    %2499 = vmatprep.subr.mxu0 0.0
    %2500 = vmatpush1.msra.mxu0 0.0
    %2501 = vmatprep.subr.mxu0 0.0
    %2502 = vmatpush1.msra.mxu0 0.0
    %2503 = vmatprep.subr.mxu0 0.0
    %2504 = vmatpush1.msra.mxu0 0.0
    %2505 = vmatprep.mubr.f32.mxu0 0.0
    %2506 = vmatmul.mubr.f32.gmra.mrb[0].mxu0 %v2439
    %v2507 = vpop.f32.mrb[0].mxu0
    %v2508 = vadd.f32 0.0, %v2507
    %v2509 = vpop.f32.mrb[0].mxu0
    %2510 = vdwg.mxu0
    %v2511 = vadd.f32 %v267, %v2508
    %v2512 = vmul.f32 %v2511, 0.5
    %v2513 = vtanh.pop %v2512
    %v2514 = vmul.f32 %v2513, 0.5
    %v2515 = vadd.f32 %v2514, 0.5
    %v2516 = vtanh.pop %v2511
    %v2517 = vmul.f32 %v2515, %v2190
    %2519 = vrot.lane.b32.xlu0 %v2516, 64
    %v2520 = vpop.permute.xlu0 %2519
    %v2522 = vmul.f32 %v2515, %v2520
    %2524 = vrot.lane.b32.xlu0 %v2522, 32
    %v2525 = vpop.permute.xlu0 %2524
    %v2527 = vadd.f32 %v2517, %v2525
    %v2528 = vtanh.pop %v2527
    %2530 = vrot.lane.b32.xlu0 %v2528, 64
    %v2531 = vpop.permute.xlu0 %2530
    %v2533 = vmul.f32 %v2515, %v2531
    %2534 = vmatprep.subr.mxu0 0.0
    %2535 = vmatpush1.msra.mxu0 %v283
    %2536 = vmatprep.subr.mxu0 0.0
    %2537 = vmatpush1.msra.mxu0 %v284
    %2538 = vmatprep.subr.mxu0 0.0
    %2539 = vmatpush1.msra.mxu0 %v285
    %2540 = vmatprep.subr.mxu0 0.0
    %2541 = vmatpush1.msra.mxu0 %v286
    %2542 = vmatprep.subr.mxu0 0.0
    %2543 = vmatpush1.msra.mxu0 0.0
    %2544 = vmatprep.subr.mxu0 0.0
    %2545 = vmatpush1.msra.mxu0 0.0
    %2546 = vmatprep.subr.mxu0 0.0
    %2547 = vmatpush1.msra.mxu0 0.0
    %2548 = vmatprep.subr.mxu0 0.0
    %2549 = vmatpush1.msra.mxu0 0.0
    %2550 = vmatprep.subr.mxu0 0.0
    %2551 = vmatpush1.msra.mxu0 0.0
    %2552 = vmatprep.subr.mxu0 0.0
    %2553 = vmatpush1.msra.mxu0 0.0
    %2554 = vmatprep.subr.mxu0 0.0
    %2555 = vmatpush1.msra.mxu0 0.0
    %2556 = vmatprep.subr.mxu0 0.0
    %2557 = vmatpush1.msra.mxu0 0.0
    %2558 = vmatprep.subr.mxu0 0.0
    %2559 = vmatpush1.msra.mxu0 0.0
    %2560 = vmatprep.subr.mxu0 0.0
    %2561 = vmatpush1.msra.mxu0 0.0
    %2562 = vmatprep.subr.mxu0 0.0
    %2563 = vmatpush1.msra.mxu0 0.0
    %2564 = vmatprep.subr.mxu0 0.0
    %2565 = vmatpush1.msra.mxu0 0.0
    %2566 = vmatprep.subr.mxu0 0.0
    %2567 = vmatpush1.msra.mxu0 0.0
    %2568 = vmatprep.subr.mxu0 0.0
    %2569 = vmatpush1.msra.mxu0 0.0
    %2570 = vmatprep.subr.mxu0 0.0
    %2571 = vmatpush1.msra.mxu0 0.0
    %2572 = vmatprep.subr.mxu0 0.0
    %2573 = vmatpush1.msra.mxu0 0.0
    %2574 = vmatprep.subr.mxu0 0.0
    %2575 = vmatpush1.msra.mxu0 0.0
    %2576 = vmatprep.subr.mxu0 0.0
    %2577 = vmatpush1.msra.mxu0 0.0
    %2578 = vmatprep.subr.mxu0 0.0
    %2579 = vmatpush1.msra.mxu0 0.0
    %2580 = vmatprep.subr.mxu0 0.0
    %2581 = vmatpush1.msra.mxu0 0.0
    %2582 = vmatprep.subr.mxu0 0.0
    %2583 = vmatpush1.msra.mxu0 0.0
    %2584 = vmatprep.subr.mxu0 0.0
    %2585 = vmatpush1.msra.mxu0 0.0
    %2586 = vmatprep.subr.mxu0 0.0
    %2587 = vmatpush1.msra.mxu0 0.0
    %2588 = vmatprep.subr.mxu0 0.0
    %2589 = vmatpush1.msra.mxu0 0.0
    %2590 = vmatprep.subr.mxu0 0.0
    %2591 = vmatpush1.msra.mxu0 0.0
    %2592 = vmatprep.subr.mxu0 0.0
    %2593 = vmatpush1.msra.mxu0 0.0
    %2594 = vmatprep.subr.mxu0 0.0
    %2595 = vmatpush1.msra.mxu0 0.0
    %2596 = vmatprep.subr.mxu0 0.0
    %2597 = vmatpush1.msra.mxu0 0.0
    %2598 = vmatprep.mubr.f32.mxu0 0.0
    %2599 = vmatmul.mubr.f32.gmra.mrb[0].mxu0 %v2363
    %v2600 = vpop.f32.mrb[0].mxu0
    %v2601 = vadd.f32 0.0, %v2600
    %v2602 = vpop.f32.mrb[0].mxu0
    %2603 = vdwg.mxu0
    %2604 = vmatprep.subr.mxu0 0.0
    %2605 = vmatpush1.msra.mxu0 %v279
    %2606 = vmatprep.subr.mxu0 0.0
    %2607 = vmatpush1.msra.mxu0 %v280
    %2608 = vmatprep.subr.mxu0 0.0
    %2609 = vmatpush1.msra.mxu0 %v281
    %2610 = vmatprep.subr.mxu0 0.0
    %2611 = vmatpush1.msra.mxu0 %v282
    %2612 = vmatprep.subr.mxu0 0.0
    %2613 = vmatpush1.msra.mxu0 0.0
    %2614 = vmatprep.subr.mxu0 0.0
    %2615 = vmatpush1.msra.mxu0 0.0
    %2616 = vmatprep.subr.mxu0 0.0
    %2617 = vmatpush1.msra.mxu0 0.0
    %2618 = vmatprep.subr.mxu0 0.0
    %2619 = vmatpush1.msra.mxu0 0.0
    %2620 = vmatprep.subr.mxu0 0.0
    %2621 = vmatpush1.msra.mxu0 0.0
    %2622 = vmatprep.subr.mxu0 0.0
    %2623 = vmatpush1.msra.mxu0 0.0
    %2624 = vmatprep.subr.mxu0 0.0
    %2625 = vmatpush1.msra.mxu0 0.0
    %2626 = vmatprep.subr.mxu0 0.0
    %2627 = vmatpush1.msra.mxu0 0.0
    %2628 = vmatprep.subr.mxu0 0.0
    %2629 = vmatpush1.msra.mxu0 0.0
    %2630 = vmatprep.subr.mxu0 0.0
    %2631 = vmatpush1.msra.mxu0 0.0
    %2632 = vmatprep.subr.mxu0 0.0
    %2633 = vmatpush1.msra.mxu0 0.0
    %2634 = vmatprep.subr.mxu0 0.0
    %2635 = vmatpush1.msra.mxu0 0.0
    %2636 = vmatprep.subr.mxu0 0.0
    %2637 = vmatpush1.msra.mxu0 0.0
    %2638 = vmatprep.subr.mxu0 0.0
    %2639 = vmatpush1.msra.mxu0 0.0
    %2640 = vmatprep.subr.mxu0 0.0
    %2641 = vmatpush1.msra.mxu0 0.0
    %2642 = vmatprep.subr.mxu0 0.0
    %2643 = vmatpush1.msra.mxu0 0.0
    %2644 = vmatprep.subr.mxu0 0.0
    %2645 = vmatpush1.msra.mxu0 0.0
    %2646 = vmatprep.subr.mxu0 0.0
    %2647 = vmatpush1.msra.mxu0 0.0
    %2648 = vmatprep.subr.mxu0 0.0
    %2649 = vmatpush1.msra.mxu0 0.0
    %2650 = vmatprep.subr.mxu0 0.0
    %2651 = vmatpush1.msra.mxu0 0.0
    %2652 = vmatprep.subr.mxu0 0.0
    %2653 = vmatpush1.msra.mxu0 0.0
    %2654 = vmatprep.subr.mxu0 0.0
    %2655 = vmatpush1.msra.mxu0 0.0
    %2656 = vmatprep.subr.mxu0 0.0
    %2657 = vmatpush1.msra.mxu0 0.0
    %2658 = vmatprep.subr.mxu0 0.0
    %2659 = vmatpush1.msra.mxu0 0.0
    %2660 = vmatprep.subr.mxu0 0.0
    %2661 = vmatpush1.msra.mxu0 0.0
    %2662 = vmatprep.subr.mxu0 0.0
    %2663 = vmatpush1.msra.mxu0 0.0
    %2664 = vmatprep.subr.mxu0 0.0
    %2665 = vmatpush1.msra.mxu0 0.0
    %2666 = vmatprep.subr.mxu0 0.0
    %2667 = vmatpush1.msra.mxu0 0.0
    %2668 = vmatprep.mubr.f32.mxu0 0.0
    %2669 = vmatmul.mubr.f32.gmra.mrb[0].mxu0 %v2439
    %v2670 = vpop.f32.mrb[0].mxu0
    %v2671 = vadd.f32 %v2601, %v2670
    %v2672 = vpop.f32.mrb[0].mxu0
    %2673 = vdwg.mxu0
    %v2674 = vadd.f32 %v2671, %v640
    %v2675 = vmul.f32 %v2674, 0.5
    %v2676 = vtanh.pop %v2675
    %v2677 = vmul.f32 %v2676, 0.5
    %v2678 = vadd.f32 %v2677, 0.5
    %v2679 = vtanh.pop %v2674
    %v2680 = vmul.f32 %v2678, %v2353
    %2682 = vrot.lane.b32.xlu0 %v2679, 64
    %v2683 = vpop.permute.xlu0 %2682
    %v2685 = vmul.f32 %v2678, %v2683
    %2687 = vrot.lane.b32.xlu0 %v2685, 32
    %v2688 = vpop.permute.xlu0 %2687
    %v2690 = vadd.f32 %v2680, %v2688
    %v2691 = vtanh.pop %v2690
    %2693 = vrot.lane.b32.xlu0 %v2691, 64
    %v2694 = vpop.permute.xlu0 %2693
    %v2696 = vmul.f32 %v2678, %v2694
    %2698 = vrot.lane.b32.xlu0 %v2696, 32
    %v2699 = vpop.permute.xlu0 %2698
    %v2700 = vsel %vm294, %v2699, 0
    %2702 = vmatprep.subr.mxu0 0.0
    %2703 = vmatpush1.msra.mxu0 %v274
    %2704 = vmatprep.subr.mxu0 0.0
    %2705 = vmatpush1.msra.mxu0 %v275
    %2706 = vmatprep.subr.mxu0 0.0
    %2707 = vmatpush1.msra.mxu0 %v276
    %2708 = vmatprep.subr.mxu0 0.0
    %2709 = vmatpush1.msra.mxu0 %v277
    %2710 = vmatprep.subr.mxu0 0.0
    %2711 = vmatpush1.msra.mxu0 0.0
    %2712 = vmatprep.subr.mxu0 0.0
    %2713 = vmatpush1.msra.mxu0 0.0
    %2714 = vmatprep.subr.mxu0 0.0
    %2715 = vmatpush1.msra.mxu0 0.0
    %2716 = vmatprep.subr.mxu0 0.0
    %2717 = vmatpush1.msra.mxu0 0.0
    %2718 = vmatprep.subr.mxu0 0.0
    %2719 = vmatpush1.msra.mxu0 0.0
    %2720 = vmatprep.subr.mxu0 0.0
    %2721 = vmatpush1.msra.mxu0 0.0
    %2722 = vmatprep.subr.mxu0 0.0
    %2723 = vmatpush1.msra.mxu0 0.0
    %2724 = vmatprep.subr.mxu0 0.0
    %2725 = vmatpush1.msra.mxu0 0.0
    %2726 = vmatprep.subr.mxu0 0.0
    %2727 = vmatpush1.msra.mxu0 0.0
    %2728 = vmatprep.subr.mxu0 0.0
    %2729 = vmatpush1.msra.mxu0 0.0
    %2730 = vmatprep.subr.mxu0 0.0
    %2731 = vmatpush1.msra.mxu0 0.0
    %2732 = vmatprep.subr.mxu0 0.0
    %2733 = vmatpush1.msra.mxu0 0.0
    %2734 = vmatprep.subr.mxu0 0.0
    %2735 = vmatpush1.msra.mxu0 0.0
    %2736 = vmatprep.subr.mxu0 0.0
    %2737 = vmatpush1.msra.mxu0 0.0
    %2738 = vmatprep.subr.mxu0 0.0
    %2739 = vmatpush1.msra.mxu0 0.0
    %2740 = vmatprep.subr.mxu0 0.0
    %2741 = vmatpush1.msra.mxu0 0.0
    %2742 = vmatprep.subr.mxu0 0.0
    %2743 = vmatpush1.msra.mxu0 0.0
    %2744 = vmatprep.subr.mxu0 0.0
    %2745 = vmatpush1.msra.mxu0 0.0
    %2746 = vmatprep.subr.mxu0 0.0
    %2747 = vmatpush1.msra.mxu0 0.0
    %2748 = vmatprep.subr.mxu0 0.0
    %2749 = vmatpush1.msra.mxu0 0.0
    %2750 = vmatprep.subr.mxu0 0.0
    %2751 = vmatpush1.msra.mxu0 0.0
    %2752 = vmatprep.subr.mxu0 0.0
    %2753 = vmatpush1.msra.mxu0 0.0
    %2754 = vmatprep.subr.mxu0 0.0
    %2755 = vmatpush1.msra.mxu0 0.0
    %2756 = vmatprep.subr.mxu0 0.0
    %2757 = vmatpush1.msra.mxu0 0.0
    %2758 = vmatprep.subr.mxu0 0.0
    %2759 = vmatpush1.msra.mxu0 0.0
    %2760 = vmatprep.subr.mxu0 0.0
    %2761 = vmatpush1.msra.mxu0 0.0
    %2762 = vmatprep.subr.mxu0 0.0
    %2763 = vmatpush1.msra.mxu0 0.0
    %2764 = vmatprep.subr.mxu0 0.0
    %2765 = vmatpush1.msra.mxu0 0.0
    %2766 = vmatprep.mubr.f32.mxu0 0.0
    %2767 = vmatmul.mubr.f32.gmra.mrb[0].mxu0 %v2700
    %v2768 = vpop.f32.mrb[0].mxu0
    %v2769 = vadd.f32 %v673, %v2768
    %v2770 = vpop.f32.mrb[0].mxu0
    %2771 = vdwg.mxu0
    %2772 = vst [vmem:[%s10 + $0x30] sm:$0xff] %v2769
    %2773 = vmatprep.subr.mxu0 0.0
    %2774 = vmatpush1.msra.mxu0 %v283
    %2775 = vmatprep.subr.mxu0 0.0
    %2776 = vmatpush1.msra.mxu0 %v284
    %2777 = vmatprep.subr.mxu0 0.0
    %2778 = vmatpush1.msra.mxu0 %v285
    %2779 = vmatprep.subr.mxu0 0.0
    %2780 = vmatpush1.msra.mxu0 %v286
    %2781 = vmatprep.subr.mxu0 0.0
    %2782 = vmatpush1.msra.mxu0 0.0
    %2783 = vmatprep.subr.mxu0 0.0
    %2784 = vmatpush1.msra.mxu0 0.0
    %2785 = vmatprep.subr.mxu0 0.0
    %2786 = vmatpush1.msra.mxu0 0.0
    %2787 = vmatprep.subr.mxu0 0.0
    %2788 = vmatpush1.msra.mxu0 0.0
    %2789 = vmatprep.subr.mxu0 0.0
    %2790 = vmatpush1.msra.mxu0 0.0
    %2791 = vmatprep.subr.mxu0 0.0
    %2792 = vmatpush1.msra.mxu0 0.0
    %2793 = vmatprep.subr.mxu0 0.0
    %2794 = vmatpush1.msra.mxu0 0.0
    %2795 = vmatprep.subr.mxu0 0.0
    %2796 = vmatpush1.msra.mxu0 0.0
    %2797 = vmatprep.subr.mxu0 0.0
    %2798 = vmatpush1.msra.mxu0 0.0
    %2799 = vmatprep.subr.mxu0 0.0
    %2800 = vmatpush1.msra.mxu0 0.0
    %2801 = vmatprep.subr.mxu0 0.0
    %2802 = vmatpush1.msra.mxu0 0.0
    %2803 = vmatprep.subr.mxu0 0.0
    %2804 = vmatpush1.msra.mxu0 0.0
    %2805 = vmatprep.subr.mxu0 0.0
    %2806 = vmatpush1.msra.mxu0 0.0
    %2807 = vmatprep.subr.mxu0 0.0
    %2808 = vmatpush1.msra.mxu0 0.0
    %2809 = vmatprep.subr.mxu0 0.0
    %2810 = vmatpush1.msra.mxu0 0.0
    %2811 = vmatprep.subr.mxu0 0.0
    %2812 = vmatpush1.msra.mxu0 0.0
    %2813 = vmatprep.subr.mxu0 0.0
    %2814 = vmatpush1.msra.mxu0 0.0
    %2815 = vmatprep.subr.mxu0 0.0
    %2816 = vmatpush1.msra.mxu0 0.0
    %2817 = vmatprep.subr.mxu0 0.0
    %2818 = vmatpush1.msra.mxu0 0.0
    %2819 = vmatprep.subr.mxu0 0.0
    %2820 = vmatpush1.msra.mxu0 0.0
    %2821 = vmatprep.subr.mxu0 0.0
    %2822 = vmatpush1.msra.mxu0 0.0
    %2823 = vmatprep.subr.mxu0 0.0
    %2824 = vmatpush1.msra.mxu0 0.0
    %2825 = vmatprep.subr.mxu0 0.0
    %2826 = vmatpush1.msra.mxu0 0.0
    %2827 = vmatprep.subr.mxu0 0.0
    %2828 = vmatpush1.msra.mxu0 0.0
    %2829 = vmatprep.subr.mxu0 0.0
    %2830 = vmatpush1.msra.mxu0 0.0
    %2831 = vmatprep.subr.mxu0 0.0
    %2832 = vmatpush1.msra.mxu0 0.0
    %2833 = vmatprep.subr.mxu0 0.0
    %2834 = vmatpush1.msra.mxu0 0.0
    %2835 = vmatprep.subr.mxu0 0.0
    %2836 = vmatpush1.msra.mxu0 0.0
    %2837 = vmatprep.mubr.f32.mxu0 0.0
    %2838 = vmatmul.mubr.f32.gmra.mrb[0].mxu0 %v2700
    %v2839 = vpop.f32.mrb[0].mxu0
    %v2840 = vadd.f32 0.0, %v2839
    %v2841 = vpop.f32.mrb[0].mxu0
    %2842 = vdwg.mxu0
    %2844 = vrot.lane.b32.xlu0 %v2533, 32
    %v2845 = vpop.permute.xlu0 %2844
    %v2846 = vsel %vm294, %v2845, 0
    %2848 = vmatprep.subr.mxu0 0.0
    %2849 = vmatpush1.msra.mxu0 %v279
    %2850 = vmatprep.subr.mxu0 0.0
    %2851 = vmatpush1.msra.mxu0 %v280
    %2852 = vmatprep.subr.mxu0 0.0
    %2853 = vmatpush1.msra.mxu0 %v281
    %2854 = vmatprep.subr.mxu0 0.0
    %2855 = vmatpush1.msra.mxu0 %v282
    %2856 = vmatprep.subr.mxu0 0.0
    %2857 = vmatpush1.msra.mxu0 0.0
    %2858 = vmatprep.subr.mxu0 0.0
    %2859 = vmatpush1.msra.mxu0 0.0
    %2860 = vmatprep.subr.mxu0 0.0
    %2861 = vmatpush1.msra.mxu0 0.0
    %2862 = vmatprep.subr.mxu0 0.0
    %2863 = vmatpush1.msra.mxu0 0.0
    %2864 = vmatprep.subr.mxu0 0.0
    %2865 = vmatpush1.msra.mxu0 0.0
    %2866 = vmatprep.subr.mxu0 0.0
    %2867 = vmatpush1.msra.mxu0 0.0
    %2868 = vmatprep.subr.mxu0 0.0
    %2869 = vmatpush1.msra.mxu0 0.0
    %2870 = vmatprep.subr.mxu0 0.0
    %2871 = vmatpush1.msra.mxu0 0.0
    %2872 = vmatprep.subr.mxu0 0.0
    %2873 = vmatpush1.msra.mxu0 0.0
    %2874 = vmatprep.subr.mxu0 0.0
    %2875 = vmatpush1.msra.mxu0 0.0
    %2876 = vmatprep.subr.mxu0 0.0
    %2877 = vmatpush1.msra.mxu0 0.0
    %2878 = vmatprep.subr.mxu0 0.0
    %2879 = vmatpush1.msra.mxu0 0.0
    %2880 = vmatprep.subr.mxu0 0.0
    %2881 = vmatpush1.msra.mxu0 0.0
    %2882 = vmatprep.subr.mxu0 0.0
    %2883 = vmatpush1.msra.mxu0 0.0
    %2884 = vmatprep.subr.mxu0 0.0
    %2885 = vmatpush1.msra.mxu0 0.0
    %2886 = vmatprep.subr.mxu0 0.0
    %2887 = vmatpush1.msra.mxu0 0.0
    %2888 = vmatprep.subr.mxu0 0.0
    %2889 = vmatpush1.msra.mxu0 0.0
    %2890 = vmatprep.subr.mxu0 0.0
    %2891 = vmatpush1.msra.mxu0 0.0
    %2892 = vmatprep.subr.mxu0 0.0
    %2893 = vmatpush1.msra.mxu0 0.0
    %2894 = vmatprep.subr.mxu0 0.0
    %2895 = vmatpush1.msra.mxu0 0.0
    %2896 = vmatprep.subr.mxu0 0.0
    %2897 = vmatpush1.msra.mxu0 0.0
    %2898 = vmatprep.subr.mxu0 0.0
    %2899 = vmatpush1.msra.mxu0 0.0
    %2900 = vmatprep.subr.mxu0 0.0
    %2901 = vmatpush1.msra.mxu0 0.0
    %2902 = vmatprep.subr.mxu0 0.0
    %2903 = vmatpush1.msra.mxu0 0.0
    %2904 = vmatprep.subr.mxu0 0.0
    %2905 = vmatpush1.msra.mxu0 0.0
    %2906 = vmatprep.subr.mxu0 0.0
    %2907 = vmatpush1.msra.mxu0 0.0
    %2908 = vmatprep.subr.mxu0 0.0
    %2909 = vmatpush1.msra.mxu0 0.0
    %2910 = vmatprep.subr.mxu0 0.0
    %2911 = vmatpush1.msra.mxu0 0.0
    %2912 = vmatprep.mubr.f32.mxu0 0.0
    %2913 = vmatmul.mubr.f32.gmra.mrb[0].mxu0 %v2846
    %v2914 = vpop.f32.mrb[0].mxu0
    %v2915 = vadd.f32 %v2840, %v2914
    %v2916 = vpop.f32.mrb[0].mxu0
    %2917 = vdwg.mxu0
    %v2918 = vadd.f32 %v2915, %v640
    %v2919 = vmul.f32 %v2918, 0.5
    %v2920 = vtanh.pop %v2919
    %v2921 = vmul.f32 %v2920, 0.5
    %v2922 = vadd.f32 %v2921, 0.5
    %v2923 = vtanh.pop %v2918
    %v2924 = vmul.f32 %v2922, %v2690
    %2926 = vrot.lane.b32.xlu0 %v2923, 64
    %v2927 = vpop.permute.xlu0 %2926
    %v2929 = vmul.f32 %v2922, %v2927
    %2931 = vrot.lane.b32.xlu0 %v2929, 32
    %v2932 = vpop.permute.xlu0 %2931
    %v2934 = vadd.f32 %v2924, %v2932
    %v2935 = vtanh.pop %v2934
    %2937 = vrot.lane.b32.xlu0 %v2935, 64
    %v2938 = vpop.permute.xlu0 %2937
    %v2940 = vmul.f32 %v2922, %v2938
    %2942 = vrot.lane.b32.xlu0 %v2940, 32
    %v2943 = vpop.permute.xlu0 %2942
    %v2944 = vsel %vm294, %v2943, 0
    %2946 = vmatprep.subr.mxu0 0.0
    %2947 = vmatpush1.msra.mxu0 %v274
    %2948 = vmatprep.subr.mxu0 0.0
    %2949 = vmatpush1.msra.mxu0 %v275
    %2950 = vmatprep.subr.mxu0 0.0
    %2951 = vmatpush1.msra.mxu0 %v276
    %2952 = vmatprep.subr.mxu0 0.0
    %2953 = vmatpush1.msra.mxu0 %v277
    %2954 = vmatprep.subr.mxu0 0.0
    %2955 = vmatpush1.msra.mxu0 0.0
    %2956 = vmatprep.subr.mxu0 0.0
    %2957 = vmatpush1.msra.mxu0 0.0
    %2958 = vmatprep.subr.mxu0 0.0
    %2959 = vmatpush1.msra.mxu0 0.0
    %2960 = vmatprep.subr.mxu0 0.0
    %2961 = vmatpush1.msra.mxu0 0.0
    %2962 = vmatprep.subr.mxu0 0.0
    %2963 = vmatpush1.msra.mxu0 0.0
    %2964 = vmatprep.subr.mxu0 0.0
    %2965 = vmatpush1.msra.mxu0 0.0
    %2966 = vmatprep.subr.mxu0 0.0
    %2967 = vmatpush1.msra.mxu0 0.0
    %2968 = vmatprep.subr.mxu0 0.0
    %2969 = vmatpush1.msra.mxu0 0.0
    %2970 = vmatprep.subr.mxu0 0.0
    %2971 = vmatpush1.msra.mxu0 0.0
    %2972 = vmatprep.subr.mxu0 0.0
    %2973 = vmatpush1.msra.mxu0 0.0
    %2974 = vmatprep.subr.mxu0 0.0
    %2975 = vmatpush1.msra.mxu0 0.0
    %2976 = vmatprep.subr.mxu0 0.0
    %2977 = vmatpush1.msra.mxu0 0.0
    %2978 = vmatprep.subr.mxu0 0.0
    %2979 = vmatpush1.msra.mxu0 0.0
    %2980 = vmatprep.subr.mxu0 0.0
    %2981 = vmatpush1.msra.mxu0 0.0
    %2982 = vmatprep.subr.mxu0 0.0
    %2983 = vmatpush1.msra.mxu0 0.0
    %2984 = vmatprep.subr.mxu0 0.0
    %2985 = vmatpush1.msra.mxu0 0.0
    %2986 = vmatprep.subr.mxu0 0.0
    %2987 = vmatpush1.msra.mxu0 0.0
    %2988 = vmatprep.subr.mxu0 0.0
    %2989 = vmatpush1.msra.mxu0 0.0
    %2990 = vmatprep.subr.mxu0 0.0
    %2991 = vmatpush1.msra.mxu0 0.0
    %2992 = vmatprep.subr.mxu0 0.0
    %2993 = vmatpush1.msra.mxu0 0.0
    %2994 = vmatprep.subr.mxu0 0.0
    %2995 = vmatpush1.msra.mxu0 0.0
    %2996 = vmatprep.subr.mxu0 0.0
    %2997 = vmatpush1.msra.mxu0 0.0
    %2998 = vmatprep.subr.mxu0 0.0
    %2999 = vmatpush1.msra.mxu0 0.0
    %3000 = vmatprep.subr.mxu0 0.0
    %3001 = vmatpush1.msra.mxu0 0.0
    %3002 = vmatprep.subr.mxu0 0.0
    %3003 = vmatpush1.msra.mxu0 0.0
    %3004 = vmatprep.subr.mxu0 0.0
    %3005 = vmatpush1.msra.mxu0 0.0
    %3006 = vmatprep.subr.mxu0 0.0
    %3007 = vmatpush1.msra.mxu0 0.0
    %3008 = vmatprep.subr.mxu0 0.0
    %3009 = vmatpush1.msra.mxu0 0.0
    %3010 = vmatprep.mubr.f32.mxu0 0.0
    %3011 = vmatmul.mubr.f32.gmra.mrb[0].mxu0 %v2944
    %v3012 = vpop.f32.mrb[0].mxu0
    %v3013 = vadd.f32 %v673, %v3012
    %v3014 = vpop.f32.mrb[0].mxu0
    %3015 = vdwg.mxu0
    %3016 = vst [vmem:[%s10 + $0x38] sm:$0xff] %v3013
    %3018 = vst.msk [vmem:[%s11] sm:$0xff] %vm294, %v2845
    %3020 = vrot.lane.b32.xlu0 %v2527, 96
    %v3021 = vpop.permute.xlu0 %3020
    %3023 = vst.msk [vmem:[%s12] sm:$0xff] %vm294, %v3021
    %s3025 = scalar_lea.vmem %s11, 8
    %3026 = vst.msk [vmem:[%s3025] sm:$0xff] %vm294, %v2943
    %3028 = vrot.lane.b32.xlu0 %v2934, 96
    %v3029 = vpop.permute.xlu0 %3028
    %s3031 = scalar_lea.vmem %s12, 8
    %3032 = vst.msk [vmem:[%s3031] sm:$0xff] %vm294, %v3029
    // Predicated region
    $region58: #{rnn_model_forward.1} parent=1 // pred_check
      _
    $region59: #{rnn_model_forward.1} parent=1 // pred_check_branch
      %3034 = sbr.rel (0) target = $region61
    $region60: #{rnn_model_forward.1} parent=1 // pred_region
      _
    $region61: #{rnn_model_forward.1} parent=1 // pred_fallthru
      _
    // Predicated region
    $region62: #{rnn_model_forward.1} parent=1 // pred_check
      _
    $region63: #{rnn_model_forward.1} parent=1 // pred_check_branch
      %3036 = sbr.rel (0) target = $region65
    $region64: #{rnn_model_forward.1} parent=1 // pred_region
      _
    $region65: #{rnn_model_forward.1} parent=1 // pred_fallthru
      _
    // Predicated region
    $region66: #{rnn_model_forward.1} parent=1 // pred_check
      _
    $region67: #{rnn_model_forward.1} parent=1 // pred_check_branch
      %3038 = sbr.rel (0) target = $region69
    $region68: #{rnn_model_forward.1} parent=1 // pred_region
      _
    $region69: #{rnn_model_forward.1} parent=1 // pred_fallthru
      _
    // Predicated region
    $region70: #{rnn_model_forward.1} parent=1 // pred_check
      _
    $region71: #{rnn_model_forward.1} parent=1 // pred_check_branch
      %3040 = sbr.rel (0) target = $region73
    $region72: #{rnn_model_forward.1} parent=1 // pred_region
      _
    $region73: #{rnn_model_forward.1} parent=1 // pred_fallthru
      _
    // Predicated region
    $region74: #{rnn_model_forward.1} parent=1 // pred_check
      _
    $region75: #{rnn_model_forward.1} parent=1 // pred_check_branch
      %3042 = sbr.rel (0) target = $region77
    $region76: #{rnn_model_forward.1} parent=1 // pred_region
      _
    $region77: #{rnn_model_forward.1} parent=1 // pred_fallthru
      _
    // Predicated region
    $region78: #{rnn_model_forward.1} parent=1 // pred_check
      _
    $region79: #{rnn_model_forward.1} parent=1 // pred_check_branch
      %3044 = sbr.rel (0) target = $region81
    $region80: #{rnn_model_forward.1} parent=1 // pred_region
      _
    $region81: #{rnn_model_forward.1} parent=1 // pred_fallthru
      _
    %3045 = vsyncpa [#allocation3], 1
    %3046 = vsyncpa [#allocation5], 1
    %3047 = vsyncpa [#allocation8], 1

</llo_original>
